<compile_context>
chip_gen: v7x
topology: tpu7x:2x2x1
jax: 0.10.0
libtpu: 0.0.40
codegen_flags: <defaults>
</compile_context>

<pallas_src>
import functools

import jax
import jax.numpy as jnp
from jax import lax
from jax.experimental import pallas as pl
from jax.experimental.pallas import tpu as pltpu

_EPS = 1e-5      # PyTorch BatchNorm1d default eps
_SLOPE = 0.2     # LeakyReLU negative slope
_K = 4           # conv kernel width
_PAD = 8         # front/tail pad rows per sample in the scratch (row _PAD-1 stays 0)


# ------------------------------ Pallas kernel ------------------------------ #

def _encoder_kernel(x_ref, w1_ref, w2_ref, w3_ref, w4_ref, w5_ref,
                    g2_ref, b2_ref, g3_ref, b3_ref, g4_ref, b4_ref,
                    g5_ref, b5_ref, wf_ref, o_ref, act_ref):
    """Fused Encoder_Wav_1 forward (whole batch, whole network, one call).

    x_ref : (N, L0, 1)        f32   raw waveform (no channel inflation)
    w1_ref: (4, ndf)          f32   stage-1 taps (Cin = 1), used on the VPU
    w*_ref: (4, Cin, Cout)    bf16  per-tap conv slabs, K trimmed to real Cin
    g/b   : (1, Cout)         f32   BatchNorm affine params (stages 2..5)
    wf_ref: (C_last, 128)     bf16  final 1x1 conv weight, out_z padded to 128
    o_ref : (N, 128)          f32   lane-dense output (sliced to out_z outside)
    act_ref: (N*(L0+16), 128) f32   scratch; per-sample region = 8 zero rows,
                                    L rows of activation, >=8 zero rows.
    """
    n = x_ref.shape[0]
    l0 = x_ref.shape[1]
    lanes = act_ref.shape[1]
    r = l0 + 2 * _PAD                       # rows per sample in the scratch

    # Zero the scratch once: rows _PAD-1 and _PAD+L act as the conv "same"
    # padding for every stage, for free (no rolls, no masks).
    act_ref[...] = jnp.zeros_like(act_ref)

    # Stage-1 input: (L0, 1) per sample, written into lane 0 (aligned rows).
    for i in range(n):
        act_ref[pl.ds(i * r + _PAD, l0), 0:1] = x_ref[i]

    def taps(lout, cin):
        """4 im2col taps of Conv1d(k=4,s=2,p=1), batched over samples.

        Tap j at output position t of sample i is scratch row
        i*r + (_PAD-1+j) + 2t; the j=0 / t=lout-1 edges hit the zero pad rows.
        Pure strided VMEM reads -- no gathers, no selection matmuls.
        """
        out = []
        for j in range(_K):
            pieces = [
                act_ref[pl.ds(i * r + _PAD - 1 + j, lout, stride=2), :][:, 0:cin]
                for i in range(n)
            ]
            out.append(jnp.concatenate(pieces, axis=0))        # (n*lout, cin)
        return out

    def writeback(z, lout, cout):
        # z: (n*lout, cout) f32.  Row offsets / lengths are multiples of 8, so
        # stores are sublane-aligned.  The extra _PAD zero rows re-establish
        # the tail conv padding for the next (shorter) stage.
        for i in range(n):
            act_ref[pl.ds(i * r + _PAD, lout), 0:cout] = z[i * lout:(i + 1) * lout, :]
            act_ref[pl.ds(i * r + _PAD + lout, _PAD), :] = jnp.zeros(
                (_PAD, lanes), jnp.float32)

    # ---- stage 1: Conv1d(1 -> ndf, 4, 2, 1) + LeakyReLU (no BN).  Cin == 1,
    # so the conv is 4 broadcast FMAs on the VPU (f32): no MXU pass over a
    # mostly-zero contraction, and no 128x input inflation.
    length = l0
    lout = length // 2
    c1 = w1_ref.shape[1]
    w1 = w1_ref[...]                                           # (4, c1) f32
    t1 = taps(lout, 1)                                         # 4 x (n*lout, 1)
    y = t1[0] * w1[0:1, :]
    for j in range(1, _K):
        y = y + t1[j] * w1[j:j + 1, :]
    y = jnp.maximum(y, _SLOPE * y)                             # LeakyReLU(0.2)
    writeback(y, lout, c1)
    length = lout

    # ---- stages 2..5: Conv1d(4,2,1) + BatchNorm1d (batch stats) + LeakyReLU.
    stage_refs = [(w2_ref, g2_ref, b2_ref), (w3_ref, g3_ref, b3_ref),
                  (w4_ref, g4_ref, b4_ref), (w5_ref, g5_ref, b5_ref)]
    z = None
    for s, (w_ref, g_ref, b_ref) in enumerate(stage_refs):
        lout = length // 2
        cin, cout = w_ref.shape[1], w_ref.shape[2]
        w = w_ref[...]                                         # (4, cin, cout) bf16
        t = taps(lout, cin)
        # One K=cin MXU matmul per tap, accumulated in f32, M = n*lout rows.
        acc = jnp.dot(t[0].astype(jnp.bfloat16), w[0],
                      preferred_element_type=jnp.float32)
        for j in range(1, _K):
            acc = acc + jnp.dot(t[j].astype(jnp.bfloat16), w[j],
                                preferred_element_type=jnp.float32)
        # BatchNorm1d: training-mode batch statistics over all n*lout rows,
        # two-pass mean / centered (biased) variance, affine folded in.
        inv_cnt = 1.0 / float(n * lout)
        mean = acc.sum(axis=0, keepdims=True) * inv_cnt        # (1, cout)
        var = ((acc - mean) ** 2).sum(axis=0, keepdims=True) * inv_cnt
        scale = lax.rsqrt(var + _EPS) * g_ref[...]
        shift = b_ref[...] - mean * scale
        z = acc * scale + shift
        z = jnp.maximum(z, _SLOPE * z)                         # LeakyReLU(0.2)
        if s < len(stage_refs) - 1:                            # stage 5 stays a value
            writeback(z, lout, cout)
        length = lout

    # ---- Conv1d(1x1, bias=False) + AdaptiveAvgPool1d(1) == (mean over time) @ W.
    means = [jnp.mean(z[i * length:(i + 1) * length, :], axis=0, keepdims=True)
             for i in range(n)]
    m = jnp.concatenate(means, axis=0)                         # (n, c_last) f32
    o_ref[...] = jnp.dot(m.astype(jnp.bfloat16), wf_ref[...],
                         preferred_element_type=jnp.float32)   # lane-dense store


# -------------------------------- wrapper ---------------------------------- #

def _vmem():
    return pl.BlockSpec(memory_space=pltpu.MemorySpace.VMEM)


def pack_params(params):
    """One-time host-side weight repack (kept OUT of the per-call jitted path)."""
    p = {}
    # Stage 1 (Cin = 1): (Cout, 1, 4) -> (4, Cout) f32 (used on the VPU).
    p["w1"] = jnp.transpose(params["w1"][:, 0, :], (1, 0)).astype(jnp.float32)
    # Stages 2..5: (Cout, Cin, 4) -> (4, Cin, Cout) bf16, K trimmed to real Cin.
    for s in range(2, 6):
        p[f"w{s}"] = jnp.transpose(params[f"w{s}"], (2, 1, 0)).astype(jnp.bfloat16)
        p[f"g{s}"] = params[f"g{s}"].reshape(1, -1).astype(jnp.float32)
        p[f"b{s}"] = params[f"b{s}"].reshape(1, -1).astype(jnp.float32)
    # Final 1x1 conv: (out_z, C, 1) -> (C, out_z) padded to a 128-lane multiple
    # so the kernel's only output store is lane-dense.
    w6 = params["w6"][:, :, 0]                                 # (out_z, C)
    out_z, c_last = w6.shape
    oz_pad = max(128, ((out_z + 127) // 128) * 128)
    wf = jnp.zeros((c_last, oz_pad), jnp.float32).at[:, :out_z].set(w6.T)
    p["wf"] = wf.astype(jnp.bfloat16)
    return p


def encoder_wav_1(x, packed, out_z):
    """Forward pass of Encoder_Wav_1: x (N, 1, L) f32 -> (N, out_z, 1) f32."""
    n, nc, l0 = x.shape
    assert nc == 1, "kernel special-cases the Cin=1 first stage"
    assert l0 % 32 == 0 and l0 >= 32
    c_last = packed["wf"].shape[0]
    assert c_last <= 128 and packed["w5"].shape[2] == c_last
    r = l0 + 2 * _PAD
    x_in = jnp.transpose(x, (0, 2, 1))                         # (N, L, 1)

    out = pl.pallas_call(
        _encoder_kernel,
        out_shape=jax.ShapeDtypeStruct((n, packed["wf"].shape[1]), jnp.float32),
        in_specs=[_vmem()] * 15,
        out_specs=_vmem(),
        scratch_shapes=[pltpu.VMEM((n * r, 128), jnp.float32)],
    )(x_in, packed["w1"], packed["w2"], packed["w3"], packed["w4"], packed["w5"],
      packed["g2"], packed["b2"], packed["g3"], packed["b3"],
      packed["g4"], packed["b4"], packed["g5"], packed["b5"], packed["wf"])
    return out[:, :out_z, None]


# -------------------------- pure-JAX reference ------------------------------ #
# Mirrors the kernel's numerics (bf16 matmul operands on stages 2..6, f32
# accumulation, two-pass batch-stat BN) so the correctness check is tight.

def _ref_conv_stage(x, w, bf16_ops):
    # x: (N, Cin, L) f32 ; w: (Cout, Cin, 4) f32 ; Conv1d(k=4, s=2, p=1).
    n, _, length = x.shape
    lout = length // 2
    xp = jnp.pad(x, ((0, 0), (0, 0), (1, 1)))
    y = jnp.zeros((n, w.shape[0], lout), jnp.float32)
    for j in range(_K):
        tap = xp[:, :, j::2][:, :, :lout]
        wj = w[:, :, j]
        if bf16_ops:
            tap = tap.astype(jnp.bfloat16).astype(jnp.float32)
            wj = wj.astype(jnp.bfloat16).astype(jnp.float32)
        y = y + jnp.einsum('ncl,oc->nol', tap, wj,
                           precision=lax.Precision.HIGHEST)
    return y


def encoder_ref(x, params):
    y = _ref_conv_stage(x, params["w1"], bf16_ops=False)
    y = jnp.maximum(y, _SLOPE * y)
    for s in range(2, 6):
        y = _ref_conv_stage(y, params[f"w{s}"], bf16_ops=True)
        mean = y.mean(axis=(0, 2), keepdims=True)
        var = ((y - mean) ** 2).mean(axis=(0, 2), keepdims=True)
        scale = lax.rsqrt(var + _EPS) * params[f"g{s}"][None, :, None]
        shift = params[f"b{s}"][None, :, None] - mean * scale
        y = y * scale + shift
        y = jnp.maximum(y, _SLOPE * y)
    m = y.mean(axis=2)                                         # (N, C_last)
    mb = m.astype(jnp.bfloat16).astype(jnp.float32)
    wf = params["w6"][:, :, 0].astype(jnp.bfloat16).astype(jnp.float32)
    out = jnp.einsum('nc,oc->no', mb, wf, precision=lax.Precision.HIGHEST)
    return out[:, :, None]


# ---------------------------------- main ------------------------------------ #

if __name__ == "__main__":
    key = jax.random.PRNGKey(0)

    # Small config consistent with the module: opt.nc = 1, opt.ndf = 8, out_z = 32.
    n, nc, length = 2, 1, 128
    ndf, out_z = 8, 32
    chans = [nc, ndf, 2 * ndf, 4 * ndf, 8 * ndf, 16 * ndf]

    keys = list(jax.random.split(key, 16))
    kidx = 0
    params = {}
    for i in range(5):                               # five Conv1d(4, 2, 1) layers
        c_out, c_in = chans[i + 1], chans[i]
        params[f"w{i + 1}"] = 0.02 * jax.random.normal(
            keys[kidx], (c_out, c_in, _K), jnp.float32); kidx += 1
        if i >= 1:                                   # BatchNorm on layers 2..5
            params[f"g{i + 1}"] = 1.0 + 0.1 * jax.random.normal(
                keys[kidx], (c_out,), jnp.float32); kidx += 1
            params[f"b{i + 1}"] = 0.1 * jax.random.normal(
                keys[kidx], (c_out,), jnp.float32); kidx += 1
    params["w6"] = 0.02 * jax.random.normal(
        keys[kidx], (out_z, chans[5], 1), jnp.float32); kidx += 1
    x = jax.random.normal(keys[kidx], (n, nc, length), jnp.float32)

    packed = pack_params(params)                     # one-time repack, outside jit
    fwd = jax.jit(lambda xx, pp: encoder_wav_1(xx, pp, out_z))

    out = jax.block_until_ready(fwd(x, packed))
    ref = jax.block_until_ready(encoder_ref(x, params))

    assert out.shape == (n, out_z, 1), out.shape
    # Kernel and reference both use bf16 matmul operands with f32 accumulation;
    # remaining differences are f32 accumulation-order only, so 2e-2 is loose.
    err = float(jnp.max(jnp.abs(out - ref)))
    assert err < 2e-2, f"max abs err {err}"
    print("KERNEL_OK")
</pallas_src>

<mosaic_0001>
module attributes {stable_mosaic.version = 11 : i64} {
  func.func @_encoder_kernel(%arg0: memref<2x128x1xf32, #tpu.memory_space<vmem>>, %arg1: memref<4x8xf32, #tpu.memory_space<vmem>>, %arg2: memref<4x8x16xbf16, #tpu.memory_space<vmem>>, %arg3: memref<4x16x32xbf16, #tpu.memory_space<vmem>>, %arg4: memref<4x32x64xbf16, #tpu.memory_space<vmem>>, %arg5: memref<4x64x128xbf16, #tpu.memory_space<vmem>>, %arg6: memref<1x16xf32, #tpu.memory_space<vmem>>, %arg7: memref<1x16xf32, #tpu.memory_space<vmem>>, %arg8: memref<1x32xf32, #tpu.memory_space<vmem>>, %arg9: memref<1x32xf32, #tpu.memory_space<vmem>>, %arg10: memref<1x64xf32, #tpu.memory_space<vmem>>, %arg11: memref<1x64xf32, #tpu.memory_space<vmem>>, %arg12: memref<1x128xf32, #tpu.memory_space<vmem>>, %arg13: memref<1x128xf32, #tpu.memory_space<vmem>>, %arg14: memref<128x128xbf16, #tpu.memory_space<vmem>>, %arg15: memref<2x128xf32, #tpu.memory_space<vmem>>, %arg16: memref<288x128xf32, #tpu.memory_space<vmem>>) attributes {dimension_semantics = [], scalar_prefetch = 0 : i64, scratch_operands = 1 : i64, tpu.core_type = #tpu.core_type<tc>} {
    %cst = arith.constant 0.000000e+00 : f32
    %0 = vector.broadcast %cst : f32 to vector<288x128xf32>
    %c0 = arith.constant 0 : index
    %c0_0 = arith.constant 0 : index
    %1 = vector.load %arg16[%c0, %c0_0] : memref<288x128xf32, #tpu.memory_space<vmem>>, vector<288x128xf32>
    tpu.vector_store %arg16[%c0, %c0_0], %0 {strides = array<i32>} : memref<288x128xf32, #tpu.memory_space<vmem>>, vector<288x128xf32>,
    %c0_1 = arith.constant 0 : index
    %c0_2 = arith.constant 0 : index
    %c0_3 = arith.constant 0 : index
    %2 = vector.load %arg0[%c0_1, %c0_2, %c0_3] : memref<2x128x1xf32, #tpu.memory_space<vmem>>, vector<1x128x1xf32>
    %3 = vector.shape_cast %2 : vector<1x128x1xf32> to vector<128x1xf32>
    %c8 = arith.constant 8 : index
    %c0_4 = arith.constant 0 : index
    %4 = vector.load %arg16[%c8, %c0_4] : memref<288x128xf32, #tpu.memory_space<vmem>>, vector<128x1xf32>
    tpu.vector_store %arg16[%c8, %c0_4], %3 {strides = array<i32>} : memref<288x128xf32, #tpu.memory_space<vmem>>, vector<128x1xf32>,
    %c1 = arith.constant 1 : index
    %c0_5 = arith.constant 0 : index
    %c0_6 = arith.constant 0 : index
    %5 = vector.load %arg0[%c1, %c0_5, %c0_6] : memref<2x128x1xf32, #tpu.memory_space<vmem>>, vector<1x128x1xf32>
    %6 = vector.shape_cast %5 : vector<1x128x1xf32> to vector<128x1xf32>
    %c152 = arith.constant 152 : index
    %c0_7 = arith.constant 0 : index
    %7 = vector.load %arg16[%c152, %c0_7] : memref<288x128xf32, #tpu.memory_space<vmem>>, vector<128x1xf32>
    tpu.vector_store %arg16[%c152, %c0_7], %6 {strides = array<i32>} : memref<288x128xf32, #tpu.memory_space<vmem>>, vector<128x1xf32>,
    %c0_8 = arith.constant 0 : index
    %c0_9 = arith.constant 0 : index
    %8 = vector.load %arg1[%c0_8, %c0_9] : memref<4x8xf32, #tpu.memory_space<vmem>>, vector<4x8xf32>
    %c7 = arith.constant 7 : index
    %c0_10 = arith.constant 0 : index
    %9 = tpu.strided_load %arg16[%c7, %c0_10] {strides = array<i32: 2, 1>} : memref<288x128xf32, #tpu.memory_space<vmem>>, vector<64x128xf32>
    %10 = vector.extract_strided_slice %9 {offsets = [0, 0], sizes = [64, 1], strides = [1, 1]} : vector<64x128xf32> to vector<64x1xf32>
    %c151 = arith.constant 151 : index
    %c0_11 = arith.constant 0 : index
    %11 = tpu.strided_load %arg16[%c151, %c0_11] {strides = array<i32: 2, 1>} : memref<288x128xf32, #tpu.memory_space<vmem>>, vector<64x128xf32>
    %12 = vector.extract_strided_slice %11 {offsets = [0, 0], sizes = [64, 1], strides = [1, 1]} : vector<64x128xf32> to vector<64x1xf32>
    %13 = tpu.concatenate %10, %12 in 0 : vector<64x1xf32>, vector<64x1xf32> -> vector<128x1xf32>
    %c8_12 = arith.constant 8 : index
    %c0_13 = arith.constant 0 : index
    %14 = tpu.strided_load %arg16[%c8_12, %c0_13] {strides = array<i32: 2, 1>} : memref<288x128xf32, #tpu.memory_space<vmem>>, vector<64x128xf32>
    %15 = vector.extract_strided_slice %14 {offsets = [0, 0], sizes = [64, 1], strides = [1, 1]} : vector<64x128xf32> to vector<64x1xf32>
    %c152_14 = arith.constant 152 : index
    %c0_15 = arith.constant 0 : index
    %16 = tpu.strided_load %arg16[%c152_14, %c0_15] {strides = array<i32: 2, 1>} : memref<288x128xf32, #tpu.memory_space<vmem>>, vector<64x128xf32>
    %17 = vector.extract_strided_slice %16 {offsets = [0, 0], sizes = [64, 1], strides = [1, 1]} : vector<64x128xf32> to vector<64x1xf32>
    %18 = tpu.concatenate %15, %17 in 0 : vector<64x1xf32>, vector<64x1xf32> -> vector<128x1xf32>
    %c9 = arith.constant 9 : index
    %c0_16 = arith.constant 0 : index
    %19 = tpu.strided_load %arg16[%c9, %c0_16] {strides = array<i32: 2, 1>} : memref<288x128xf32, #tpu.memory_space<vmem>>, vector<64x128xf32>
    %20 = vector.extract_strided_slice %19 {offsets = [0, 0], sizes = [64, 1], strides = [1, 1]} : vector<64x128xf32> to vector<64x1xf32>
    %c153 = arith.constant 153 : index
    %c0_17 = arith.constant 0 : index
    %21 = tpu.strided_load %arg16[%c153, %c0_17] {strides = array<i32: 2, 1>} : memref<288x128xf32, #tpu.memory_space<vmem>>, vector<64x128xf32>
    %22 = vector.extract_strided_slice %21 {offsets = [0, 0], sizes = [64, 1], strides = [1, 1]} : vector<64x128xf32> to vector<64x1xf32>
    %23 = tpu.concatenate %20, %22 in 0 : vector<64x1xf32>, vector<64x1xf32> -> vector<128x1xf32>
    %c10 = arith.constant 10 : index
    %c0_18 = arith.constant 0 : index
    %24 = tpu.strided_load %arg16[%c10, %c0_18] {strides = array<i32: 2, 1>} : memref<288x128xf32, #tpu.memory_space<vmem>>, vector<64x128xf32>
    %25 = vector.extract_strided_slice %24 {offsets = [0, 0], sizes = [64, 1], strides = [1, 1]} : vector<64x128xf32> to vector<64x1xf32>
    %c154 = arith.constant 154 : index
    %c0_19 = arith.constant 0 : index
    %26 = tpu.strided_load %arg16[%c154, %c0_19] {strides = array<i32: 2, 1>} : memref<288x128xf32, #tpu.memory_space<vmem>>, vector<64x128xf32>
    %27 = vector.extract_strided_slice %26 {offsets = [0, 0], sizes = [64, 1], strides = [1, 1]} : vector<64x128xf32> to vector<64x1xf32>
    %28 = tpu.concatenate %25, %27 in 0 : vector<64x1xf32>, vector<64x1xf32> -> vector<128x1xf32>
    %29 = vector.extract_strided_slice %8 {offsets = [0, 0], sizes = [1, 8], strides = [1, 1]} : vector<4x8xf32> to vector<1x8xf32>
    %30 = vector.broadcast %13 : vector<128x1xf32> to vector<128x8xf32>
    %31 = vector.broadcast %29 : vector<1x8xf32> to vector<128x8xf32>
    %32 = arith.mulf %30, %31 : vector<128x8xf32>
    %33 = vector.extract_strided_slice %8 {offsets = [1, 0], sizes = [1, 8], strides = [1, 1]} : vector<4x8xf32> to vector<1x8xf32>
    %34 = vector.broadcast %18 : vector<128x1xf32> to vector<128x8xf32>
    %35 = vector.broadcast %33 : vector<1x8xf32> to vector<128x8xf32>
    %36 = arith.mulf %34, %35 : vector<128x8xf32>
    %37 = arith.addf %32, %36 : vector<128x8xf32>
    %38 = vector.extract_strided_slice %8 {offsets = [2, 0], sizes = [1, 8], strides = [1, 1]} : vector<4x8xf32> to vector<1x8xf32>
    %39 = vector.broadcast %23 : vector<128x1xf32> to vector<128x8xf32>
    %40 = vector.broadcast %38 : vector<1x8xf32> to vector<128x8xf32>
    %41 = arith.mulf %39, %40 : vector<128x8xf32>
    %42 = arith.addf %37, %41 : vector<128x8xf32>
    %43 = vector.extract_strided_slice %8 {offsets = [3, 0], sizes = [1, 8], strides = [1, 1]} : vector<4x8xf32> to vector<1x8xf32>
    %44 = vector.broadcast %28 : vector<128x1xf32> to vector<128x8xf32>
    %45 = vector.broadcast %43 : vector<1x8xf32> to vector<128x8xf32>
    %46 = arith.mulf %44, %45 : vector<128x8xf32>
    %47 = arith.addf %42, %46 : vector<128x8xf32>
    %cst_20 = arith.constant 2.000000e-01 : f32
    %48 = vector.broadcast %cst_20 : f32 to vector<128x8xf32>
    %49 = arith.mulf %48, %47 : vector<128x8xf32>
    %50 = arith.maximumf %47, %49 : vector<128x8xf32>
    %51 = vector.extract_strided_slice %50 {offsets = [0, 0], sizes = [64, 8], strides = [1, 1]} : vector<128x8xf32> to vector<64x8xf32>
    %c8_21 = arith.constant 8 : index
    %c0_22 = arith.constant 0 : index
    %52 = vector.load %arg16[%c8_21, %c0_22] : memref<288x128xf32, #tpu.memory_space<vmem>>, vector<64x8xf32>
    tpu.vector_store %arg16[%c8_21, %c0_22], %51 {strides = array<i32>} : memref<288x128xf32, #tpu.memory_space<vmem>>, vector<64x8xf32>,
    %cst_23 = arith.constant 0.000000e+00 : f32
    %53 = vector.broadcast %cst_23 : f32 to vector<8x128xf32>
    %c72 = arith.constant 72 : index
    %c0_24 = arith.constant 0 : index
    %54 = vector.load %arg16[%c72, %c0_24] : memref<288x128xf32, #tpu.memory_space<vmem>>, vector<8x128xf32>
    tpu.vector_store %arg16[%c72, %c0_24], %53 {strides = array<i32>} : memref<288x128xf32, #tpu.memory_space<vmem>>, vector<8x128xf32>,
    %55 = vector.extract_strided_slice %50 {offsets = [64, 0], sizes = [64, 8], strides = [1, 1]} : vector<128x8xf32> to vector<64x8xf32>
    %c152_25 = arith.constant 152 : index
    %c0_26 = arith.constant 0 : index
    %56 = vector.load %arg16[%c152_25, %c0_26] : memref<288x128xf32, #tpu.memory_space<vmem>>, vector<64x8xf32>
    tpu.vector_store %arg16[%c152_25, %c0_26], %55 {strides = array<i32>} : memref<288x128xf32, #tpu.memory_space<vmem>>, vector<64x8xf32>,
    %cst_27 = arith.constant 0.000000e+00 : f32
    %57 = vector.broadcast %cst_27 : f32 to vector<8x128xf32>
    %c216 = arith.constant 216 : index
    %c0_28 = arith.constant 0 : index
    %58 = vector.load %arg16[%c216, %c0_28] : memref<288x128xf32, #tpu.memory_space<vmem>>, vector<8x128xf32>
    tpu.vector_store %arg16[%c216, %c0_28], %57 {strides = array<i32>} : memref<288x128xf32, #tpu.memory_space<vmem>>, vector<8x128xf32>,
    %c0_29 = arith.constant 0 : index
    %c0_30 = arith.constant 0 : index
    %c0_31 = arith.constant 0 : index
    %59 = vector.load %arg2[%c0_29, %c0_30, %c0_31] : memref<4x8x16xbf16, #tpu.memory_space<vmem>>, vector<4x8x16xbf16>
    %c7_32 = arith.constant 7 : index
    %c0_33 = arith.constant 0 : index
    %60 = tpu.strided_load %arg16[%c7_32, %c0_33] {strides = array<i32: 2, 1>} : memref<288x128xf32, #tpu.memory_space<vmem>>, vector<32x128xf32>
    %61 = vector.extract_strided_slice %60 {offsets = [0, 0], sizes = [32, 8], strides = [1, 1]} : vector<32x128xf32> to vector<32x8xf32>
    %c151_34 = arith.constant 151 : index
    %c0_35 = arith.constant 0 : index
    %62 = tpu.strided_load %arg16[%c151_34, %c0_35] {strides = array<i32: 2, 1>} : memref<288x128xf32, #tpu.memory_space<vmem>>, vector<32x128xf32>
    %63 = vector.extract_strided_slice %62 {offsets = [0, 0], sizes = [32, 8], strides = [1, 1]} : vector<32x128xf32> to vector<32x8xf32>
    %64 = tpu.concatenate %61, %63 in 0 : vector<32x8xf32>, vector<32x8xf32> -> vector<64x8xf32>
    %c8_36 = arith.constant 8 : index
    %c0_37 = arith.constant 0 : index
    %65 = tpu.strided_load %arg16[%c8_36, %c0_37] {strides = array<i32: 2, 1>} : memref<288x128xf32, #tpu.memory_space<vmem>>, vector<32x128xf32>
    %66 = vector.extract_strided_slice %65 {offsets = [0, 0], sizes = [32, 8], strides = [1, 1]} : vector<32x128xf32> to vector<32x8xf32>
    %c152_38 = arith.constant 152 : index
    %c0_39 = arith.constant 0 : index
    %67 = tpu.strided_load %arg16[%c152_38, %c0_39] {strides = array<i32: 2, 1>} : memref<288x128xf32, #tpu.memory_space<vmem>>, vector<32x128xf32>
    %68 = vector.extract_strided_slice %67 {offsets = [0, 0], sizes = [32, 8], strides = [1, 1]} : vector<32x128xf32> to vector<32x8xf32>
    %69 = tpu.concatenate %66, %68 in 0 : vector<32x8xf32>, vector<32x8xf32> -> vector<64x8xf32>
    %c9_40 = arith.constant 9 : index
    %c0_41 = arith.constant 0 : index
    %70 = tpu.strided_load %arg16[%c9_40, %c0_41] {strides = array<i32: 2, 1>} : memref<288x128xf32, #tpu.memory_space<vmem>>, vector<32x128xf32>
    %71 = vector.extract_strided_slice %70 {offsets = [0, 0], sizes = [32, 8], strides = [1, 1]} : vector<32x128xf32> to vector<32x8xf32>
    %c153_42 = arith.constant 153 : index
    %c0_43 = arith.constant 0 : index
    %72 = tpu.strided_load %arg16[%c153_42, %c0_43] {strides = array<i32: 2, 1>} : memref<288x128xf32, #tpu.memory_space<vmem>>, vector<32x128xf32>
    %73 = vector.extract_strided_slice %72 {offsets = [0, 0], sizes = [32, 8], strides = [1, 1]} : vector<32x128xf32> to vector<32x8xf32>
    %74 = tpu.concatenate %71, %73 in 0 : vector<32x8xf32>, vector<32x8xf32> -> vector<64x8xf32>
    %c10_44 = arith.constant 10 : index
    %c0_45 = arith.constant 0 : index
    %75 = tpu.strided_load %arg16[%c10_44, %c0_45] {strides = array<i32: 2, 1>} : memref<288x128xf32, #tpu.memory_space<vmem>>, vector<32x128xf32>
    %76 = vector.extract_strided_slice %75 {offsets = [0, 0], sizes = [32, 8], strides = [1, 1]} : vector<32x128xf32> to vector<32x8xf32>
    %c154_46 = arith.constant 154 : index
    %c0_47 = arith.constant 0 : index
    %77 = tpu.strided_load %arg16[%c154_46, %c0_47] {strides = array<i32: 2, 1>} : memref<288x128xf32, #tpu.memory_space<vmem>>, vector<32x128xf32>
    %78 = vector.extract_strided_slice %77 {offsets = [0, 0], sizes = [32, 8], strides = [1, 1]} : vector<32x128xf32> to vector<32x8xf32>
    %79 = tpu.concatenate %76, %78 in 0 : vector<32x8xf32>, vector<32x8xf32> -> vector<64x8xf32>
    %80 = arith.truncf %64 : vector<64x8xf32> to vector<64x8xbf16>
    %81 = vector.extract_strided_slice %59 {offsets = [0, 0, 0], sizes = [1, 8, 16], strides = [1, 1, 1]} : vector<4x8x16xbf16> to vector<1x8x16xbf16>
    %82 = vector.shape_cast %81 : vector<1x8x16xbf16> to vector<8x16xbf16>
    %cst_48 = arith.constant dense<0.000000e+00> : vector<64x16xf32>
    %83 = tpu.matmul %80, %82, %cst_48 {dimension_numbers = #tpu.dot_dimension_numbers<[1], [0], [0], [1], [0, 0, 1, 1], [], []>} : vector<64x8xbf16>, vector<8x16xbf16>, vector<64x16xf32> -> vector<64x16xf32>
    %84 = arith.truncf %69 : vector<64x8xf32> to vector<64x8xbf16>
    %85 = vector.extract_strided_slice %59 {offsets = [1, 0, 0], sizes = [1, 8, 16], strides = [1, 1, 1]} : vector<4x8x16xbf16> to vector<1x8x16xbf16>
    %86 = vector.shape_cast %85 : vector<1x8x16xbf16> to vector<8x16xbf16>
    %cst_49 = arith.constant dense<0.000000e+00> : vector<64x16xf32>
    %87 = tpu.matmul %84, %86, %cst_49 {dimension_numbers = #tpu.dot_dimension_numbers<[1], [0], [0], [1], [0, 0, 1, 1], [], []>} : vector<64x8xbf16>, vector<8x16xbf16>, vector<64x16xf32> -> vector<64x16xf32>
    %88 = arith.addf %83, %87 : vector<64x16xf32>
    %89 = arith.truncf %74 : vector<64x8xf32> to vector<64x8xbf16>
    %90 = vector.extract_strided_slice %59 {offsets = [2, 0, 0], sizes = [1, 8, 16], strides = [1, 1, 1]} : vector<4x8x16xbf16> to vector<1x8x16xbf16>
    %91 = vector.shape_cast %90 : vector<1x8x16xbf16> to vector<8x16xbf16>
    %cst_50 = arith.constant dense<0.000000e+00> : vector<64x16xf32>
    %92 = tpu.matmul %89, %91, %cst_50 {dimension_numbers = #tpu.dot_dimension_numbers<[1], [0], [0], [1], [0, 0, 1, 1], [], []>} : vector<64x8xbf16>, vector<8x16xbf16>, vector<64x16xf32> -> vector<64x16xf32>
    %93 = arith.addf %88, %92 : vector<64x16xf32>
    %94 = arith.truncf %79 : vector<64x8xf32> to vector<64x8xbf16>
    %95 = vector.extract_strided_slice %59 {offsets = [3, 0, 0], sizes = [1, 8, 16], strides = [1, 1, 1]} : vector<4x8x16xbf16> to vector<1x8x16xbf16>
    %96 = vector.shape_cast %95 : vector<1x8x16xbf16> to vector<8x16xbf16>
    %cst_51 = arith.constant dense<0.000000e+00> : vector<64x16xf32>
    %97 = tpu.matmul %94, %96, %cst_51 {dimension_numbers = #tpu.dot_dimension_numbers<[1], [0], [0], [1], [0, 0, 1, 1], [], []>} : vector<64x8xbf16>, vector<8x16xbf16>, vector<64x16xf32> -> vector<64x16xf32>
    %98 = arith.addf %93, %97 : vector<64x16xf32>
    %cst_52 = arith.constant dense<0.000000e+00> : vector<16xf32>
    %99 = vector.multi_reduction <add>, %98, %cst_52 [0] : vector<64x16xf32> to vector<16xf32>
    %100 = vector.shape_cast %99 : vector<16xf32> to vector<1x16xf32>
    %cst_53 = arith.constant 1.562500e-02 : f32
    %101 = vector.broadcast %cst_53 : f32 to vector<1x16xf32>
    %102 = arith.mulf %100, %101 : vector<1x16xf32>
    %103 = vector.broadcast %102 : vector<1x16xf32> to vector<64x16xf32>
    %104 = arith.subf %98, %103 : vector<64x16xf32>
    %105 = arith.mulf %104, %104 : vector<64x16xf32>
    %cst_54 = arith.constant dense<0.000000e+00> : vector<16xf32>
    %106 = vector.multi_reduction <add>, %105, %cst_54 [0] : vector<64x16xf32> to vector<16xf32>
    %107 = vector.shape_cast %106 : vector<16xf32> to vector<1x16xf32>
    %cst_55 = arith.constant 1.562500e-02 : f32
    %108 = vector.broadcast %cst_55 : f32 to vector<1x16xf32>
    %109 = arith.mulf %107, %108 : vector<1x16xf32>
    %cst_56 = arith.constant 9.99999974E-6 : f32
    %110 = vector.broadcast %cst_56 : f32 to vector<1x16xf32>
    %111 = arith.addf %109, %110 : vector<1x16xf32>
    %112 = math.rsqrt %111 : vector<1x16xf32>
    %c0_57 = arith.constant 0 : index
    %c0_58 = arith.constant 0 : index
    %113 = vector.load %arg6[%c0_57, %c0_58] : memref<1x16xf32, #tpu.memory_space<vmem>>, vector<1x16xf32>
    %114 = arith.mulf %112, %113 : vector<1x16xf32>
    %c0_59 = arith.constant 0 : index
    %c0_60 = arith.constant 0 : index
    %115 = vector.load %arg7[%c0_59, %c0_60] : memref<1x16xf32, #tpu.memory_space<vmem>>, vector<1x16xf32>
    %116 = arith.mulf %102, %114 : vector<1x16xf32>
    %117 = arith.subf %115, %116 : vector<1x16xf32>
    %118 = vector.broadcast %114 : vector<1x16xf32> to vector<64x16xf32>
    %119 = arith.mulf %98, %118 : vector<64x16xf32>
    %120 = vector.broadcast %117 : vector<1x16xf32> to vector<64x16xf32>
    %121 = arith.addf %119, %120 : vector<64x16xf32>
    %cst_61 = arith.constant 2.000000e-01 : f32
    %122 = vector.broadcast %cst_61 : f32 to vector<64x16xf32>
    %123 = arith.mulf %122, %121 : vector<64x16xf32>
    %124 = arith.maximumf %121, %123 : vector<64x16xf32>
    %125 = vector.extract_strided_slice %124 {offsets = [0, 0], sizes = [32, 16], strides = [1, 1]} : vector<64x16xf32> to vector<32x16xf32>
    %c8_62 = arith.constant 8 : index
    %c0_63 = arith.constant 0 : index
    %126 = vector.load %arg16[%c8_62, %c0_63] : memref<288x128xf32, #tpu.memory_space<vmem>>, vector<32x16xf32>
    tpu.vector_store %arg16[%c8_62, %c0_63], %125 {strides = array<i32>} : memref<288x128xf32, #tpu.memory_space<vmem>>, vector<32x16xf32>,
    %cst_64 = arith.constant 0.000000e+00 : f32
    %127 = vector.broadcast %cst_64 : f32 to vector<8x128xf32>
    %c40 = arith.constant 40 : index
    %c0_65 = arith.constant 0 : index
    %128 = vector.load %arg16[%c40, %c0_65] : memref<288x128xf32, #tpu.memory_space<vmem>>, vector<8x128xf32>
    tpu.vector_store %arg16[%c40, %c0_65], %127 {strides = array<i32>} : memref<288x128xf32, #tpu.memory_space<vmem>>, vector<8x128xf32>,
    %129 = vector.extract_strided_slice %124 {offsets = [32, 0], sizes = [32, 16], strides = [1, 1]} : vector<64x16xf32> to vector<32x16xf32>
    %c152_66 = arith.constant 152 : index
    %c0_67 = arith.constant 0 : index
    %130 = vector.load %arg16[%c152_66, %c0_67] : memref<288x128xf32, #tpu.memory_space<vmem>>, vector<32x16xf32>
    tpu.vector_store %arg16[%c152_66, %c0_67], %129 {strides = array<i32>} : memref<288x128xf32, #tpu.memory_space<vmem>>, vector<32x16xf32>,
    %cst_68 = arith.constant 0.000000e+00 : f32
    %131 = vector.broadcast %cst_68 : f32 to vector<8x128xf32>
    %c184 = arith.constant 184 : index
    %c0_69 = arith.constant 0 : index
    %132 = vector.load %arg16[%c184, %c0_69] : memref<288x128xf32, #tpu.memory_space<vmem>>, vector<8x128xf32>
    tpu.vector_store %arg16[%c184, %c0_69], %131 {strides = array<i32>} : memref<288x128xf32, #tpu.memory_space<vmem>>, vector<8x128xf32>,
    %c0_70 = arith.constant 0 : index
    %c0_71 = arith.constant 0 : index
    %c0_72 = arith.constant 0 : index
    %133 = vector.load %arg3[%c0_70, %c0_71, %c0_72] : memref<4x16x32xbf16, #tpu.memory_space<vmem>>, vector<4x16x32xbf16>
    %c7_73 = arith.constant 7 : index
    %c0_74 = arith.constant 0 : index
    %134 = tpu.strided_load %arg16[%c7_73, %c0_74] {strides = array<i32: 2, 1>} : memref<288x128xf32, #tpu.memory_space<vmem>>, vector<16x128xf32>
    %135 = vector.extract_strided_slice %134 {offsets = [0, 0], sizes = [16, 16], strides = [1, 1]} : vector<16x128xf32> to vector<16x16xf32>
    %c151_75 = arith.constant 151 : index
    %c0_76 = arith.constant 0 : index
    %136 = tpu.strided_load %arg16[%c151_75, %c0_76] {strides = array<i32: 2, 1>} : memref<288x128xf32, #tpu.memory_space<vmem>>, vector<16x128xf32>
    %137 = vector.extract_strided_slice %136 {offsets = [0, 0], sizes = [16, 16], strides = [1, 1]} : vector<16x128xf32> to vector<16x16xf32>
    %138 = tpu.concatenate %135, %137 in 0 : vector<16x16xf32>, vector<16x16xf32> -> vector<32x16xf32>
    %c8_77 = arith.constant 8 : index
    %c0_78 = arith.constant 0 : index
    %139 = tpu.strided_load %arg16[%c8_77, %c0_78] {strides = array<i32: 2, 1>} : memref<288x128xf32, #tpu.memory_space<vmem>>, vector<16x128xf32>
    %140 = vector.extract_strided_slice %139 {offsets = [0, 0], sizes = [16, 16], strides = [1, 1]} : vector<16x128xf32> to vector<16x16xf32>
    %c152_79 = arith.constant 152 : index
    %c0_80 = arith.constant 0 : index
    %141 = tpu.strided_load %arg16[%c152_79, %c0_80] {strides = array<i32: 2, 1>} : memref<288x128xf32, #tpu.memory_space<vmem>>, vector<16x128xf32>
    %142 = vector.extract_strided_slice %141 {offsets = [0, 0], sizes = [16, 16], strides = [1, 1]} : vector<16x128xf32> to vector<16x16xf32>
    %143 = tpu.concatenate %140, %142 in 0 : vector<16x16xf32>, vector<16x16xf32> -> vector<32x16xf32>
    %c9_81 = arith.constant 9 : index
    %c0_82 = arith.constant 0 : index
    %144 = tpu.strided_load %arg16[%c9_81, %c0_82] {strides = array<i32: 2, 1>} : memref<288x128xf32, #tpu.memory_space<vmem>>, vector<16x128xf32>
    %145 = vector.extract_strided_slice %144 {offsets = [0, 0], sizes = [16, 16], strides = [1, 1]} : vector<16x128xf32> to vector<16x16xf32>
    %c153_83 = arith.constant 153 : index
    %c0_84 = arith.constant 0 : index
    %146 = tpu.strided_load %arg16[%c153_83, %c0_84] {strides = array<i32: 2, 1>} : memref<288x128xf32, #tpu.memory_space<vmem>>, vector<16x128xf32>
    %147 = vector.extract_strided_slice %146 {offsets = [0, 0], sizes = [16, 16], strides = [1, 1]} : vector<16x128xf32> to vector<16x16xf32>
    %148 = tpu.concatenate %145, %147 in 0 : vector<16x16xf32>, vector<16x16xf32> -> vector<32x16xf32>
    %c10_85 = arith.constant 10 : index
    %c0_86 = arith.constant 0 : index
    %149 = tpu.strided_load %arg16[%c10_85, %c0_86] {strides = array<i32: 2, 1>} : memref<288x128xf32, #tpu.memory_space<vmem>>, vector<16x128xf32>
    %150 = vector.extract_strided_slice %149 {offsets = [0, 0], sizes = [16, 16], strides = [1, 1]} : vector<16x128xf32> to vector<16x16xf32>
    %c154_87 = arith.constant 154 : index
    %c0_88 = arith.constant 0 : index
    %151 = tpu.strided_load %arg16[%c154_87, %c0_88] {strides = array<i32: 2, 1>} : memref<288x128xf32, #tpu.memory_space<vmem>>, vector<16x128xf32>
    %152 = vector.extract_strided_slice %151 {offsets = [0, 0], sizes = [16, 16], strides = [1, 1]} : vector<16x128xf32> to vector<16x16xf32>
    %153 = tpu.concatenate %150, %152 in 0 : vector<16x16xf32>, vector<16x16xf32> -> vector<32x16xf32>
    %154 = arith.truncf %138 : vector<32x16xf32> to vector<32x16xbf16>
    %155 = vector.extract_strided_slice %133 {offsets = [0, 0, 0], sizes = [1, 16, 32], strides = [1, 1, 1]} : vector<4x16x32xbf16> to vector<1x16x32xbf16>
    %156 = vector.shape_cast %155 : vector<1x16x32xbf16> to vector<16x32xbf16>
    %cst_89 = arith.constant dense<0.000000e+00> : vector<32x32xf32>
    %157 = tpu.matmul %154, %156, %cst_89 {dimension_numbers = #tpu.dot_dimension_numbers<[1], [0], [0], [1], [0, 0, 1, 1], [], []>} : vector<32x16xbf16>, vector<16x32xbf16>, vector<32x32xf32> -> vector<32x32xf32>
    %158 = arith.truncf %143 : vector<32x16xf32> to vector<32x16xbf16>
    %159 = vector.extract_strided_slice %133 {offsets = [1, 0, 0], sizes = [1, 16, 32], strides = [1, 1, 1]} : vector<4x16x32xbf16> to vector<1x16x32xbf16>
    %160 = vector.shape_cast %159 : vector<1x16x32xbf16> to vector<16x32xbf16>
    %cst_90 = arith.constant dense<0.000000e+00> : vector<32x32xf32>
    %161 = tpu.matmul %158, %160, %cst_90 {dimension_numbers = #tpu.dot_dimension_numbers<[1], [0], [0], [1], [0, 0, 1, 1], [], []>} : vector<32x16xbf16>, vector<16x32xbf16>, vector<32x32xf32> -> vector<32x32xf32>
    %162 = arith.addf %157, %161 : vector<32x32xf32>
    %163 = arith.truncf %148 : vector<32x16xf32> to vector<32x16xbf16>
    %164 = vector.extract_strided_slice %133 {offsets = [2, 0, 0], sizes = [1, 16, 32], strides = [1, 1, 1]} : vector<4x16x32xbf16> to vector<1x16x32xbf16>
    %165 = vector.shape_cast %164 : vector<1x16x32xbf16> to vector<16x32xbf16>
    %cst_91 = arith.constant dense<0.000000e+00> : vector<32x32xf32>
    %166 = tpu.matmul %163, %165, %cst_91 {dimension_numbers = #tpu.dot_dimension_numbers<[1], [0], [0], [1], [0, 0, 1, 1], [], []>} : vector<32x16xbf16>, vector<16x32xbf16>, vector<32x32xf32> -> vector<32x32xf32>
    %167 = arith.addf %162, %166 : vector<32x32xf32>
    %168 = arith.truncf %153 : vector<32x16xf32> to vector<32x16xbf16>
    %169 = vector.extract_strided_slice %133 {offsets = [3, 0, 0], sizes = [1, 16, 32], strides = [1, 1, 1]} : vector<4x16x32xbf16> to vector<1x16x32xbf16>
    %170 = vector.shape_cast %169 : vector<1x16x32xbf16> to vector<16x32xbf16>
    %cst_92 = arith.constant dense<0.000000e+00> : vector<32x32xf32>
    %171 = tpu.matmul %168, %170, %cst_92 {dimension_numbers = #tpu.dot_dimension_numbers<[1], [0], [0], [1], [0, 0, 1, 1], [], []>} : vector<32x16xbf16>, vector<16x32xbf16>, vector<32x32xf32> -> vector<32x32xf32>
    %172 = arith.addf %167, %171 : vector<32x32xf32>
    %cst_93 = arith.constant dense<0.000000e+00> : vector<32xf32>
    %173 = vector.multi_reduction <add>, %172, %cst_93 [0] : vector<32x32xf32> to vector<32xf32>
    %174 = vector.shape_cast %173 : vector<32xf32> to vector<1x32xf32>
    %cst_94 = arith.constant 3.125000e-02 : f32
    %175 = vector.broadcast %cst_94 : f32 to vector<1x32xf32>
    %176 = arith.mulf %174, %175 : vector<1x32xf32>
    %177 = vector.broadcast %176 : vector<1x32xf32> to vector<32x32xf32>
    %178 = arith.subf %172, %177 : vector<32x32xf32>
    %179 = arith.mulf %178, %178 : vector<32x32xf32>
    %cst_95 = arith.constant dense<0.000000e+00> : vector<32xf32>
    %180 = vector.multi_reduction <add>, %179, %cst_95 [0] : vector<32x32xf32> to vector<32xf32>
    %181 = vector.shape_cast %180 : vector<32xf32> to vector<1x32xf32>
    %cst_96 = arith.constant 3.125000e-02 : f32
    %182 = vector.broadcast %cst_96 : f32 to vector<1x32xf32>
    %183 = arith.mulf %181, %182 : vector<1x32xf32>
    %cst_97 = arith.constant 9.99999974E-6 : f32
    %184 = vector.broadcast %cst_97 : f32 to vector<1x32xf32>
    %185 = arith.addf %183, %184 : vector<1x32xf32>
    %186 = math.rsqrt %185 : vector<1x32xf32>
    %c0_98 = arith.constant 0 : index
    %c0_99 = arith.constant 0 : index
    %187 = vector.load %arg8[%c0_98, %c0_99] : memref<1x32xf32, #tpu.memory_space<vmem>>, vector<1x32xf32>
    %188 = arith.mulf %186, %187 : vector<1x32xf32>
    %c0_100 = arith.constant 0 : index
    %c0_101 = arith.constant 0 : index
    %189 = vector.load %arg9[%c0_100, %c0_101] : memref<1x32xf32, #tpu.memory_space<vmem>>, vector<1x32xf32>
    %190 = arith.mulf %176, %188 : vector<1x32xf32>
    %191 = arith.subf %189, %190 : vector<1x32xf32>
    %192 = vector.broadcast %188 : vector<1x32xf32> to vector<32x32xf32>
    %193 = arith.mulf %172, %192 : vector<32x32xf32>
    %194 = vector.broadcast %191 : vector<1x32xf32> to vector<32x32xf32>
    %195 = arith.addf %193, %194 : vector<32x32xf32>
    %cst_102 = arith.constant 2.000000e-01 : f32
    %196 = vector.broadcast %cst_102 : f32 to vector<32x32xf32>
    %197 = arith.mulf %196, %195 : vector<32x32xf32>
    %198 = arith.maximumf %195, %197 : vector<32x32xf32>
    %199 = vector.extract_strided_slice %198 {offsets = [0, 0], sizes = [16, 32], strides = [1, 1]} : vector<32x32xf32> to vector<16x32xf32>
    %c8_103 = arith.constant 8 : index
    %c0_104 = arith.constant 0 : index
    %200 = vector.load %arg16[%c8_103, %c0_104] : memref<288x128xf32, #tpu.memory_space<vmem>>, vector<16x32xf32>
    tpu.vector_store %arg16[%c8_103, %c0_104], %199 {strides = array<i32>} : memref<288x128xf32, #tpu.memory_space<vmem>>, vector<16x32xf32>,
    %cst_105 = arith.constant 0.000000e+00 : f32
    %201 = vector.broadcast %cst_105 : f32 to vector<8x128xf32>
    %c24 = arith.constant 24 : index
    %c0_106 = arith.constant 0 : index
    %202 = vector.load %arg16[%c24, %c0_106] : memref<288x128xf32, #tpu.memory_space<vmem>>, vector<8x128xf32>
    tpu.vector_store %arg16[%c24, %c0_106], %201 {strides = array<i32>} : memref<288x128xf32, #tpu.memory_space<vmem>>, vector<8x128xf32>,
    %203 = vector.extract_strided_slice %198 {offsets = [16, 0], sizes = [16, 32], strides = [1, 1]} : vector<32x32xf32> to vector<16x32xf32>
    %c152_107 = arith.constant 152 : index
    %c0_108 = arith.constant 0 : index
    %204 = vector.load %arg16[%c152_107, %c0_108] : memref<288x128xf32, #tpu.memory_space<vmem>>, vector<16x32xf32>
    tpu.vector_store %arg16[%c152_107, %c0_108], %203 {strides = array<i32>} : memref<288x128xf32, #tpu.memory_space<vmem>>, vector<16x32xf32>,
    %cst_109 = arith.constant 0.000000e+00 : f32
    %205 = vector.broadcast %cst_109 : f32 to vector<8x128xf32>
    %c168 = arith.constant 168 : index
    %c0_110 = arith.constant 0 : index
    %206 = vector.load %arg16[%c168, %c0_110] : memref<288x128xf32, #tpu.memory_space<vmem>>, vector<8x128xf32>
    tpu.vector_store %arg16[%c168, %c0_110], %205 {strides = array<i32>} : memref<288x128xf32, #tpu.memory_space<vmem>>, vector<8x128xf32>,
    %c0_111 = arith.constant 0 : index
    %c0_112 = arith.constant 0 : index
    %c0_113 = arith.constant 0 : index
    %207 = vector.load %arg4[%c0_111, %c0_112, %c0_113] : memref<4x32x64xbf16, #tpu.memory_space<vmem>>, vector<4x32x64xbf16>
    %c7_114 = arith.constant 7 : index
    %c0_115 = arith.constant 0 : index
    %208 = tpu.strided_load %arg16[%c7_114, %c0_115] {strides = array<i32: 2, 1>} : memref<288x128xf32, #tpu.memory_space<vmem>>, vector<8x128xf32>
    %209 = vector.extract_strided_slice %208 {offsets = [0, 0], sizes = [8, 32], strides = [1, 1]} : vector<8x128xf32> to vector<8x32xf32>
    %c151_116 = arith.constant 151 : index
    %c0_117 = arith.constant 0 : index
    %210 = tpu.strided_load %arg16[%c151_116, %c0_117] {strides = array<i32: 2, 1>} : memref<288x128xf32, #tpu.memory_space<vmem>>, vector<8x128xf32>
    %211 = vector.extract_strided_slice %210 {offsets = [0, 0], sizes = [8, 32], strides = [1, 1]} : vector<8x128xf32> to vector<8x32xf32>
    %212 = tpu.concatenate %209, %211 in 0 : vector<8x32xf32>, vector<8x32xf32> -> vector<16x32xf32>
    %c8_118 = arith.constant 8 : index
    %c0_119 = arith.constant 0 : index
    %213 = tpu.strided_load %arg16[%c8_118, %c0_119] {strides = array<i32: 2, 1>} : memref<288x128xf32, #tpu.memory_space<vmem>>, vector<8x128xf32>
    %214 = vector.extract_strided_slice %213 {offsets = [0, 0], sizes = [8, 32], strides = [1, 1]} : vector<8x128xf32> to vector<8x32xf32>
    %c152_120 = arith.constant 152 : index
    %c0_121 = arith.constant 0 : index
    %215 = tpu.strided_load %arg16[%c152_120, %c0_121] {strides = array<i32: 2, 1>} : memref<288x128xf32, #tpu.memory_space<vmem>>, vector<8x128xf32>
    %216 = vector.extract_strided_slice %215 {offsets = [0, 0], sizes = [8, 32], strides = [1, 1]} : vector<8x128xf32> to vector<8x32xf32>
    %217 = tpu.concatenate %214, %216 in 0 : vector<8x32xf32>, vector<8x32xf32> -> vector<16x32xf32>
    %c9_122 = arith.constant 9 : index
    %c0_123 = arith.constant 0 : index
    %218 = tpu.strided_load %arg16[%c9_122, %c0_123] {strides = array<i32: 2, 1>} : memref<288x128xf32, #tpu.memory_space<vmem>>, vector<8x128xf32>
    %219 = vector.extract_strided_slice %218 {offsets = [0, 0], sizes = [8, 32], strides = [1, 1]} : vector<8x128xf32> to vector<8x32xf32>
    %c153_124 = arith.constant 153 : index
    %c0_125 = arith.constant 0 : index
    %220 = tpu.strided_load %arg16[%c153_124, %c0_125] {strides = array<i32: 2, 1>} : memref<288x128xf32, #tpu.memory_space<vmem>>, vector<8x128xf32>
    %221 = vector.extract_strided_slice %220 {offsets = [0, 0], sizes = [8, 32], strides = [1, 1]} : vector<8x128xf32> to vector<8x32xf32>
    %222 = tpu.concatenate %219, %221 in 0 : vector<8x32xf32>, vector<8x32xf32> -> vector<16x32xf32>
    %c10_126 = arith.constant 10 : index
    %c0_127 = arith.constant 0 : index
    %223 = tpu.strided_load %arg16[%c10_126, %c0_127] {strides = array<i32: 2, 1>} : memref<288x128xf32, #tpu.memory_space<vmem>>, vector<8x128xf32>
    %224 = vector.extract_strided_slice %223 {offsets = [0, 0], sizes = [8, 32], strides = [1, 1]} : vector<8x128xf32> to vector<8x32xf32>
    %c154_128 = arith.constant 154 : index
    %c0_129 = arith.constant 0 : index
    %225 = tpu.strided_load %arg16[%c154_128, %c0_129] {strides = array<i32: 2, 1>} : memref<288x128xf32, #tpu.memory_space<vmem>>, vector<8x128xf32>
    %226 = vector.extract_strided_slice %225 {offsets = [0, 0], sizes = [8, 32], strides = [1, 1]} : vector<8x128xf32> to vector<8x32xf32>
    %227 = tpu.concatenate %224, %226 in 0 : vector<8x32xf32>, vector<8x32xf32> -> vector<16x32xf32>
    %228 = arith.truncf %212 : vector<16x32xf32> to vector<16x32xbf16>
    %229 = vector.extract_strided_slice %207 {offsets = [0, 0, 0], sizes = [1, 32, 64], strides = [1, 1, 1]} : vector<4x32x64xbf16> to vector<1x32x64xbf16>
    %230 = vector.shape_cast %229 : vector<1x32x64xbf16> to vector<32x64xbf16>
    %cst_130 = arith.constant dense<0.000000e+00> : vector<16x64xf32>
    %231 = tpu.matmul %228, %230, %cst_130 {dimension_numbers = #tpu.dot_dimension_numbers<[1], [0], [0], [1], [0, 0, 1, 1], [], []>} : vector<16x32xbf16>, vector<32x64xbf16>, vector<16x64xf32> -> vector<16x64xf32>
    %232 = arith.truncf %217 : vector<16x32xf32> to vector<16x32xbf16>
    %233 = vector.extract_strided_slice %207 {offsets = [1, 0, 0], sizes = [1, 32, 64], strides = [1, 1, 1]} : vector<4x32x64xbf16> to vector<1x32x64xbf16>
    %234 = vector.shape_cast %233 : vector<1x32x64xbf16> to vector<32x64xbf16>
    %cst_131 = arith.constant dense<0.000000e+00> : vector<16x64xf32>
    %235 = tpu.matmul %232, %234, %cst_131 {dimension_numbers = #tpu.dot_dimension_numbers<[1], [0], [0], [1], [0, 0, 1, 1], [], []>} : vector<16x32xbf16>, vector<32x64xbf16>, vector<16x64xf32> -> vector<16x64xf32>
    %236 = arith.addf %231, %235 : vector<16x64xf32>
    %237 = arith.truncf %222 : vector<16x32xf32> to vector<16x32xbf16>
    %238 = vector.extract_strided_slice %207 {offsets = [2, 0, 0], sizes = [1, 32, 64], strides = [1, 1, 1]} : vector<4x32x64xbf16> to vector<1x32x64xbf16>
    %239 = vector.shape_cast %238 : vector<1x32x64xbf16> to vector<32x64xbf16>
    %cst_132 = arith.constant dense<0.000000e+00> : vector<16x64xf32>
    %240 = tpu.matmul %237, %239, %cst_132 {dimension_numbers = #tpu.dot_dimension_numbers<[1], [0], [0], [1], [0, 0, 1, 1], [], []>} : vector<16x32xbf16>, vector<32x64xbf16>, vector<16x64xf32> -> vector<16x64xf32>
    %241 = arith.addf %236, %240 : vector<16x64xf32>
    %242 = arith.truncf %227 : vector<16x32xf32> to vector<16x32xbf16>
    %243 = vector.extract_strided_slice %207 {offsets = [3, 0, 0], sizes = [1, 32, 64], strides = [1, 1, 1]} : vector<4x32x64xbf16> to vector<1x32x64xbf16>
    %244 = vector.shape_cast %243 : vector<1x32x64xbf16> to vector<32x64xbf16>
    %cst_133 = arith.constant dense<0.000000e+00> : vector<16x64xf32>
    %245 = tpu.matmul %242, %244, %cst_133 {dimension_numbers = #tpu.dot_dimension_numbers<[1], [0], [0], [1], [0, 0, 1, 1], [], []>} : vector<16x32xbf16>, vector<32x64xbf16>, vector<16x64xf32> -> vector<16x64xf32>
    %246 = arith.addf %241, %245 : vector<16x64xf32>
    %cst_134 = arith.constant dense<0.000000e+00> : vector<64xf32>
    %247 = vector.multi_reduction <add>, %246, %cst_134 [0] : vector<16x64xf32> to vector<64xf32>
    %248 = vector.shape_cast %247 : vector<64xf32> to vector<1x64xf32>
    %cst_135 = arith.constant 6.250000e-02 : f32
    %249 = vector.broadcast %cst_135 : f32 to vector<1x64xf32>
    %250 = arith.mulf %248, %249 : vector<1x64xf32>
    %251 = vector.broadcast %250 : vector<1x64xf32> to vector<16x64xf32>
    %252 = arith.subf %246, %251 : vector<16x64xf32>
    %253 = arith.mulf %252, %252 : vector<16x64xf32>
    %cst_136 = arith.constant dense<0.000000e+00> : vector<64xf32>
    %254 = vector.multi_reduction <add>, %253, %cst_136 [0] : vector<16x64xf32> to vector<64xf32>
    %255 = vector.shape_cast %254 : vector<64xf32> to vector<1x64xf32>
    %cst_137 = arith.constant 6.250000e-02 : f32
    %256 = vector.broadcast %cst_137 : f32 to vector<1x64xf32>
    %257 = arith.mulf %255, %256 : vector<1x64xf32>
    %cst_138 = arith.constant 9.99999974E-6 : f32
    %258 = vector.broadcast %cst_138 : f32 to vector<1x64xf32>
    %259 = arith.addf %257, %258 : vector<1x64xf32>
    %260 = math.rsqrt %259 : vector<1x64xf32>
    %c0_139 = arith.constant 0 : index
    %c0_140 = arith.constant 0 : index
    %261 = vector.load %arg10[%c0_139, %c0_140] : memref<1x64xf32, #tpu.memory_space<vmem>>, vector<1x64xf32>
    %262 = arith.mulf %260, %261 : vector<1x64xf32>
    %c0_141 = arith.constant 0 : index
    %c0_142 = arith.constant 0 : index
    %263 = vector.load %arg11[%c0_141, %c0_142] : memref<1x64xf32, #tpu.memory_space<vmem>>, vector<1x64xf32>
    %264 = arith.mulf %250, %262 : vector<1x64xf32>
    %265 = arith.subf %263, %264 : vector<1x64xf32>
    %266 = vector.broadcast %262 : vector<1x64xf32> to vector<16x64xf32>
    %267 = arith.mulf %246, %266 : vector<16x64xf32>
    %268 = vector.broadcast %265 : vector<1x64xf32> to vector<16x64xf32>
    %269 = arith.addf %267, %268 : vector<16x64xf32>
    %cst_143 = arith.constant 2.000000e-01 : f32
    %270 = vector.broadcast %cst_143 : f32 to vector<16x64xf32>
    %271 = arith.mulf %270, %269 : vector<16x64xf32>
    %272 = arith.maximumf %269, %271 : vector<16x64xf32>
    %273 = vector.extract_strided_slice %272 {offsets = [0, 0], sizes = [8, 64], strides = [1, 1]} : vector<16x64xf32> to vector<8x64xf32>
    %c8_144 = arith.constant 8 : index
    %c0_145 = arith.constant 0 : index
    %274 = vector.load %arg16[%c8_144, %c0_145] : memref<288x128xf32, #tpu.memory_space<vmem>>, vector<8x64xf32>
    tpu.vector_store %arg16[%c8_144, %c0_145], %273 {strides = array<i32>} : memref<288x128xf32, #tpu.memory_space<vmem>>, vector<8x64xf32>,
    %cst_146 = arith.constant 0.000000e+00 : f32
    %275 = vector.broadcast %cst_146 : f32 to vector<8x128xf32>
    %c16 = arith.constant 16 : index
    %c0_147 = arith.constant 0 : index
    %276 = vector.load %arg16[%c16, %c0_147] : memref<288x128xf32, #tpu.memory_space<vmem>>, vector<8x128xf32>
    tpu.vector_store %arg16[%c16, %c0_147], %275 {strides = array<i32>} : memref<288x128xf32, #tpu.memory_space<vmem>>, vector<8x128xf32>,
    %277 = vector.extract_strided_slice %272 {offsets = [8, 0], sizes = [8, 64], strides = [1, 1]} : vector<16x64xf32> to vector<8x64xf32>
    %c152_148 = arith.constant 152 : index
    %c0_149 = arith.constant 0 : index
    %278 = vector.load %arg16[%c152_148, %c0_149] : memref<288x128xf32, #tpu.memory_space<vmem>>, vector<8x64xf32>
    tpu.vector_store %arg16[%c152_148, %c0_149], %277 {strides = array<i32>} : memref<288x128xf32, #tpu.memory_space<vmem>>, vector<8x64xf32>,
    %cst_150 = arith.constant 0.000000e+00 : f32
    %279 = vector.broadcast %cst_150 : f32 to vector<8x128xf32>
    %c160 = arith.constant 160 : index
    %c0_151 = arith.constant 0 : index
    %280 = vector.load %arg16[%c160, %c0_151] : memref<288x128xf32, #tpu.memory_space<vmem>>, vector<8x128xf32>
    tpu.vector_store %arg16[%c160, %c0_151], %279 {strides = array<i32>} : memref<288x128xf32, #tpu.memory_space<vmem>>, vector<8x128xf32>,
    %c0_152 = arith.constant 0 : index
    %c0_153 = arith.constant 0 : index
    %c0_154 = arith.constant 0 : index
    %281 = vector.load %arg5[%c0_152, %c0_153, %c0_154] : memref<4x64x128xbf16, #tpu.memory_space<vmem>>, vector<4x64x128xbf16>
    %c7_155 = arith.constant 7 : index
    %c0_156 = arith.constant 0 : index
    %282 = tpu.strided_load %arg16[%c7_155, %c0_156] {strides = array<i32: 2, 1>} : memref<288x128xf32, #tpu.memory_space<vmem>>, vector<4x128xf32>
    %283 = vector.extract_strided_slice %282 {offsets = [0, 0], sizes = [4, 64], strides = [1, 1]} : vector<4x128xf32> to vector<4x64xf32>
    %c151_157 = arith.constant 151 : index
    %c0_158 = arith.constant 0 : index
    %284 = tpu.strided_load %arg16[%c151_157, %c0_158] {strides = array<i32: 2, 1>} : memref<288x128xf32, #tpu.memory_space<vmem>>, vector<4x128xf32>
    %285 = vector.extract_strided_slice %284 {offsets = [0, 0], sizes = [4, 64], strides = [1, 1]} : vector<4x128xf32> to vector<4x64xf32>
    %286 = tpu.concatenate %283, %285 in 0 : vector<4x64xf32>, vector<4x64xf32> -> vector<8x64xf32>
    %c8_159 = arith.constant 8 : index
    %c0_160 = arith.constant 0 : index
    %287 = tpu.strided_load %arg16[%c8_159, %c0_160] {strides = array<i32: 2, 1>} : memref<288x128xf32, #tpu.memory_space<vmem>>, vector<4x128xf32>
    %288 = vector.extract_strided_slice %287 {offsets = [0, 0], sizes = [4, 64], strides = [1, 1]} : vector<4x128xf32> to vector<4x64xf32>
    %c152_161 = arith.constant 152 : index
    %c0_162 = arith.constant 0 : index
    %289 = tpu.strided_load %arg16[%c152_161, %c0_162] {strides = array<i32: 2, 1>} : memref<288x128xf32, #tpu.memory_space<vmem>>, vector<4x128xf32>
    %290 = vector.extract_strided_slice %289 {offsets = [0, 0], sizes = [4, 64], strides = [1, 1]} : vector<4x128xf32> to vector<4x64xf32>
    %291 = tpu.concatenate %288, %290 in 0 : vector<4x64xf32>, vector<4x64xf32> -> vector<8x64xf32>
    %c9_163 = arith.constant 9 : index
    %c0_164 = arith.constant 0 : index
    %292 = tpu.strided_load %arg16[%c9_163, %c0_164] {strides = array<i32: 2, 1>} : memref<288x128xf32, #tpu.memory_space<vmem>>, vector<4x128xf32>
    %293 = vector.extract_strided_slice %292 {offsets = [0, 0], sizes = [4, 64], strides = [1, 1]} : vector<4x128xf32> to vector<4x64xf32>
    %c153_165 = arith.constant 153 : index
    %c0_166 = arith.constant 0 : index
    %294 = tpu.strided_load %arg16[%c153_165, %c0_166] {strides = array<i32: 2, 1>} : memref<288x128xf32, #tpu.memory_space<vmem>>, vector<4x128xf32>
    %295 = vector.extract_strided_slice %294 {offsets = [0, 0], sizes = [4, 64], strides = [1, 1]} : vector<4x128xf32> to vector<4x64xf32>
    %296 = tpu.concatenate %293, %295 in 0 : vector<4x64xf32>, vector<4x64xf32> -> vector<8x64xf32>
    %c10_167 = arith.constant 10 : index
    %c0_168 = arith.constant 0 : index
    %297 = tpu.strided_load %arg16[%c10_167, %c0_168] {strides = array<i32: 2, 1>} : memref<288x128xf32, #tpu.memory_space<vmem>>, vector<4x128xf32>
    %298 = vector.extract_strided_slice %297 {offsets = [0, 0], sizes = [4, 64], strides = [1, 1]} : vector<4x128xf32> to vector<4x64xf32>
    %c154_169 = arith.constant 154 : index
    %c0_170 = arith.constant 0 : index
    %299 = tpu.strided_load %arg16[%c154_169, %c0_170] {strides = array<i32: 2, 1>} : memref<288x128xf32, #tpu.memory_space<vmem>>, vector<4x128xf32>
    %300 = vector.extract_strided_slice %299 {offsets = [0, 0], sizes = [4, 64], strides = [1, 1]} : vector<4x128xf32> to vector<4x64xf32>
    %301 = tpu.concatenate %298, %300 in 0 : vector<4x64xf32>, vector<4x64xf32> -> vector<8x64xf32>
    %302 = arith.truncf %286 : vector<8x64xf32> to vector<8x64xbf16>
    %303 = vector.extract_strided_slice %281 {offsets = [0, 0, 0], sizes = [1, 64, 128], strides = [1, 1, 1]} : vector<4x64x128xbf16> to vector<1x64x128xbf16>
    %304 = vector.shape_cast %303 : vector<1x64x128xbf16> to vector<64x128xbf16>
    %cst_171 = arith.constant dense<0.000000e+00> : vector<8x128xf32>
    %305 = tpu.matmul %302, %304, %cst_171 {dimension_numbers = #tpu.dot_dimension_numbers<[1], [0], [0], [1], [0, 0, 1, 1], [], []>} : vector<8x64xbf16>, vector<64x128xbf16>, vector<8x128xf32> -> vector<8x128xf32>
    %306 = arith.truncf %291 : vector<8x64xf32> to vector<8x64xbf16>
    %307 = vector.extract_strided_slice %281 {offsets = [1, 0, 0], sizes = [1, 64, 128], strides = [1, 1, 1]} : vector<4x64x128xbf16> to vector<1x64x128xbf16>
    %308 = vector.shape_cast %307 : vector<1x64x128xbf16> to vector<64x128xbf16>
    %cst_172 = arith.constant dense<0.000000e+00> : vector<8x128xf32>
    %309 = tpu.matmul %306, %308, %cst_172 {dimension_numbers = #tpu.dot_dimension_numbers<[1], [0], [0], [1], [0, 0, 1, 1], [], []>} : vector<8x64xbf16>, vector<64x128xbf16>, vector<8x128xf32> -> vector<8x128xf32>
    %310 = arith.addf %305, %309 : vector<8x128xf32>
    %311 = arith.truncf %296 : vector<8x64xf32> to vector<8x64xbf16>
    %312 = vector.extract_strided_slice %281 {offsets = [2, 0, 0], sizes = [1, 64, 128], strides = [1, 1, 1]} : vector<4x64x128xbf16> to vector<1x64x128xbf16>
    %313 = vector.shape_cast %312 : vector<1x64x128xbf16> to vector<64x128xbf16>
    %cst_173 = arith.constant dense<0.000000e+00> : vector<8x128xf32>
    %314 = tpu.matmul %311, %313, %cst_173 {dimension_numbers = #tpu.dot_dimension_numbers<[1], [0], [0], [1], [0, 0, 1, 1], [], []>} : vector<8x64xbf16>, vector<64x128xbf16>, vector<8x128xf32> -> vector<8x128xf32>
    %315 = arith.addf %310, %314 : vector<8x128xf32>
    %316 = arith.truncf %301 : vector<8x64xf32> to vector<8x64xbf16>
    %317 = vector.extract_strided_slice %281 {offsets = [3, 0, 0], sizes = [1, 64, 128], strides = [1, 1, 1]} : vector<4x64x128xbf16> to vector<1x64x128xbf16>
    %318 = vector.shape_cast %317 : vector<1x64x128xbf16> to vector<64x128xbf16>
    %cst_174 = arith.constant dense<0.000000e+00> : vector<8x128xf32>
    %319 = tpu.matmul %316, %318, %cst_174 {dimension_numbers = #tpu.dot_dimension_numbers<[1], [0], [0], [1], [0, 0, 1, 1], [], []>} : vector<8x64xbf16>, vector<64x128xbf16>, vector<8x128xf32> -> vector<8x128xf32>
    %320 = arith.addf %315, %319 : vector<8x128xf32>
    %cst_175 = arith.constant dense<0.000000e+00> : vector<128xf32>
    %321 = vector.multi_reduction <add>, %320, %cst_175 [0] : vector<8x128xf32> to vector<128xf32>
    %322 = vector.shape_cast %321 : vector<128xf32> to vector<1x128xf32>
    %cst_176 = arith.constant 1.250000e-01 : f32
    %323 = vector.broadcast %cst_176 : f32 to vector<1x128xf32>
    %324 = arith.mulf %322, %323 : vector<1x128xf32>
    %325 = vector.broadcast %324 : vector<1x128xf32> to vector<8x128xf32>
    %326 = arith.subf %320, %325 : vector<8x128xf32>
    %327 = arith.mulf %326, %326 : vector<8x128xf32>
    %cst_177 = arith.constant dense<0.000000e+00> : vector<128xf32>
    %328 = vector.multi_reduction <add>, %327, %cst_177 [0] : vector<8x128xf32> to vector<128xf32>
    %329 = vector.shape_cast %328 : vector<128xf32> to vector<1x128xf32>
    %cst_178 = arith.constant 1.250000e-01 : f32
    %330 = vector.broadcast %cst_178 : f32 to vector<1x128xf32>
    %331 = arith.mulf %329, %330 : vector<1x128xf32>
    %cst_179 = arith.constant 9.99999974E-6 : f32
    %332 = vector.broadcast %cst_179 : f32 to vector<1x128xf32>
    %333 = arith.addf %331, %332 : vector<1x128xf32>
    %334 = math.rsqrt %333 : vector<1x128xf32>
    %c0_180 = arith.constant 0 : index
    %c0_181 = arith.constant 0 : index
    %335 = vector.load %arg12[%c0_180, %c0_181] : memref<1x128xf32, #tpu.memory_space<vmem>>, vector<1x128xf32>
    %336 = arith.mulf %334, %335 : vector<1x128xf32>
    %c0_182 = arith.constant 0 : index
    %c0_183 = arith.constant 0 : index
    %337 = vector.load %arg13[%c0_182, %c0_183] : memref<1x128xf32, #tpu.memory_space<vmem>>, vector<1x128xf32>
    %338 = arith.mulf %324, %336 : vector<1x128xf32>
    %339 = arith.subf %337, %338 : vector<1x128xf32>
    %340 = vector.broadcast %336 : vector<1x128xf32> to vector<8x128xf32>
    %341 = arith.mulf %320, %340 : vector<8x128xf32>
    %342 = vector.broadcast %339 : vector<1x128xf32> to vector<8x128xf32>
    %343 = arith.addf %341, %342 : vector<8x128xf32>
    %cst_184 = arith.constant 2.000000e-01 : f32
    %344 = vector.broadcast %cst_184 : f32 to vector<8x128xf32>
    %345 = arith.mulf %344, %343 : vector<8x128xf32>
    %346 = arith.maximumf %343, %345 : vector<8x128xf32>
    %347 = vector.extract_strided_slice %346 {offsets = [0, 0], sizes = [4, 128], strides = [1, 1]} : vector<8x128xf32> to vector<4x128xf32>
    %cst_185 = arith.constant dense<0.000000e+00> : vector<128xf32>
    %348 = vector.multi_reduction <add>, %347, %cst_185 [0] : vector<4x128xf32> to vector<128xf32>
    %349 = vector.shape_cast %348 : vector<128xf32> to vector<1x128xf32>
    %cst_186 = arith.constant 4.000000e+00 : f32
    %350 = vector.broadcast %cst_186 : f32 to vector<1x128xf32>
    %351 = arith.divf %349, %350 : vector<1x128xf32>
    %352 = vector.extract_strided_slice %346 {offsets = [4, 0], sizes = [4, 128], strides = [1, 1]} : vector<8x128xf32> to vector<4x128xf32>
    %cst_187 = arith.constant dense<0.000000e+00> : vector<128xf32>
    %353 = vector.multi_reduction <add>, %352, %cst_187 [0] : vector<4x128xf32> to vector<128xf32>
    %354 = vector.shape_cast %353 : vector<128xf32> to vector<1x128xf32>
    %cst_188 = arith.constant 4.000000e+00 : f32
    %355 = vector.broadcast %cst_188 : f32 to vector<1x128xf32>
    %356 = arith.divf %354, %355 : vector<1x128xf32>
    %357 = tpu.concatenate %351, %356 in 0 : vector<1x128xf32>, vector<1x128xf32> -> vector<2x128xf32>
    %358 = arith.truncf %357 : vector<2x128xf32> to vector<2x128xbf16>
    %c0_189 = arith.constant 0 : index
    %c0_190 = arith.constant 0 : index
    %359 = vector.load %arg14[%c0_189, %c0_190] : memref<128x128xbf16, #tpu.memory_space<vmem>>, vector<128x128xbf16>
    %cst_191 = arith.constant dense<0.000000e+00> : vector<2x128xf32>
    %360 = tpu.matmul %358, %359, %cst_191 {dimension_numbers = #tpu.dot_dimension_numbers<[1], [0], [0], [1], [0, 0, 1, 1], [], []>} : vector<2x128xbf16>, vector<128x128xbf16>, vector<2x128xf32> -> vector<2x128xf32>
    %c0_192 = arith.constant 0 : index
    %c0_193 = arith.constant 0 : index
    %361 = vector.load %arg15[%c0_192, %c0_193] : memref<2x128xf32, #tpu.memory_space<vmem>>, vector<2x128xf32>
    tpu.vector_store %arg15[%c0_192, %c0_193], %360 {strides = array<i32>} : memref<2x128xf32, #tpu.memory_space<vmem>>, vector<2x128xf32>,
    return
  }
}

</mosaic_0001>

<llo_original>
// kernel: _lambda_.1
$region0: #{_lambda_.1}
  #allocation0 [shape = 'u32[]', space=smem, size = 0x4, offset = 0x4, fixed_abs, tag = 'smem constant byte address 0x4 - core index']
  #allocation1 [shape = 'u32[144,128]{1,0:T(1,128)}', space=vmem, size = 0x12000, scoped, tag = 'internal scratch']
  #allocation2 [shape = 'f32[288,128]{1,0:T(8,128)}', space=vmem, size = 0x24000, scoped, tag = 'scratch operand']
  %s0 = inlined_call_operand.vmem [shape: f32[2,128,1], index: 0, kind: input, shape index: {}]
  %s1 = inlined_call_operand.vmem [shape: f32[4,8], index: 1, kind: input, shape index: {}]
  %s2 = inlined_call_operand.hbm [shape: bf16[4,8,16], index: 2, kind: input, shape index: {}]
  %s3 = inlined_call_operand.vmem [shape: bf16[4,16,32], index: 3, kind: input, shape index: {}]
  %s4 = inlined_call_operand.vmem [shape: bf16[4,32,64], index: 4, kind: input, shape index: {}]
  %s5 = inlined_call_operand.vmem [shape: bf16[4,64,128], index: 5, kind: input, shape index: {}]
  %s6 = inlined_call_operand.hbm [shape: f32[1,16], index: 6, kind: input, shape index: {}]
  %s7 = inlined_call_operand.hbm [shape: f32[1,16], index: 7, kind: input, shape index: {}]
  %s8 = inlined_call_operand.hbm [shape: f32[1,32], index: 8, kind: input, shape index: {}]
  %s9 = inlined_call_operand.hbm [shape: f32[1,32], index: 9, kind: input, shape index: {}]
  %s10 = inlined_call_operand.hbm [shape: f32[1,64], index: 10, kind: input, shape index: {}]
  %s11 = inlined_call_operand.hbm [shape: f32[1,64], index: 11, kind: input, shape index: {}]
  %s12 = inlined_call_operand.hbm [shape: f32[1,128], index: 12, kind: input, shape index: {}]
  %s13 = inlined_call_operand.hbm [shape: f32[1,128], index: 13, kind: input, shape index: {}]
  %s14 = inlined_call_operand.vmem [shape: bf16[128,128], index: 14, kind: input, shape index: {}]
  %s15 = inlined_call_operand.hbm [shape: f32[2,128], index: 15, kind: output, shape index: {}]
  %s16 = sld [smem:[#allocation0]]
  $region106: #{_lambda_.1} parent=0
    _
  %s18 = ssub.s32 1, %s16
  %s19 = scalar_select 0, %s18, %s16
  $region1: #{_lambda_.1} parent=0
    #allocation3 [shape = 'u8[8192]{0}', space=vmem, size = 0x2000, scoped, tag = 'input window, operand 2, single buffered']
    #allocation4 [shape = 's32[1]{0}', space=sflag, size = 0x4, scoped, tag = 'scoped memory for _lambda_.1']
    #allocation5 [shape = 's32[1]{0}', space=sflag, size = 0x4, scoped, tag = 'scoped memory for _lambda_.1']
    #allocation6 [shape = 'u8[512]{0}', space=vmem, size = 0x400, scoped, tag = 'input window, operand 6, single buffered']
    #allocation7 [shape = 's32[1]{0}', space=sflag, size = 0x4, scoped, tag = 'scoped memory for _lambda_.1']
    #allocation8 [shape = 'u8[512]{0}', space=vmem, size = 0x400, scoped, tag = 'input window, operand 7, single buffered']
    #allocation9 [shape = 'u8[512]{0}', space=vmem, size = 0x400, scoped, tag = 'input window, operand 8, single buffered']
    #allocation10 [shape = 's32[1]{0}', space=sflag, size = 0x4, scoped, tag = 'scoped memory for _lambda_.1']
    #allocation11 [shape = 'u8[512]{0}', space=vmem, size = 0x400, scoped, tag = 'input window, operand 9, single buffered']
    #allocation12 [shape = 'u8[512]{0}', space=vmem, size = 0x400, scoped, tag = 'input window, operand 10, single buffered']
    #allocation13 [shape = 's32[1]{0}', space=sflag, size = 0x4, scoped, tag = 'scoped memory for _lambda_.1']
    #allocation14 [shape = 'u8[512]{0}', space=vmem, size = 0x400, scoped, tag = 'input window, operand 11, single buffered']
    #allocation15 [shape = 'u8[512]{0}', space=vmem, size = 0x400, scoped, tag = 'input window, operand 12, single buffered']
    #allocation16 [shape = 's32[1]{0}', space=sflag, size = 0x4, scoped, tag = 'scoped memory for _lambda_.1']
    #allocation17 [shape = 'u8[512]{0}', space=vmem, size = 0x400, scoped, tag = 'input window, operand 13, single buffered']
    #allocation18 [shape = 'u8[1024]{0}', space=vmem, size = 0x400, scoped, tag = 'output window, operand 0, single buffered']
    %20 = vsyncpa [#allocation4], 0
    %21 = vsyncpa [#allocation7], 0
    %22 = vsyncpa [#allocation10], 0
    %23 = vsyncpa [#allocation13], 0
    %24 = vsyncpa [#allocation16], 0
    %25 = vsyncpa [#allocation5], 0
    // Predicated region
    $region2: #{_lambda_.1} parent=1 // pred_check
      _
    $region3: #{_lambda_.1} parent=1 // pred_check_branch
      %27 = sbr.rel (0) target = $region5
    $region4: #{_lambda_.1} parent=1 // pred_region
      _
    $region5: #{_lambda_.1} parent=1 // pred_fallthru
      _
    // Predicated region
    $region6: #{_lambda_.1} parent=1 // pred_check
      _
    $region7: #{_lambda_.1} parent=1 // pred_check_branch
      %29 = sbr.rel (0) target = $region9
    $region8: #{_lambda_.1} parent=1 // pred_region
      _
    $region9: #{_lambda_.1} parent=1 // pred_fallthru
      _
    // Predicated region
    $region10: #{_lambda_.1} parent=1 // pred_check
      _
    $region11: #{_lambda_.1} parent=1 // pred_check_branch
      %31 = sbr.rel (0) target = $region13
    $region12: #{_lambda_.1} parent=1 // pred_region
      %s33 = ssub.s32 256, 256
      %34 = vsyncadd [#allocation4], %s33
      %s35 = sshll.u32 [#allocation3], 4
      %s36 = int_to_ptr.vmem [resolvable:$true] %s35
      %41 = dma.hbm_to_vmem [thread:$0]  %s2, 256, %s36, [#allocation4], 64, 64, 4
    $region13: #{_lambda_.1} parent=1 // pred_fallthru
      _
    // Predicated region
    $region14: #{_lambda_.1} parent=1 // pred_check
      _
    $region15: #{_lambda_.1} parent=1 // pred_check_branch
      %43 = sbr.rel (0) target = $region17
    $region16: #{_lambda_.1} parent=1 // pred_region
      _
    $region17: #{_lambda_.1} parent=1 // pred_fallthru
      _
    // Predicated region
    $region18: #{_lambda_.1} parent=1 // pred_check
      _
    $region19: #{_lambda_.1} parent=1 // pred_check_branch
      %45 = sbr.rel (0) target = $region21
    $region20: #{_lambda_.1} parent=1 // pred_region
      _
    $region21: #{_lambda_.1} parent=1 // pred_fallthru
      _
    // Predicated region
    $region22: #{_lambda_.1} parent=1 // pred_check
      _
    $region23: #{_lambda_.1} parent=1 // pred_check_branch
      %47 = sbr.rel (0) target = $region25
    $region24: #{_lambda_.1} parent=1 // pred_region
      _
    $region25: #{_lambda_.1} parent=1 // pred_fallthru
      _
    // Predicated region
    $region26: #{_lambda_.1} parent=1 // pred_check
      _
    $region27: #{_lambda_.1} parent=1 // pred_check_branch
      %49 = sbr.rel (0) target = $region29
    $region28: #{_lambda_.1} parent=1 // pred_region
      %s51 = ssub.s32 16, 16
      %52 = vsyncadd [#allocation7], %s51
      %s54 = sshll.u32 [#allocation6], 4
      %s55 = int_to_ptr.vmem [resolvable:$true] %s54
      %57 = dma.hbm_to_vmem [thread:$0]  %s6, 16, %s55, [#allocation7]
    $region29: #{_lambda_.1} parent=1 // pred_fallthru
      _
    // Predicated region
    $region30: #{_lambda_.1} parent=1 // pred_check
      _
    $region31: #{_lambda_.1} parent=1 // pred_check_branch
      %59 = sbr.rel (0) target = $region33
    $region32: #{_lambda_.1} parent=1 // pred_region
      %s61 = ssub.s32 16, 16
      %62 = vsyncadd [#allocation7], %s61
      %s64 = sshll.u32 [#allocation8], 4
      %s65 = int_to_ptr.vmem [resolvable:$true] %s64
      %67 = dma.hbm_to_vmem [thread:$0]  %s7, 16, %s65, [#allocation7]
    $region33: #{_lambda_.1} parent=1 // pred_fallthru
      _
    // Predicated region
    $region34: #{_lambda_.1} parent=1 // pred_check
      _
    $region35: #{_lambda_.1} parent=1 // pred_check_branch
      %69 = sbr.rel (0) target = $region37
    $region36: #{_lambda_.1} parent=1 // pred_region
      %s71 = ssub.s32 16, 16
      %72 = vsyncadd [#allocation10], %s71
      %s74 = sshll.u32 [#allocation9], 4
      %s75 = int_to_ptr.vmem [resolvable:$true] %s74
      %77 = dma.hbm_to_vmem [thread:$0]  %s8, 16, %s75, [#allocation10]
    $region37: #{_lambda_.1} parent=1 // pred_fallthru
      _
    // Predicated region
    $region38: #{_lambda_.1} parent=1 // pred_check
      _
    $region39: #{_lambda_.1} parent=1 // pred_check_branch
      %79 = sbr.rel (0) target = $region41
    $region40: #{_lambda_.1} parent=1 // pred_region
      %s81 = ssub.s32 16, 16
      %82 = vsyncadd [#allocation10], %s81
      %s84 = sshll.u32 [#allocation11], 4
      %s85 = int_to_ptr.vmem [resolvable:$true] %s84
      %87 = dma.hbm_to_vmem [thread:$0]  %s9, 16, %s85, [#allocation10]
    $region41: #{_lambda_.1} parent=1 // pred_fallthru
      _
    // Predicated region
    $region42: #{_lambda_.1} parent=1 // pred_check
      _
    $region43: #{_lambda_.1} parent=1 // pred_check_branch
      %89 = sbr.rel (0) target = $region45
    $region44: #{_lambda_.1} parent=1 // pred_region
      %s91 = ssub.s32 16, 16
      %92 = vsyncadd [#allocation13], %s91
      %s94 = sshll.u32 [#allocation12], 4
      %s95 = int_to_ptr.vmem [resolvable:$true] %s94
      %97 = dma.hbm_to_vmem [thread:$0]  %s10, 16, %s95, [#allocation13]
    $region45: #{_lambda_.1} parent=1 // pred_fallthru
      _
    // Predicated region
    $region46: #{_lambda_.1} parent=1 // pred_check
      _
    $region47: #{_lambda_.1} parent=1 // pred_check_branch
      %99 = sbr.rel (0) target = $region49
    $region48: #{_lambda_.1} parent=1 // pred_region
      %s101 = ssub.s32 16, 16
      %102 = vsyncadd [#allocation13], %s101
      %s104 = sshll.u32 [#allocation14], 4
      %s105 = int_to_ptr.vmem [resolvable:$true] %s104
      %107 = dma.hbm_to_vmem [thread:$0]  %s11, 16, %s105, [#allocation13]
    $region49: #{_lambda_.1} parent=1 // pred_fallthru
      _
    // Predicated region
    $region50: #{_lambda_.1} parent=1 // pred_check
      _
    $region51: #{_lambda_.1} parent=1 // pred_check_branch
      %109 = sbr.rel (0) target = $region53
    $region52: #{_lambda_.1} parent=1 // pred_region
      %s111 = ssub.s32 16, 16
      %112 = vsyncadd [#allocation16], %s111
      %s114 = sshll.u32 [#allocation15], 4
      %s115 = int_to_ptr.vmem [resolvable:$true] %s114
      %117 = dma.hbm_to_vmem [thread:$0]  %s12, 16, %s115, [#allocation16]
    $region53: #{_lambda_.1} parent=1 // pred_fallthru
      _
    // Predicated region
    $region54: #{_lambda_.1} parent=1 // pred_check
      _
    $region55: #{_lambda_.1} parent=1 // pred_check_branch
      %119 = sbr.rel (0) target = $region57
    $region56: #{_lambda_.1} parent=1 // pred_region
      %s121 = ssub.s32 16, 16
      %122 = vsyncadd [#allocation16], %s121
      %s124 = sshll.u32 [#allocation17], 4
      %s125 = int_to_ptr.vmem [resolvable:$true] %s124
      %127 = dma.hbm_to_vmem [thread:$0]  %s13, 16, %s125, [#allocation16]
    $region57: #{_lambda_.1} parent=1 // pred_fallthru
      _
    // Predicated region
    $region58: #{_lambda_.1} parent=1 // pred_check
      _
    $region59: #{_lambda_.1} parent=1 // pred_check_branch
      %129 = sbr.rel (0) target = $region61
    $region60: #{_lambda_.1} parent=1 // pred_region
      _
    $region61: #{_lambda_.1} parent=1 // pred_fallthru
      _
    // Predicated region
    $region62: #{_lambda_.1} parent=1 // pred_check
      _
    $region63: #{_lambda_.1} parent=1 // pred_check_branch
      %131 = sbr.rel (0) target = $region65
    $region64: #{_lambda_.1} parent=1 // pred_region
      %132 = dma.done [#allocation4], 256
    $region65: #{_lambda_.1} parent=1 // pred_fallthru
      _
    // Predicated region
    $region66: #{_lambda_.1} parent=1 // pred_check
      _
    $region67: #{_lambda_.1} parent=1 // pred_check_branch
      %134 = sbr.rel (0) target = $region69
    $region68: #{_lambda_.1} parent=1 // pred_region
      %135 = dma.done [#allocation7], 16
    $region69: #{_lambda_.1} parent=1 // pred_fallthru
      _
    // Predicated region
    $region70: #{_lambda_.1} parent=1 // pred_check
      _
    $region71: #{_lambda_.1} parent=1 // pred_check_branch
      %137 = sbr.rel (0) target = $region73
    $region72: #{_lambda_.1} parent=1 // pred_region
      %138 = dma.done [#allocation7], 16
    $region73: #{_lambda_.1} parent=1 // pred_fallthru
      _
    // Predicated region
    $region74: #{_lambda_.1} parent=1 // pred_check
      _
    $region75: #{_lambda_.1} parent=1 // pred_check_branch
      %140 = sbr.rel (0) target = $region77
    $region76: #{_lambda_.1} parent=1 // pred_region
      %141 = dma.done [#allocation10], 16
    $region77: #{_lambda_.1} parent=1 // pred_fallthru
      _
    // Predicated region
    $region78: #{_lambda_.1} parent=1 // pred_check
      _
    $region79: #{_lambda_.1} parent=1 // pred_check_branch
      %143 = sbr.rel (0) target = $region81
    $region80: #{_lambda_.1} parent=1 // pred_region
      %144 = dma.done [#allocation10], 16
    $region81: #{_lambda_.1} parent=1 // pred_fallthru
      _
    // Predicated region
    $region82: #{_lambda_.1} parent=1 // pred_check
      _
    $region83: #{_lambda_.1} parent=1 // pred_check_branch
      %146 = sbr.rel (0) target = $region85
    $region84: #{_lambda_.1} parent=1 // pred_region
      %147 = dma.done [#allocation13], 16
    $region85: #{_lambda_.1} parent=1 // pred_fallthru
      _
    // Predicated region
    $region86: #{_lambda_.1} parent=1 // pred_check
      _
    $region87: #{_lambda_.1} parent=1 // pred_check_branch
      %149 = sbr.rel (0) target = $region89
    $region88: #{_lambda_.1} parent=1 // pred_region
      %150 = dma.done [#allocation13], 16
    $region89: #{_lambda_.1} parent=1 // pred_fallthru
      _
    // Predicated region
    $region90: #{_lambda_.1} parent=1 // pred_check
      _
    $region91: #{_lambda_.1} parent=1 // pred_check_branch
      %152 = sbr.rel (0) target = $region93
    $region92: #{_lambda_.1} parent=1 // pred_region
      %153 = dma.done [#allocation16], 16
    $region93: #{_lambda_.1} parent=1 // pred_fallthru
      _
    // Predicated region
    $region94: #{_lambda_.1} parent=1 // pred_check
      _
    $region95: #{_lambda_.1} parent=1 // pred_check_branch
      %155 = sbr.rel (0) target = $region97
    $region96: #{_lambda_.1} parent=1 // pred_region
      %156 = dma.done [#allocation16], 16
    $region97: #{_lambda_.1} parent=1 // pred_fallthru
      _
    %158 = vst [vmem:[#allocation2] sm:$0xff] 0.0
    %159 = vst [vmem:[#allocation2 + $0x8] sm:$0xff] 0.0
    %160 = vst [vmem:[#allocation2 + $0x10] sm:$0xff] 0.0
    %161 = vst [vmem:[#allocation2 + $0x18] sm:$0xff] 0.0
    %162 = vst [vmem:[#allocation2 + $0x20] sm:$0xff] 0.0
    %163 = vst [vmem:[#allocation2 + $0x28] sm:$0xff] 0.0
    %164 = vst [vmem:[#allocation2 + $0x30] sm:$0xff] 0.0
    %165 = vst [vmem:[#allocation2 + $0x38] sm:$0xff] 0.0
    %166 = vst [vmem:[#allocation2 + $0x40] sm:$0xff] 0.0
    %167 = vst [vmem:[#allocation2 + $0x48] sm:$0xff] 0.0
    %168 = vst [vmem:[#allocation2 + $0x50] sm:$0xff] 0.0
    %169 = vst [vmem:[#allocation2 + $0x58] sm:$0xff] 0.0
    %170 = vst [vmem:[#allocation2 + $0x60] sm:$0xff] 0.0
    %171 = vst [vmem:[#allocation2 + $0x68] sm:$0xff] 0.0
    %172 = vst [vmem:[#allocation2 + $0x70] sm:$0xff] 0.0
    %173 = vst [vmem:[#allocation2 + $0x78] sm:$0xff] 0.0
    %174 = vst [vmem:[#allocation2 + $0x80] sm:$0xff] 0.0
    %175 = vst [vmem:[#allocation2 + $0x88] sm:$0xff] 0.0
    %176 = vst [vmem:[#allocation2 + $0x90] sm:$0xff] 0.0
    %177 = vst [vmem:[#allocation2 + $0x98] sm:$0xff] 0.0
    %178 = vst [vmem:[#allocation2 + $0xa0] sm:$0xff] 0.0
    %179 = vst [vmem:[#allocation2 + $0xa8] sm:$0xff] 0.0
    %180 = vst [vmem:[#allocation2 + $0xb0] sm:$0xff] 0.0
    %181 = vst [vmem:[#allocation2 + $0xb8] sm:$0xff] 0.0
    %182 = vst [vmem:[#allocation2 + $0xc0] sm:$0xff] 0.0
    %183 = vst [vmem:[#allocation2 + $0xc8] sm:$0xff] 0.0
    %184 = vst [vmem:[#allocation2 + $0xd0] sm:$0xff] 0.0
    %185 = vst [vmem:[#allocation2 + $0xd8] sm:$0xff] 0.0
    %186 = vst [vmem:[#allocation2 + $0xe0] sm:$0xff] 0.0
    %187 = vst [vmem:[#allocation2 + $0xe8] sm:$0xff] 0.0
    %188 = vst [vmem:[#allocation2 + $0xf0] sm:$0xff] 0.0
    %189 = vst [vmem:[#allocation2 + $0xf8] sm:$0xff] 0.0
    %190 = vst [vmem:[#allocation2 + $0x100] sm:$0xff] 0.0
    %191 = vst [vmem:[#allocation2 + $0x108] sm:$0xff] 0.0
    %192 = vst [vmem:[#allocation2 + $0x110] sm:$0xff] 0.0
    %193 = vst [vmem:[#allocation2 + $0x118] sm:$0xff] 0.0
    %v194 = vld [vmem:[%s0] sm:$0xff]
    %v195 = vld [vmem:[%s0 + $0x8] sm:$0xff]
    %v196 = vld [vmem:[%s0 + $0x10] sm:$0xff]
    %v197 = vld [vmem:[%s0 + $0x18] sm:$0xff]
    %v198 = vld [vmem:[%s0 + $0x20] sm:$0xff]
    %v199 = vld [vmem:[%s0 + $0x28] sm:$0xff]
    %v200 = vld [vmem:[%s0 + $0x30] sm:$0xff]
    %v201 = vld [vmem:[%s0 + $0x38] sm:$0xff]
    %v202 = vld [vmem:[%s0 + $0x40] sm:$0xff]
    %v203 = vld [vmem:[%s0 + $0x48] sm:$0xff]
    %v204 = vld [vmem:[%s0 + $0x50] sm:$0xff]
    %v205 = vld [vmem:[%s0 + $0x58] sm:$0xff]
    %v206 = vld [vmem:[%s0 + $0x60] sm:$0xff]
    %v207 = vld [vmem:[%s0 + $0x68] sm:$0xff]
    %v208 = vld [vmem:[%s0 + $0x70] sm:$0xff]
    %v209 = vld [vmem:[%s0 + $0x78] sm:$0xff]
    %vm210 = vcmask 7168
    %211 = vst.msk [vmem:[#allocation2 + $0x8] sm:$0xff] %vm210, %v194
    %212 = vst.msk [vmem:[#allocation2 + $0x10] sm:$0xff] %vm210, %v195
    %213 = vst.msk [vmem:[#allocation2 + $0x18] sm:$0xff] %vm210, %v196
    %214 = vst.msk [vmem:[#allocation2 + $0x20] sm:$0xff] %vm210, %v197
    %215 = vst.msk [vmem:[#allocation2 + $0x28] sm:$0xff] %vm210, %v198
    %216 = vst.msk [vmem:[#allocation2 + $0x30] sm:$0xff] %vm210, %v199
    %217 = vst.msk [vmem:[#allocation2 + $0x38] sm:$0xff] %vm210, %v200
    %218 = vst.msk [vmem:[#allocation2 + $0x40] sm:$0xff] %vm210, %v201
    %219 = vst.msk [vmem:[#allocation2 + $0x48] sm:$0xff] %vm210, %v202
    %220 = vst.msk [vmem:[#allocation2 + $0x50] sm:$0xff] %vm210, %v203
    %221 = vst.msk [vmem:[#allocation2 + $0x58] sm:$0xff] %vm210, %v204
    %222 = vst.msk [vmem:[#allocation2 + $0x60] sm:$0xff] %vm210, %v205
    %223 = vst.msk [vmem:[#allocation2 + $0x68] sm:$0xff] %vm210, %v206
    %224 = vst.msk [vmem:[#allocation2 + $0x70] sm:$0xff] %vm210, %v207
    %225 = vst.msk [vmem:[#allocation2 + $0x78] sm:$0xff] %vm210, %v208
    %226 = vst.msk [vmem:[#allocation2 + $0x80] sm:$0xff] %vm210, %v209
    %s227 = scalar_lea.vmem %s0, 128
    %v228 = vld [vmem:[%s227] sm:$0xff]
    %v229 = vld [vmem:[%s227 + $0x8] sm:$0xff]
    %v230 = vld [vmem:[%s227 + $0x10] sm:$0xff]
    %v231 = vld [vmem:[%s227 + $0x18] sm:$0xff]
    %v232 = vld [vmem:[%s227 + $0x20] sm:$0xff]
    %v233 = vld [vmem:[%s227 + $0x28] sm:$0xff]
    %v234 = vld [vmem:[%s227 + $0x30] sm:$0xff]
    %v235 = vld [vmem:[%s227 + $0x38] sm:$0xff]
    %v236 = vld [vmem:[%s227 + $0x40] sm:$0xff]
    %v237 = vld [vmem:[%s227 + $0x48] sm:$0xff]
    %v238 = vld [vmem:[%s227 + $0x50] sm:$0xff]
    %v239 = vld [vmem:[%s227 + $0x58] sm:$0xff]
    %v240 = vld [vmem:[%s227 + $0x60] sm:$0xff]
    %v241 = vld [vmem:[%s227 + $0x68] sm:$0xff]
    %v242 = vld [vmem:[%s227 + $0x70] sm:$0xff]
    %v243 = vld [vmem:[%s227 + $0x78] sm:$0xff]
    %244 = vst.msk [vmem:[#allocation2 + $0x98] sm:$0xff] %vm210, %v228
    %245 = vst.msk [vmem:[#allocation2 + $0xa0] sm:$0xff] %vm210, %v229
    %246 = vst.msk [vmem:[#allocation2 + $0xa8] sm:$0xff] %vm210, %v230
    %247 = vst.msk [vmem:[#allocation2 + $0xb0] sm:$0xff] %vm210, %v231
    %248 = vst.msk [vmem:[#allocation2 + $0xb8] sm:$0xff] %vm210, %v232
    %249 = vst.msk [vmem:[#allocation2 + $0xc0] sm:$0xff] %vm210, %v233
    %250 = vst.msk [vmem:[#allocation2 + $0xc8] sm:$0xff] %vm210, %v234
    %251 = vst.msk [vmem:[#allocation2 + $0xd0] sm:$0xff] %vm210, %v235
    %252 = vst.msk [vmem:[#allocation2 + $0xd8] sm:$0xff] %vm210, %v236
    %253 = vst.msk [vmem:[#allocation2 + $0xe0] sm:$0xff] %vm210, %v237
    %254 = vst.msk [vmem:[#allocation2 + $0xe8] sm:$0xff] %vm210, %v238
    %255 = vst.msk [vmem:[#allocation2 + $0xf0] sm:$0xff] %vm210, %v239
    %256 = vst.msk [vmem:[#allocation2 + $0xf8] sm:$0xff] %vm210, %v240
    %257 = vst.msk [vmem:[#allocation2 + $0x100] sm:$0xff] %vm210, %v241
    %258 = vst.msk [vmem:[#allocation2 + $0x108] sm:$0xff] %vm210, %v242
    %259 = vst.msk [vmem:[#allocation2 + $0x110] sm:$0xff] %vm210, %v243
    %v260 = vld [vmem:[%s1] sm:$0xf]
    %s261 = scalar_lea.vmem [#allocation2], 7
    %v262 = vld [vmem:[%s261] ss:$2 sm:$0xff]
    %s263 = scalar_lea.vmem [#allocation2], 23
    %v264 = vld [vmem:[%s263] ss:$2 sm:$0xff]
    %s265 = scalar_lea.vmem [#allocation2], 39
    %v266 = vld [vmem:[%s265] ss:$2 sm:$0xff]
    %s267 = scalar_lea.vmem [#allocation2], 55
    %v268 = vld [vmem:[%s267] ss:$2 sm:$0xff]
    %s269 = scalar_lea.vmem [#allocation2], 71
    %v270 = vld [vmem:[%s269] ss:$2 sm:$0xff]
    %s271 = scalar_lea.vmem [#allocation2], 87
    %v272 = vld [vmem:[%s271] ss:$2 sm:$0xff]
    %s273 = scalar_lea.vmem [#allocation2], 103
    %v274 = vld [vmem:[%s273] ss:$2 sm:$0xff]
    %s275 = scalar_lea.vmem [#allocation2], 119
    %v276 = vld [vmem:[%s275] ss:$2 sm:$0xff]
    %s277 = scalar_lea.vmem [#allocation2], 151
    %v278 = vld [vmem:[%s277] ss:$2 sm:$0xff]
    %s279 = scalar_lea.vmem [#allocation2], 167
    %v280 = vld [vmem:[%s279] ss:$2 sm:$0xff]
    %s281 = scalar_lea.vmem [#allocation2], 183
    %v282 = vld [vmem:[%s281] ss:$2 sm:$0xff]
    %s283 = scalar_lea.vmem [#allocation2], 199
    %v284 = vld [vmem:[%s283] ss:$2 sm:$0xff]
    %s285 = scalar_lea.vmem [#allocation2], 215
    %v286 = vld [vmem:[%s285] ss:$2 sm:$0xff]
    %s287 = scalar_lea.vmem [#allocation2], 231
    %v288 = vld [vmem:[%s287] ss:$2 sm:$0xff]
    %s289 = scalar_lea.vmem [#allocation2], 247
    %v290 = vld [vmem:[%s289] ss:$2 sm:$0xff]
    %s291 = scalar_lea.vmem [#allocation2], 263
    %v292 = vld [vmem:[%s291] ss:$2 sm:$0xff]
    %s293 = scalar_lea.vmem [#allocation2], 8
    %v294 = vld [vmem:[%s293] ss:$2 sm:$0xff]
    %s295 = scalar_lea.vmem [#allocation2], 24
    %v296 = vld [vmem:[%s295] ss:$2 sm:$0xff]
    %s297 = scalar_lea.vmem [#allocation2], 40
    %v298 = vld [vmem:[%s297] ss:$2 sm:$0xff]
    %s299 = scalar_lea.vmem [#allocation2], 56
    %v300 = vld [vmem:[%s299] ss:$2 sm:$0xff]
    %s301 = scalar_lea.vmem [#allocation2], 72
    %v302 = vld [vmem:[%s301] ss:$2 sm:$0xff]
    %s303 = scalar_lea.vmem [#allocation2], 88
    %v304 = vld [vmem:[%s303] ss:$2 sm:$0xff]
    %s305 = scalar_lea.vmem [#allocation2], 104
    %v306 = vld [vmem:[%s305] ss:$2 sm:$0xff]
    %s307 = scalar_lea.vmem [#allocation2], 120
    %v308 = vld [vmem:[%s307] ss:$2 sm:$0xff]
    %s309 = scalar_lea.vmem [#allocation2], 152
    %v310 = vld [vmem:[%s309] ss:$2 sm:$0xff]
    %s311 = scalar_lea.vmem [#allocation2], 168
    %v312 = vld [vmem:[%s311] ss:$2 sm:$0xff]
    %s313 = scalar_lea.vmem [#allocation2], 184
    %v314 = vld [vmem:[%s313] ss:$2 sm:$0xff]
    %s315 = scalar_lea.vmem [#allocation2], 200
    %v316 = vld [vmem:[%s315] ss:$2 sm:$0xff]
    %s317 = scalar_lea.vmem [#allocation2], 216
    %v318 = vld [vmem:[%s317] ss:$2 sm:$0xff]
    %s319 = scalar_lea.vmem [#allocation2], 232
    %v320 = vld [vmem:[%s319] ss:$2 sm:$0xff]
    %s321 = scalar_lea.vmem [#allocation2], 248
    %v322 = vld [vmem:[%s321] ss:$2 sm:$0xff]
    %s323 = scalar_lea.vmem [#allocation2], 264
    %v324 = vld [vmem:[%s323] ss:$2 sm:$0xff]
    %s325 = scalar_lea.vmem [#allocation2], 9
    %v326 = vld [vmem:[%s325] ss:$2 sm:$0xff]
    %s327 = scalar_lea.vmem [#allocation2], 25
    %v328 = vld [vmem:[%s327] ss:$2 sm:$0xff]
    %s329 = scalar_lea.vmem [#allocation2], 41
    %v330 = vld [vmem:[%s329] ss:$2 sm:$0xff]
    %s331 = scalar_lea.vmem [#allocation2], 57
    %v332 = vld [vmem:[%s331] ss:$2 sm:$0xff]
    %s333 = scalar_lea.vmem [#allocation2], 73
    %v334 = vld [vmem:[%s333] ss:$2 sm:$0xff]
    %s335 = scalar_lea.vmem [#allocation2], 89
    %v336 = vld [vmem:[%s335] ss:$2 sm:$0xff]
    %s337 = scalar_lea.vmem [#allocation2], 105
    %v338 = vld [vmem:[%s337] ss:$2 sm:$0xff]
    %s339 = scalar_lea.vmem [#allocation2], 121
    %v340 = vld [vmem:[%s339] ss:$2 sm:$0xff]
    %s341 = scalar_lea.vmem [#allocation2], 153
    %v342 = vld [vmem:[%s341] ss:$2 sm:$0xff]
    %s343 = scalar_lea.vmem [#allocation2], 169
    %v344 = vld [vmem:[%s343] ss:$2 sm:$0xff]
    %s345 = scalar_lea.vmem [#allocation2], 185
    %v346 = vld [vmem:[%s345] ss:$2 sm:$0xff]
    %s347 = scalar_lea.vmem [#allocation2], 201
    %v348 = vld [vmem:[%s347] ss:$2 sm:$0xff]
    %s349 = scalar_lea.vmem [#allocation2], 217
    %v350 = vld [vmem:[%s349] ss:$2 sm:$0xff]
    %s351 = scalar_lea.vmem [#allocation2], 233
    %v352 = vld [vmem:[%s351] ss:$2 sm:$0xff]
    %s353 = scalar_lea.vmem [#allocation2], 249
    %v354 = vld [vmem:[%s353] ss:$2 sm:$0xff]
    %s355 = scalar_lea.vmem [#allocation2], 265
    %v356 = vld [vmem:[%s355] ss:$2 sm:$0xff]
    %s357 = scalar_lea.vmem [#allocation2], 10
    %v358 = vld [vmem:[%s357] ss:$2 sm:$0xff]
    %s359 = scalar_lea.vmem [#allocation2], 26
    %v360 = vld [vmem:[%s359] ss:$2 sm:$0xff]
    %s361 = scalar_lea.vmem [#allocation2], 42
    %v362 = vld [vmem:[%s361] ss:$2 sm:$0xff]
    %s363 = scalar_lea.vmem [#allocation2], 58
    %v364 = vld [vmem:[%s363] ss:$2 sm:$0xff]
    %s365 = scalar_lea.vmem [#allocation2], 74
    %v366 = vld [vmem:[%s365] ss:$2 sm:$0xff]
    %s367 = scalar_lea.vmem [#allocation2], 90
    %v368 = vld [vmem:[%s367] ss:$2 sm:$0xff]
    %s369 = scalar_lea.vmem [#allocation2], 106
    %v370 = vld [vmem:[%s369] ss:$2 sm:$0xff]
    %s371 = scalar_lea.vmem [#allocation2], 122
    %v372 = vld [vmem:[%s371] ss:$2 sm:$0xff]
    %s373 = scalar_lea.vmem [#allocation2], 154
    %v374 = vld [vmem:[%s373] ss:$2 sm:$0xff]
    %s375 = scalar_lea.vmem [#allocation2], 170
    %v376 = vld [vmem:[%s375] ss:$2 sm:$0xff]
    %s377 = scalar_lea.vmem [#allocation2], 186
    %v378 = vld [vmem:[%s377] ss:$2 sm:$0xff]
    %s379 = scalar_lea.vmem [#allocation2], 202
    %v380 = vld [vmem:[%s379] ss:$2 sm:$0xff]
    %s381 = scalar_lea.vmem [#allocation2], 218
    %v382 = vld [vmem:[%s381] ss:$2 sm:$0xff]
    %s383 = scalar_lea.vmem [#allocation2], 234
    %v384 = vld [vmem:[%s383] ss:$2 sm:$0xff]
    %s385 = scalar_lea.vmem [#allocation2], 250
    %v386 = vld [vmem:[%s385] ss:$2 sm:$0xff]
    %s387 = scalar_lea.vmem [#allocation2], 266
    %v388 = vld [vmem:[%s387] ss:$2 sm:$0xff]
    %390 = vset.pattern.permute.xlu0 0
    %391 = vperm.xlu0 %390, %v262
    %v392 = vpop.permute.xlu0 %391
    %395 = vset.pattern.permute.xlu0 0
    %396 = vperm.xlu0 %395, %v264
    %v397 = vpop.permute.xlu0 %396
    %400 = vset.pattern.permute.xlu0 0
    %401 = vperm.xlu0 %400, %v266
    %v402 = vpop.permute.xlu0 %401
    %405 = vset.pattern.permute.xlu0 0
    %406 = vperm.xlu0 %405, %v268
    %v407 = vpop.permute.xlu0 %406
    %410 = vset.pattern.permute.xlu0 0
    %411 = vperm.xlu0 %410, %v270
    %v412 = vpop.permute.xlu0 %411
    %415 = vset.pattern.permute.xlu0 0
    %416 = vperm.xlu0 %415, %v272
    %v417 = vpop.permute.xlu0 %416
    %420 = vset.pattern.permute.xlu0 0
    %421 = vperm.xlu0 %420, %v274
    %v422 = vpop.permute.xlu0 %421
    %425 = vset.pattern.permute.xlu0 0
    %426 = vperm.xlu0 %425, %v276
    %v427 = vpop.permute.xlu0 %426
    %430 = vset.pattern.permute.xlu0 0
    %431 = vperm.xlu0 %430, %v278
    %v432 = vpop.permute.xlu0 %431
    %435 = vset.pattern.permute.xlu0 0
    %436 = vperm.xlu0 %435, %v280
    %v437 = vpop.permute.xlu0 %436
    %440 = vset.pattern.permute.xlu0 0
    %441 = vperm.xlu0 %440, %v282
    %v442 = vpop.permute.xlu0 %441
    %445 = vset.pattern.permute.xlu0 0
    %446 = vperm.xlu0 %445, %v284
    %v447 = vpop.permute.xlu0 %446
    %450 = vset.pattern.permute.xlu0 0
    %451 = vperm.xlu0 %450, %v286
    %v452 = vpop.permute.xlu0 %451
    %455 = vset.pattern.permute.xlu0 0
    %456 = vperm.xlu0 %455, %v288
    %v457 = vpop.permute.xlu0 %456
    %460 = vset.pattern.permute.xlu0 0
    %461 = vperm.xlu0 %460, %v290
    %v462 = vpop.permute.xlu0 %461
    %465 = vset.pattern.permute.xlu0 0
    %466 = vperm.xlu0 %465, %v292
    %v467 = vpop.permute.xlu0 %466
    %v469 = vlaneseq
    %v470 = vshrl.u32 %v469, 7
    %v471 = vsub.s32 0, %v470
    %v472 = vrot.slane %v260, %v471
    %v473 = vmul.f32 %v392, %v472
    %v474 = vmul.f32 %v397, %v472
    %v475 = vmul.f32 %v402, %v472
    %v476 = vmul.f32 %v407, %v472
    %v477 = vmul.f32 %v412, %v472
    %v478 = vmul.f32 %v417, %v472
    %v479 = vmul.f32 %v422, %v472
    %v480 = vmul.f32 %v427, %v472
    %v481 = vmul.f32 %v432, %v472
    %v482 = vmul.f32 %v437, %v472
    %v483 = vmul.f32 %v442, %v472
    %v484 = vmul.f32 %v447, %v472
    %v485 = vmul.f32 %v452, %v472
    %v486 = vmul.f32 %v457, %v472
    %v487 = vmul.f32 %v462, %v472
    %v488 = vmul.f32 %v467, %v472
    %490 = vset.pattern.permute.xlu0 0
    %491 = vperm.xlu0 %490, %v294
    %v492 = vpop.permute.xlu0 %491
    %495 = vset.pattern.permute.xlu0 0
    %496 = vperm.xlu0 %495, %v296
    %v497 = vpop.permute.xlu0 %496
    %500 = vset.pattern.permute.xlu0 0
    %501 = vperm.xlu0 %500, %v298
    %v502 = vpop.permute.xlu0 %501
    %505 = vset.pattern.permute.xlu0 0
    %506 = vperm.xlu0 %505, %v300
    %v507 = vpop.permute.xlu0 %506
    %510 = vset.pattern.permute.xlu0 0
    %511 = vperm.xlu0 %510, %v302
    %v512 = vpop.permute.xlu0 %511
    %515 = vset.pattern.permute.xlu0 0
    %516 = vperm.xlu0 %515, %v304
    %v517 = vpop.permute.xlu0 %516
    %520 = vset.pattern.permute.xlu0 0
    %521 = vperm.xlu0 %520, %v306
    %v522 = vpop.permute.xlu0 %521
    %525 = vset.pattern.permute.xlu0 0
    %526 = vperm.xlu0 %525, %v308
    %v527 = vpop.permute.xlu0 %526
    %530 = vset.pattern.permute.xlu0 0
    %531 = vperm.xlu0 %530, %v310
    %v532 = vpop.permute.xlu0 %531
    %535 = vset.pattern.permute.xlu0 0
    %536 = vperm.xlu0 %535, %v312
    %v537 = vpop.permute.xlu0 %536
    %540 = vset.pattern.permute.xlu0 0
    %541 = vperm.xlu0 %540, %v314
    %v542 = vpop.permute.xlu0 %541
    %545 = vset.pattern.permute.xlu0 0
    %546 = vperm.xlu0 %545, %v316
    %v547 = vpop.permute.xlu0 %546
    %550 = vset.pattern.permute.xlu0 0
    %551 = vperm.xlu0 %550, %v318
    %v552 = vpop.permute.xlu0 %551
    %555 = vset.pattern.permute.xlu0 0
    %556 = vperm.xlu0 %555, %v320
    %v557 = vpop.permute.xlu0 %556
    %560 = vset.pattern.permute.xlu0 0
    %561 = vperm.xlu0 %560, %v322
    %v562 = vpop.permute.xlu0 %561
    %565 = vset.pattern.permute.xlu0 0
    %566 = vperm.xlu0 %565, %v324
    %v567 = vpop.permute.xlu0 %566
    %v569 = vlaneseq
    %v570 = vshrl.u32 %v569, 7
    %v571 = vsub.s32 1, %v570
    %v572 = vrot.slane %v260, %v571
    %v573 = vmul.f32 %v492, %v572
    %v574 = vmul.f32 %v497, %v572
    %v575 = vmul.f32 %v502, %v572
    %v576 = vmul.f32 %v507, %v572
    %v577 = vmul.f32 %v512, %v572
    %v578 = vmul.f32 %v517, %v572
    %v579 = vmul.f32 %v522, %v572
    %v580 = vmul.f32 %v527, %v572
    %v581 = vmul.f32 %v532, %v572
    %v582 = vmul.f32 %v537, %v572
    %v583 = vmul.f32 %v542, %v572
    %v584 = vmul.f32 %v547, %v572
    %v585 = vmul.f32 %v552, %v572
    %v586 = vmul.f32 %v557, %v572
    %v587 = vmul.f32 %v562, %v572
    %v588 = vmul.f32 %v567, %v572
    %v589 = vadd.f32 %v473, %v573
    %v590 = vadd.f32 %v474, %v574
    %v591 = vadd.f32 %v475, %v575
    %v592 = vadd.f32 %v476, %v576
    %v593 = vadd.f32 %v477, %v577
    %v594 = vadd.f32 %v478, %v578
    %v595 = vadd.f32 %v479, %v579
    %v596 = vadd.f32 %v480, %v580
    %v597 = vadd.f32 %v481, %v581
    %v598 = vadd.f32 %v482, %v582
    %v599 = vadd.f32 %v483, %v583
    %v600 = vadd.f32 %v484, %v584
    %v601 = vadd.f32 %v485, %v585
    %v602 = vadd.f32 %v486, %v586
    %v603 = vadd.f32 %v487, %v587
    %v604 = vadd.f32 %v488, %v588
    %606 = vset.pattern.permute.xlu0 0
    %607 = vperm.xlu0 %606, %v326
    %v608 = vpop.permute.xlu0 %607
    %611 = vset.pattern.permute.xlu0 0
    %612 = vperm.xlu0 %611, %v328
    %v613 = vpop.permute.xlu0 %612
    %616 = vset.pattern.permute.xlu0 0
    %617 = vperm.xlu0 %616, %v330
    %v618 = vpop.permute.xlu0 %617
    %621 = vset.pattern.permute.xlu0 0
    %622 = vperm.xlu0 %621, %v332
    %v623 = vpop.permute.xlu0 %622
    %626 = vset.pattern.permute.xlu0 0
    %627 = vperm.xlu0 %626, %v334
    %v628 = vpop.permute.xlu0 %627
    %631 = vset.pattern.permute.xlu0 0
    %632 = vperm.xlu0 %631, %v336
    %v633 = vpop.permute.xlu0 %632
    %636 = vset.pattern.permute.xlu0 0
    %637 = vperm.xlu0 %636, %v338
    %v638 = vpop.permute.xlu0 %637
    %641 = vset.pattern.permute.xlu0 0
    %642 = vperm.xlu0 %641, %v340
    %v643 = vpop.permute.xlu0 %642
    %646 = vset.pattern.permute.xlu0 0
    %647 = vperm.xlu0 %646, %v342
    %v648 = vpop.permute.xlu0 %647
    %651 = vset.pattern.permute.xlu0 0
    %652 = vperm.xlu0 %651, %v344
    %v653 = vpop.permute.xlu0 %652
    %656 = vset.pattern.permute.xlu0 0
    %657 = vperm.xlu0 %656, %v346
    %v658 = vpop.permute.xlu0 %657
    %661 = vset.pattern.permute.xlu0 0
    %662 = vperm.xlu0 %661, %v348
    %v663 = vpop.permute.xlu0 %662
    %666 = vset.pattern.permute.xlu0 0
    %667 = vperm.xlu0 %666, %v350
    %v668 = vpop.permute.xlu0 %667
    %671 = vset.pattern.permute.xlu0 0
    %672 = vperm.xlu0 %671, %v352
    %v673 = vpop.permute.xlu0 %672
    %676 = vset.pattern.permute.xlu0 0
    %677 = vperm.xlu0 %676, %v354
    %v678 = vpop.permute.xlu0 %677
    %681 = vset.pattern.permute.xlu0 0
    %682 = vperm.xlu0 %681, %v356
    %v683 = vpop.permute.xlu0 %682
    %v685 = vlaneseq
    %v686 = vshrl.u32 %v685, 7
    %v687 = vsub.s32 2, %v686
    %v688 = vrot.slane %v260, %v687
    %v689 = vmul.f32 %v608, %v688
    %v690 = vmul.f32 %v613, %v688
    %v691 = vmul.f32 %v618, %v688
    %v692 = vmul.f32 %v623, %v688
    %v693 = vmul.f32 %v628, %v688
    %v694 = vmul.f32 %v633, %v688
    %v695 = vmul.f32 %v638, %v688
    %v696 = vmul.f32 %v643, %v688
    %v697 = vmul.f32 %v648, %v688
    %v698 = vmul.f32 %v653, %v688
    %v699 = vmul.f32 %v658, %v688
    %v700 = vmul.f32 %v663, %v688
    %v701 = vmul.f32 %v668, %v688
    %v702 = vmul.f32 %v673, %v688
    %v703 = vmul.f32 %v678, %v688
    %v704 = vmul.f32 %v683, %v688
    %v705 = vadd.f32 %v589, %v689
    %v706 = vadd.f32 %v590, %v690
    %v707 = vadd.f32 %v591, %v691
    %v708 = vadd.f32 %v592, %v692
    %v709 = vadd.f32 %v593, %v693
    %v710 = vadd.f32 %v594, %v694
    %v711 = vadd.f32 %v595, %v695
    %v712 = vadd.f32 %v596, %v696
    %v713 = vadd.f32 %v597, %v697
    %v714 = vadd.f32 %v598, %v698
    %v715 = vadd.f32 %v599, %v699
    %v716 = vadd.f32 %v600, %v700
    %v717 = vadd.f32 %v601, %v701
    %v718 = vadd.f32 %v602, %v702
    %v719 = vadd.f32 %v603, %v703
    %v720 = vadd.f32 %v604, %v704
    %722 = vset.pattern.permute.xlu0 0
    %723 = vperm.xlu0 %722, %v358
    %v724 = vpop.permute.xlu0 %723
    %727 = vset.pattern.permute.xlu0 0
    %728 = vperm.xlu0 %727, %v360
    %v729 = vpop.permute.xlu0 %728
    %732 = vset.pattern.permute.xlu0 0
    %733 = vperm.xlu0 %732, %v362
    %v734 = vpop.permute.xlu0 %733
    %737 = vset.pattern.permute.xlu0 0
    %738 = vperm.xlu0 %737, %v364
    %v739 = vpop.permute.xlu0 %738
    %742 = vset.pattern.permute.xlu0 0
    %743 = vperm.xlu0 %742, %v366
    %v744 = vpop.permute.xlu0 %743
    %747 = vset.pattern.permute.xlu0 0
    %748 = vperm.xlu0 %747, %v368
    %v749 = vpop.permute.xlu0 %748
    %752 = vset.pattern.permute.xlu0 0
    %753 = vperm.xlu0 %752, %v370
    %v754 = vpop.permute.xlu0 %753
    %757 = vset.pattern.permute.xlu0 0
    %758 = vperm.xlu0 %757, %v372
    %v759 = vpop.permute.xlu0 %758
    %762 = vset.pattern.permute.xlu0 0
    %763 = vperm.xlu0 %762, %v374
    %v764 = vpop.permute.xlu0 %763
    %767 = vset.pattern.permute.xlu0 0
    %768 = vperm.xlu0 %767, %v376
    %v769 = vpop.permute.xlu0 %768
    %772 = vset.pattern.permute.xlu0 0
    %773 = vperm.xlu0 %772, %v378
    %v774 = vpop.permute.xlu0 %773
    %777 = vset.pattern.permute.xlu0 0
    %778 = vperm.xlu0 %777, %v380
    %v779 = vpop.permute.xlu0 %778
    %782 = vset.pattern.permute.xlu0 0
    %783 = vperm.xlu0 %782, %v382
    %v784 = vpop.permute.xlu0 %783
    %787 = vset.pattern.permute.xlu0 0
    %788 = vperm.xlu0 %787, %v384
    %v789 = vpop.permute.xlu0 %788
    %792 = vset.pattern.permute.xlu0 0
    %793 = vperm.xlu0 %792, %v386
    %v794 = vpop.permute.xlu0 %793
    %797 = vset.pattern.permute.xlu0 0
    %798 = vperm.xlu0 %797, %v388
    %v799 = vpop.permute.xlu0 %798
    %v801 = vlaneseq
    %v802 = vshrl.u32 %v801, 7
    %v803 = vsub.s32 3, %v802
    %v804 = vrot.slane %v260, %v803
    %v805 = vmul.f32 %v724, %v804
    %v806 = vmul.f32 %v729, %v804
    %v807 = vmul.f32 %v734, %v804
    %v808 = vmul.f32 %v739, %v804
    %v809 = vmul.f32 %v744, %v804
    %v810 = vmul.f32 %v749, %v804
    %v811 = vmul.f32 %v754, %v804
    %v812 = vmul.f32 %v759, %v804
    %v813 = vmul.f32 %v764, %v804
    %v814 = vmul.f32 %v769, %v804
    %v815 = vmul.f32 %v774, %v804
    %v816 = vmul.f32 %v779, %v804
    %v817 = vmul.f32 %v784, %v804
    %v818 = vmul.f32 %v789, %v804
    %v819 = vmul.f32 %v794, %v804
    %v820 = vmul.f32 %v799, %v804
    %v821 = vadd.f32 %v705, %v805
    %v822 = vadd.f32 %v706, %v806
    %v823 = vadd.f32 %v707, %v807
    %v824 = vadd.f32 %v708, %v808
    %v825 = vadd.f32 %v709, %v809
    %v826 = vadd.f32 %v710, %v810
    %v827 = vadd.f32 %v711, %v811
    %v828 = vadd.f32 %v712, %v812
    %v829 = vadd.f32 %v713, %v813
    %v830 = vadd.f32 %v714, %v814
    %v831 = vadd.f32 %v715, %v815
    %v832 = vadd.f32 %v716, %v816
    %v833 = vadd.f32 %v717, %v817
    %v834 = vadd.f32 %v718, %v818
    %v835 = vadd.f32 %v719, %v819
    %v836 = vadd.f32 %v720, %v820
    %v837 = vmul.f32 %v821, 0.2
    %v838 = vmul.f32 %v822, 0.2
    %v839 = vmul.f32 %v823, 0.2
    %v840 = vmul.f32 %v824, 0.2
    %v841 = vmul.f32 %v825, 0.2
    %v842 = vmul.f32 %v826, 0.2
    %v843 = vmul.f32 %v827, 0.2
    %v844 = vmul.f32 %v828, 0.2
    %v845 = vmul.f32 %v829, 0.2
    %v846 = vmul.f32 %v830, 0.2
    %v847 = vmul.f32 %v831, 0.2
    %v848 = vmul.f32 %v832, 0.2
    %v849 = vmul.f32 %v833, 0.2
    %v850 = vmul.f32 %v834, 0.2
    %v851 = vmul.f32 %v835, 0.2
    %v852 = vmul.f32 %v836, 0.2
    %v853 = vmax.f32 %v821, %v837
    %v854 = vmax.f32 %v822, %v838
    %v855 = vmax.f32 %v823, %v839
    %v856 = vmax.f32 %v824, %v840
    %v857 = vmax.f32 %v825, %v841
    %v858 = vmax.f32 %v826, %v842
    %v859 = vmax.f32 %v827, %v843
    %v860 = vmax.f32 %v828, %v844
    %v861 = vmax.f32 %v829, %v845
    %v862 = vmax.f32 %v830, %v846
    %v863 = vmax.f32 %v831, %v847
    %v864 = vmax.f32 %v832, %v848
    %v865 = vmax.f32 %v833, %v849
    %v866 = vmax.f32 %v834, %v850
    %v867 = vmax.f32 %v835, %v851
    %v868 = vmax.f32 %v836, %v852
    %vm869 = vcmask 64512
    %870 = vst.msk [vmem:[#allocation2 + $0x8] sm:$0xff] %vm869, %v853
    %871 = vst.msk [vmem:[#allocation2 + $0x10] sm:$0xff] %vm869, %v854
    %872 = vst.msk [vmem:[#allocation2 + $0x18] sm:$0xff] %vm869, %v855
    %873 = vst.msk [vmem:[#allocation2 + $0x20] sm:$0xff] %vm869, %v856
    %874 = vst.msk [vmem:[#allocation2 + $0x28] sm:$0xff] %vm869, %v857
    %875 = vst.msk [vmem:[#allocation2 + $0x30] sm:$0xff] %vm869, %v858
    %876 = vst.msk [vmem:[#allocation2 + $0x38] sm:$0xff] %vm869, %v859
    %877 = vst.msk [vmem:[#allocation2 + $0x40] sm:$0xff] %vm869, %v860
    %878 = vst [vmem:[#allocation2 + $0x48] sm:$0xff] 0.0
    %879 = vst.msk [vmem:[#allocation2 + $0x98] sm:$0xff] %vm869, %v861
    %880 = vst.msk [vmem:[#allocation2 + $0xa0] sm:$0xff] %vm869, %v862
    %881 = vst.msk [vmem:[#allocation2 + $0xa8] sm:$0xff] %vm869, %v863
    %882 = vst.msk [vmem:[#allocation2 + $0xb0] sm:$0xff] %vm869, %v864
    %883 = vst.msk [vmem:[#allocation2 + $0xb8] sm:$0xff] %vm869, %v865
    %884 = vst.msk [vmem:[#allocation2 + $0xc0] sm:$0xff] %vm869, %v866
    %885 = vst.msk [vmem:[#allocation2 + $0xc8] sm:$0xff] %vm869, %v867
    %886 = vst.msk [vmem:[#allocation2 + $0xd0] sm:$0xff] %vm869, %v868
    %887 = vst [vmem:[#allocation2 + $0xd8] sm:$0xff] 0.0
    %v888 = vld [vmem:[#allocation3] sm:$0xf]
    %v889 = vld [vmem:[#allocation3 + $0x4] sm:$0xf]
    %v890 = vld [vmem:[#allocation3 + $0x8] sm:$0xf]
    %v891 = vld [vmem:[#allocation3 + $0xc] sm:$0xf]
    %v892 = vld [vmem:[%s261] ss:$2 sm:$0xff]
    %v893 = vld [vmem:[%s263] ss:$2 sm:$0xff]
    %v894 = vld [vmem:[%s265] ss:$2 sm:$0xff]
    %v895 = vld [vmem:[%s267] ss:$2 sm:$0xff]
    %v896 = vld [vmem:[%s277] ss:$2 sm:$0xff]
    %v897 = vld [vmem:[%s279] ss:$2 sm:$0xff]
    %v898 = vld [vmem:[%s281] ss:$2 sm:$0xff]
    %v899 = vld [vmem:[%s283] ss:$2 sm:$0xff]
    %v900 = vld [vmem:[%s293] ss:$2 sm:$0xff]
    %v901 = vld [vmem:[%s295] ss:$2 sm:$0xff]
    %v902 = vld [vmem:[%s297] ss:$2 sm:$0xff]
    %v903 = vld [vmem:[%s299] ss:$2 sm:$0xff]
    %v904 = vld [vmem:[%s309] ss:$2 sm:$0xff]
    %v905 = vld [vmem:[%s311] ss:$2 sm:$0xff]
    %v906 = vld [vmem:[%s313] ss:$2 sm:$0xff]
    %v907 = vld [vmem:[%s315] ss:$2 sm:$0xff]
    %v908 = vld [vmem:[%s325] ss:$2 sm:$0xff]
    %v909 = vld [vmem:[%s327] ss:$2 sm:$0xff]
    %v910 = vld [vmem:[%s329] ss:$2 sm:$0xff]
    %v911 = vld [vmem:[%s331] ss:$2 sm:$0xff]
    %v912 = vld [vmem:[%s341] ss:$2 sm:$0xff]
    %v913 = vld [vmem:[%s343] ss:$2 sm:$0xff]
    %v914 = vld [vmem:[%s345] ss:$2 sm:$0xff]
    %v915 = vld [vmem:[%s347] ss:$2 sm:$0xff]
    %v916 = vld [vmem:[%s357] ss:$2 sm:$0xff]
    %v917 = vld [vmem:[%s359] ss:$2 sm:$0xff]
    %v918 = vld [vmem:[%s361] ss:$2 sm:$0xff]
    %v919 = vld [vmem:[%s363] ss:$2 sm:$0xff]
    %v920 = vld [vmem:[%s373] ss:$2 sm:$0xff]
    %v921 = vld [vmem:[%s375] ss:$2 sm:$0xff]
    %v922 = vld [vmem:[%s377] ss:$2 sm:$0xff]
    %v923 = vld [vmem:[%s379] ss:$2 sm:$0xff]
    %v924 = vpack.c.bf16 %v893, %v892
    %v925 = vpack.c.bf16 %v895, %v894
    %v926 = vpack.c.bf16 %v897, %v896
    %v927 = vpack.c.bf16 %v899, %v898
    %v928 = vpack.c.bf16 %v901, %v900
    %v929 = vpack.c.bf16 %v903, %v902
    %v930 = vpack.c.bf16 %v905, %v904
    %v931 = vpack.c.bf16 %v907, %v906
    %v933 = vsel %vm869, %v928, 0
    %v936 = vsel %vm869, %v929, 0
    %v939 = vsel %vm869, %v930, 0
    %v942 = vsel %vm869, %v931, 0
    %vm944 = vcmask 1043456
    %v946 = vsel %vm944, %v889, 0
    %948 = vmatprep.subr.bf16.mxu0 0
    %949 = vmatpush1.bf16.msra.mxu0 %v946
    %950 = vmatprep.subr.bf16.mxu0 0
    %951 = vmatpush1.bf16.msra.mxu0 0
    %952 = vmatprep.subr.bf16.mxu0 0
    %953 = vmatpush1.bf16.msra.mxu0 0
    %954 = vmatprep.subr.bf16.mxu0 0
    %955 = vmatpush1.bf16.msra.mxu0 0
    %956 = vmatprep.subr.bf16.mxu0 0
    %957 = vmatpush1.bf16.msra.mxu0 0
    %958 = vmatprep.subr.bf16.mxu0 0
    %959 = vmatpush1.bf16.msra.mxu0 0
    %960 = vmatprep.subr.bf16.mxu0 0
    %961 = vmatpush1.bf16.msra.mxu0 0
    %962 = vmatprep.subr.bf16.mxu0 0
    %963 = vmatpush1.bf16.msra.mxu0 0
    %964 = vmatprep.subr.bf16.mxu0 0
    %965 = vmatpush1.bf16.msra.mxu0 0
    %966 = vmatprep.subr.bf16.mxu0 0
    %967 = vmatpush1.bf16.msra.mxu0 0
    %968 = vmatprep.subr.bf16.mxu0 0
    %969 = vmatpush1.bf16.msra.mxu0 0
    %970 = vmatprep.subr.bf16.mxu0 0
    %971 = vmatpush1.bf16.msra.mxu0 0
    %972 = vmatprep.subr.bf16.mxu0 0
    %973 = vmatpush1.bf16.msra.mxu0 0
    %974 = vmatprep.subr.bf16.mxu0 0
    %975 = vmatpush1.bf16.msra.mxu0 0
    %976 = vmatprep.subr.bf16.mxu0 0
    %977 = vmatpush1.bf16.msra.mxu0 0
    %978 = vmatprep.subr.bf16.mxu0 0
    %979 = vmatpush1.bf16.msra.mxu0 0
    %980 = vmatprep.mubr.bf16.mxu0 0
    %981 = vmatmul.mubr.bf16.gmra.mrb[0].mxu0 %v933
    %v982 = vpop.f32.mrb[0].mxu0
    %v983 = vadd.f32 0.0, %v982
    %v984 = vpop.f32.mrb[0].mxu0
    %v985 = vpop.f32.mrb[0].mxu0
    %v986 = vadd.f32 0.0, %v985
    %v987 = vpop.f32.mrb[0].mxu0
    %988 = vmatprep.mubr.bf16.mxu0 0
    %989 = vmatmul.mubr.bf16.gmra.mrb[0].mxu0 %v936
    %v990 = vpop.f32.mrb[0].mxu0
    %v991 = vadd.f32 0.0, %v990
    %v992 = vpop.f32.mrb[0].mxu0
    %v993 = vpop.f32.mrb[0].mxu0
    %v994 = vadd.f32 0.0, %v993
    %v995 = vpop.f32.mrb[0].mxu0
    %996 = vmatprep.mubr.bf16.mxu0 0
    %997 = vmatmul.mubr.bf16.gmra.mrb[0].mxu0 %v939
    %v998 = vpop.f32.mrb[0].mxu0
    %v999 = vadd.f32 0.0, %v998
    %v1000 = vpop.f32.mrb[0].mxu0
    %v1001 = vpop.f32.mrb[0].mxu0
    %v1002 = vadd.f32 0.0, %v1001
    %v1003 = vpop.f32.mrb[0].mxu0
    %1004 = vmatprep.mubr.bf16.mxu0 0
    %1005 = vmatmul.mubr.bf16.gmra.mrb[0].mxu0 %v942
    %v1006 = vpop.f32.mrb[0].mxu0
    %v1007 = vadd.f32 0.0, %v1006
    %v1008 = vpop.f32.mrb[0].mxu0
    %v1009 = vpop.f32.mrb[0].mxu0
    %v1010 = vadd.f32 0.0, %v1009
    %v1011 = vpop.f32.mrb[0].mxu0
    %1012 = vdwg.mxu0
    %v1014 = vsel %vm869, %v924, 0
    %v1017 = vsel %vm869, %v925, 0
    %v1020 = vsel %vm869, %v926, 0
    %v1023 = vsel %vm869, %v927, 0
    %v1026 = vsel %vm944, %v888, 0
    %1028 = vmatprep.subr.bf16.mxu0 0
    %1029 = vmatpush1.bf16.msra.mxu0 %v1026
    %1030 = vmatprep.subr.bf16.mxu0 0
    %1031 = vmatpush1.bf16.msra.mxu0 0
    %1032 = vmatprep.subr.bf16.mxu0 0
    %1033 = vmatpush1.bf16.msra.mxu0 0
    %1034 = vmatprep.subr.bf16.mxu0 0
    %1035 = vmatpush1.bf16.msra.mxu0 0
    %1036 = vmatprep.subr.bf16.mxu0 0
    %1037 = vmatpush1.bf16.msra.mxu0 0
    %1038 = vmatprep.subr.bf16.mxu0 0
    %1039 = vmatpush1.bf16.msra.mxu0 0
    %1040 = vmatprep.subr.bf16.mxu0 0
    %1041 = vmatpush1.bf16.msra.mxu0 0
    %1042 = vmatprep.subr.bf16.mxu0 0
    %1043 = vmatpush1.bf16.msra.mxu0 0
    %1044 = vmatprep.subr.bf16.mxu0 0
    %1045 = vmatpush1.bf16.msra.mxu0 0
    %1046 = vmatprep.subr.bf16.mxu0 0
    %1047 = vmatpush1.bf16.msra.mxu0 0
    %1048 = vmatprep.subr.bf16.mxu0 0
    %1049 = vmatpush1.bf16.msra.mxu0 0
    %1050 = vmatprep.subr.bf16.mxu0 0
    %1051 = vmatpush1.bf16.msra.mxu0 0
    %1052 = vmatprep.subr.bf16.mxu0 0
    %1053 = vmatpush1.bf16.msra.mxu0 0
    %1054 = vmatprep.subr.bf16.mxu0 0
    %1055 = vmatpush1.bf16.msra.mxu0 0
    %1056 = vmatprep.subr.bf16.mxu0 0
    %1057 = vmatpush1.bf16.msra.mxu0 0
    %1058 = vmatprep.subr.bf16.mxu0 0
    %1059 = vmatpush1.bf16.msra.mxu0 0
    %1060 = vmatprep.mubr.bf16.mxu0 0
    %1061 = vmatmul.mubr.bf16.gmra.mrb[0].mxu0 %v1014
    %v1062 = vpop.f32.mrb[0].mxu0
    %v1063 = vadd.f32 %v983, %v1062
    %v1064 = vpop.f32.mrb[0].mxu0
    %v1065 = vpop.f32.mrb[0].mxu0
    %v1066 = vadd.f32 %v986, %v1065
    %v1067 = vpop.f32.mrb[0].mxu0
    %1068 = vmatprep.mubr.bf16.mxu0 0
    %1069 = vmatmul.mubr.bf16.gmra.mrb[0].mxu0 %v1017
    %v1070 = vpop.f32.mrb[0].mxu0
    %v1071 = vadd.f32 %v991, %v1070
    %v1072 = vpop.f32.mrb[0].mxu0
    %v1073 = vpop.f32.mrb[0].mxu0
    %v1074 = vadd.f32 %v994, %v1073
    %v1075 = vpop.f32.mrb[0].mxu0
    %1076 = vmatprep.mubr.bf16.mxu0 0
    %1077 = vmatmul.mubr.bf16.gmra.mrb[0].mxu0 %v1020
    %v1078 = vpop.f32.mrb[0].mxu0
    %v1079 = vadd.f32 %v999, %v1078
    %v1080 = vpop.f32.mrb[0].mxu0
    %v1081 = vpop.f32.mrb[0].mxu0
    %v1082 = vadd.f32 %v1002, %v1081
    %v1083 = vpop.f32.mrb[0].mxu0
    %1084 = vmatprep.mubr.bf16.mxu0 0
    %1085 = vmatmul.mubr.bf16.gmra.mrb[0].mxu0 %v1023
    %v1086 = vpop.f32.mrb[0].mxu0
    %v1087 = vadd.f32 %v1007, %v1086
    %v1088 = vpop.f32.mrb[0].mxu0
    %v1089 = vpop.f32.mrb[0].mxu0
    %v1090 = vadd.f32 %v1010, %v1089
    %v1091 = vpop.f32.mrb[0].mxu0
    %1092 = vdwg.mxu0
    %v1093 = vpack.c.bf16 %v909, %v908
    %v1094 = vpack.c.bf16 %v911, %v910
    %v1095 = vpack.c.bf16 %v913, %v912
    %v1096 = vpack.c.bf16 %v915, %v914
    %v1098 = vsel %vm869, %v1093, 0
    %v1101 = vsel %vm869, %v1094, 0
    %v1104 = vsel %vm869, %v1095, 0
    %v1107 = vsel %vm869, %v1096, 0
    %v1110 = vsel %vm944, %v890, 0
    %1112 = vmatprep.subr.bf16.mxu0 0
    %1113 = vmatpush1.bf16.msra.mxu0 %v1110
    %1114 = vmatprep.subr.bf16.mxu0 0
    %1115 = vmatpush1.bf16.msra.mxu0 0
    %1116 = vmatprep.subr.bf16.mxu0 0
    %1117 = vmatpush1.bf16.msra.mxu0 0
    %1118 = vmatprep.subr.bf16.mxu0 0
    %1119 = vmatpush1.bf16.msra.mxu0 0
    %1120 = vmatprep.subr.bf16.mxu0 0
    %1121 = vmatpush1.bf16.msra.mxu0 0
    %1122 = vmatprep.subr.bf16.mxu0 0
    %1123 = vmatpush1.bf16.msra.mxu0 0
    %1124 = vmatprep.subr.bf16.mxu0 0
    %1125 = vmatpush1.bf16.msra.mxu0 0
    %1126 = vmatprep.subr.bf16.mxu0 0
    %1127 = vmatpush1.bf16.msra.mxu0 0
    %1128 = vmatprep.subr.bf16.mxu0 0
    %1129 = vmatpush1.bf16.msra.mxu0 0
    %1130 = vmatprep.subr.bf16.mxu0 0
    %1131 = vmatpush1.bf16.msra.mxu0 0
    %1132 = vmatprep.subr.bf16.mxu0 0
    %1133 = vmatpush1.bf16.msra.mxu0 0
    %1134 = vmatprep.subr.bf16.mxu0 0
    %1135 = vmatpush1.bf16.msra.mxu0 0
    %1136 = vmatprep.subr.bf16.mxu0 0
    %1137 = vmatpush1.bf16.msra.mxu0 0
    %1138 = vmatprep.subr.bf16.mxu0 0
    %1139 = vmatpush1.bf16.msra.mxu0 0
    %1140 = vmatprep.subr.bf16.mxu0 0
    %1141 = vmatpush1.bf16.msra.mxu0 0
    %1142 = vmatprep.subr.bf16.mxu0 0
    %1143 = vmatpush1.bf16.msra.mxu0 0
    %1144 = vmatprep.mubr.bf16.mxu0 0
    %1145 = vmatmul.mubr.bf16.gmra.mrb[0].mxu0 %v1098
    %v1146 = vpop.f32.mrb[0].mxu0
    %v1147 = vadd.f32 0.0, %v1146
    %v1148 = vpop.f32.mrb[0].mxu0
    %v1149 = vpop.f32.mrb[0].mxu0
    %v1150 = vadd.f32 0.0, %v1149
    %v1151 = vpop.f32.mrb[0].mxu0
    %1152 = vmatprep.mubr.bf16.mxu0 0
    %1153 = vmatmul.mubr.bf16.gmra.mrb[0].mxu0 %v1101
    %v1154 = vpop.f32.mrb[0].mxu0
    %v1155 = vadd.f32 0.0, %v1154
    %v1156 = vpop.f32.mrb[0].mxu0
    %v1157 = vpop.f32.mrb[0].mxu0
    %v1158 = vadd.f32 0.0, %v1157
    %v1159 = vpop.f32.mrb[0].mxu0
    %1160 = vmatprep.mubr.bf16.mxu0 0
    %1161 = vmatmul.mubr.bf16.gmra.mrb[0].mxu0 %v1104
    %v1162 = vpop.f32.mrb[0].mxu0
    %v1163 = vadd.f32 0.0, %v1162
    %v1164 = vpop.f32.mrb[0].mxu0
    %v1165 = vpop.f32.mrb[0].mxu0
    %v1166 = vadd.f32 0.0, %v1165
    %v1167 = vpop.f32.mrb[0].mxu0
    %1168 = vmatprep.mubr.bf16.mxu0 0
    %1169 = vmatmul.mubr.bf16.gmra.mrb[0].mxu0 %v1107
    %v1170 = vpop.f32.mrb[0].mxu0
    %v1171 = vadd.f32 0.0, %v1170
    %v1172 = vpop.f32.mrb[0].mxu0
    %v1173 = vpop.f32.mrb[0].mxu0
    %v1174 = vadd.f32 0.0, %v1173
    %v1175 = vpop.f32.mrb[0].mxu0
    %1176 = vdwg.mxu0
    %v1177 = vadd.f32 %v1063, %v1147
    %v1178 = vadd.f32 %v1066, %v1150
    %v1179 = vadd.f32 %v1071, %v1155
    %v1180 = vadd.f32 %v1074, %v1158
    %v1181 = vadd.f32 %v1079, %v1163
    %v1182 = vadd.f32 %v1082, %v1166
    %v1183 = vadd.f32 %v1087, %v1171
    %v1184 = vadd.f32 %v1090, %v1174
    %v1185 = vpack.c.bf16 %v917, %v916
    %v1186 = vpack.c.bf16 %v919, %v918
    %v1187 = vpack.c.bf16 %v921, %v920
    %v1188 = vpack.c.bf16 %v923, %v922
    %v1190 = vsel %vm869, %v1185, 0
    %v1193 = vsel %vm869, %v1186, 0
    %v1196 = vsel %vm869, %v1187, 0
    %v1199 = vsel %vm869, %v1188, 0
    %v1202 = vsel %vm944, %v891, 0
    %1204 = vmatprep.subr.bf16.mxu0 0
    %1205 = vmatpush1.bf16.msra.mxu0 %v1202
    %1206 = vmatprep.subr.bf16.mxu0 0
    %1207 = vmatpush1.bf16.msra.mxu0 0
    %1208 = vmatprep.subr.bf16.mxu0 0
    %1209 = vmatpush1.bf16.msra.mxu0 0
    %1210 = vmatprep.subr.bf16.mxu0 0
    %1211 = vmatpush1.bf16.msra.mxu0 0
    %1212 = vmatprep.subr.bf16.mxu0 0
    %1213 = vmatpush1.bf16.msra.mxu0 0
    %1214 = vmatprep.subr.bf16.mxu0 0
    %1215 = vmatpush1.bf16.msra.mxu0 0
    %1216 = vmatprep.subr.bf16.mxu0 0
    %1217 = vmatpush1.bf16.msra.mxu0 0
    %1218 = vmatprep.subr.bf16.mxu0 0
    %1219 = vmatpush1.bf16.msra.mxu0 0
    %1220 = vmatprep.subr.bf16.mxu0 0
    %1221 = vmatpush1.bf16.msra.mxu0 0
    %1222 = vmatprep.subr.bf16.mxu0 0
    %1223 = vmatpush1.bf16.msra.mxu0 0
    %1224 = vmatprep.subr.bf16.mxu0 0
    %1225 = vmatpush1.bf16.msra.mxu0 0
    %1226 = vmatprep.subr.bf16.mxu0 0
    %1227 = vmatpush1.bf16.msra.mxu0 0
    %1228 = vmatprep.subr.bf16.mxu0 0
    %1229 = vmatpush1.bf16.msra.mxu0 0
    %1230 = vmatprep.subr.bf16.mxu0 0
    %1231 = vmatpush1.bf16.msra.mxu0 0
    %1232 = vmatprep.subr.bf16.mxu0 0
    %1233 = vmatpush1.bf16.msra.mxu0 0
    %1234 = vmatprep.subr.bf16.mxu0 0
    %1235 = vmatpush1.bf16.msra.mxu0 0
    %1236 = vmatprep.mubr.bf16.mxu0 0
    %1237 = vmatmul.mubr.bf16.gmra.mrb[0].mxu0 %v1190
    %v1238 = vpop.f32.mrb[0].mxu0
    %v1239 = vadd.f32 0.0, %v1238
    %v1240 = vpop.f32.mrb[0].mxu0
    %v1241 = vpop.f32.mrb[0].mxu0
    %v1242 = vadd.f32 0.0, %v1241
    %v1243 = vpop.f32.mrb[0].mxu0
    %1244 = vmatprep.mubr.bf16.mxu0 0
    %1245 = vmatmul.mubr.bf16.gmra.mrb[0].mxu0 %v1193
    %v1246 = vpop.f32.mrb[0].mxu0
    %v1247 = vadd.f32 0.0, %v1246
    %v1248 = vpop.f32.mrb[0].mxu0
    %v1249 = vpop.f32.mrb[0].mxu0
    %v1250 = vadd.f32 0.0, %v1249
    %v1251 = vpop.f32.mrb[0].mxu0
    %1252 = vmatprep.mubr.bf16.mxu0 0
    %1253 = vmatmul.mubr.bf16.gmra.mrb[0].mxu0 %v1196
    %v1254 = vpop.f32.mrb[0].mxu0
    %v1255 = vadd.f32 0.0, %v1254
    %v1256 = vpop.f32.mrb[0].mxu0
    %v1257 = vpop.f32.mrb[0].mxu0
    %v1258 = vadd.f32 0.0, %v1257
    %v1259 = vpop.f32.mrb[0].mxu0
    %1260 = vmatprep.mubr.bf16.mxu0 0
    %1261 = vmatmul.mubr.bf16.gmra.mrb[0].mxu0 %v1199
    %v1262 = vpop.f32.mrb[0].mxu0
    %v1263 = vadd.f32 0.0, %v1262
    %v1264 = vpop.f32.mrb[0].mxu0
    %v1265 = vpop.f32.mrb[0].mxu0
    %v1266 = vadd.f32 0.0, %v1265
    %v1267 = vpop.f32.mrb[0].mxu0
    %1268 = vdwg.mxu0
    %v1269 = vadd.f32 %v1177, %v1239
    %v1270 = vadd.f32 %v1178, %v1242
    %v1271 = vadd.f32 %v1179, %v1247
    %v1272 = vadd.f32 %v1180, %v1250
    %v1273 = vadd.f32 %v1181, %v1255
    %v1274 = vadd.f32 %v1182, %v1258
    %v1275 = vadd.f32 %v1183, %v1263
    %v1276 = vadd.f32 %v1184, %v1266
    %vm1277 = vcmask 130048
    %v1278 = vsel %vm1277, %v1269, 0.0
    %v1279 = vsel %vm1277, %v1270, 0.0
    %v1280 = vadd.f32 %v1278, %v1279
    %v1281 = vsel %vm1277, %v1271, 0.0
    %v1282 = vadd.f32 %v1280, %v1281
    %v1283 = vsel %vm1277, %v1272, 0.0
    %v1284 = vadd.f32 %v1282, %v1283
    %v1285 = vsel %vm1277, %v1273, 0.0
    %v1286 = vadd.f32 %v1284, %v1285
    %v1287 = vsel %vm1277, %v1274, 0.0
    %v1288 = vadd.f32 %v1286, %v1287
    %v1289 = vsel %vm1277, %v1275, 0.0
    %v1290 = vadd.f32 %v1288, %v1289
    %v1291 = vsel %vm1277, %v1276, 0.0
    %v1292 = vadd.f32 %v1290, %v1291
    %v1293 = vrot.slane %v1292, 4
    %v1294 = vadd.f32 %v1292, %v1293
    %v1295 = vrot.slane %v1294, 2
    %v1296 = vadd.f32 %v1294, %v1295
    %v1297 = vrot.slane %v1296, 1
    %v1298 = vadd.f32 %v1296, %v1297
    %v1299 = vmul.f32 %v1298, 0.015625
    %v1300 = vsub.f32 %v1269, %v1299
    %v1301 = vsub.f32 %v1270, %v1299
    %v1302 = vsub.f32 %v1271, %v1299
    %v1303 = vsub.f32 %v1272, %v1299
    %v1304 = vsub.f32 %v1273, %v1299
    %v1305 = vsub.f32 %v1274, %v1299
    %v1306 = vsub.f32 %v1275, %v1299
    %v1307 = vsub.f32 %v1276, %v1299
    %v1308 = vmul.f32 %v1300, %v1300
    %v1309 = vmul.f32 %v1301, %v1301
    %v1310 = vmul.f32 %v1302, %v1302
    %v1311 = vmul.f32 %v1303, %v1303
    %v1312 = vmul.f32 %v1304, %v1304
    %v1313 = vmul.f32 %v1305, %v1305
    %v1314 = vmul.f32 %v1306, %v1306
    %v1315 = vmul.f32 %v1307, %v1307
    %v1316 = vsel %vm1277, %v1308, 0.0
    %v1317 = vsel %vm1277, %v1309, 0.0
    %v1318 = vadd.f32 %v1316, %v1317
    %v1319 = vsel %vm1277, %v1310, 0.0
    %v1320 = vadd.f32 %v1318, %v1319
    %v1321 = vsel %vm1277, %v1311, 0.0
    %v1322 = vadd.f32 %v1320, %v1321
    %v1323 = vsel %vm1277, %v1312, 0.0
    %v1324 = vadd.f32 %v1322, %v1323
    %v1325 = vsel %vm1277, %v1313, 0.0
    %v1326 = vadd.f32 %v1324, %v1325
    %v1327 = vsel %vm1277, %v1314, 0.0
    %v1328 = vadd.f32 %v1326, %v1327
    %v1329 = vsel %vm1277, %v1315, 0.0
    %v1330 = vadd.f32 %v1328, %v1329
    %v1331 = vrot.slane %v1330, 4
    %v1332 = vadd.f32 %v1330, %v1331
    %v1333 = vrot.slane %v1332, 2
    %v1334 = vadd.f32 %v1332, %v1333
    %v1335 = vrot.slane %v1334, 1
    %v1336 = vadd.f32 %v1334, %v1335
    %v1337 = vmul.f32 %v1336, 0.015625
    %v1338 = vadd.f32 %v1337, 1e-05
    %v1339 = vrsqrt.pop %v1338
    %v1340 = vld [vmem:[#allocation6] sm:$0x1]
    %v1341 = vmul.f32 %v1339, %v1340
    %v1342 = vld [vmem:[#allocation8] sm:$0x1]
    %v1343 = vmul.f32 %v1299, %v1341
    %v1344 = vsub.f32 %v1342, %v1343
    %v1345 = vlaneseq
    %v1346 = vshrl.u32 %v1345, 7
    %v1347 = vsub.s32 0, %v1346
    %v1348 = vrot.slane %v1341, %v1347
    %v1349 = vmul.f32 %v1269, %v1348
    %v1350 = vmul.f32 %v1270, %v1348
    %v1351 = vmul.f32 %v1271, %v1348
    %v1352 = vmul.f32 %v1272, %v1348
    %v1353 = vmul.f32 %v1273, %v1348
    %v1354 = vmul.f32 %v1274, %v1348
    %v1355 = vmul.f32 %v1275, %v1348
    %v1356 = vmul.f32 %v1276, %v1348
    %v1358 = vlaneseq
    %v1359 = vshrl.u32 %v1358, 7
    %v1360 = vsub.s32 0, %v1359
    %v1361 = vrot.slane %v1344, %v1360
    %v1363 = vadd.f32 %v1349, %v1361
    %v1364 = vadd.f32 %v1350, %v1361
    %v1365 = vadd.f32 %v1351, %v1361
    %v1366 = vadd.f32 %v1352, %v1361
    %v1367 = vadd.f32 %v1353, %v1361
    %v1368 = vadd.f32 %v1354, %v1361
    %v1369 = vadd.f32 %v1355, %v1361
    %v1370 = vadd.f32 %v1356, %v1361
    %v1371 = vmul.f32 %v1363, 0.2
    %v1372 = vmul.f32 %v1364, 0.2
    %v1373 = vmul.f32 %v1365, 0.2
    %v1374 = vmul.f32 %v1366, 0.2
    %v1375 = vmul.f32 %v1367, 0.2
    %v1376 = vmul.f32 %v1368, 0.2
    %v1377 = vmul.f32 %v1369, 0.2
    %v1378 = vmul.f32 %v1370, 0.2
    %v1379 = vmax.f32 %v1363, %v1371
    %v1380 = vmax.f32 %v1364, %v1372
    %v1381 = vmax.f32 %v1365, %v1373
    %v1382 = vmax.f32 %v1366, %v1374
    %v1383 = vmax.f32 %v1367, %v1375
    %v1384 = vmax.f32 %v1368, %v1376
    %v1385 = vmax.f32 %v1369, %v1377
    %v1386 = vmax.f32 %v1370, %v1378
    %1387 = vst.msk [vmem:[#allocation2 + $0x8] sm:$0xff] %vm1277, %v1379
    %1388 = vst.msk [vmem:[#allocation2 + $0x10] sm:$0xff] %vm1277, %v1380
    %1389 = vst.msk [vmem:[#allocation2 + $0x18] sm:$0xff] %vm1277, %v1381
    %1390 = vst.msk [vmem:[#allocation2 + $0x20] sm:$0xff] %vm1277, %v1382
    %1391 = vst [vmem:[#allocation2 + $0x28] sm:$0xff] 0.0
    %1392 = vst.msk [vmem:[#allocation2 + $0x98] sm:$0xff] %vm1277, %v1383
    %1393 = vst.msk [vmem:[#allocation2 + $0xa0] sm:$0xff] %vm1277, %v1384
    %1394 = vst.msk [vmem:[#allocation2 + $0xa8] sm:$0xff] %vm1277, %v1385
    %1395 = vst.msk [vmem:[#allocation2 + $0xb0] sm:$0xff] %vm1277, %v1386
    %1396 = vst [vmem:[#allocation2 + $0xb8] sm:$0xff] 0.0
    %v1397 = vld [vmem:[%s3] sm:$0xf]
    %v1398 = vld [vmem:[%s3 + $0x4] sm:$0xf]
    %v1399 = vld [vmem:[%s3 + $0x8] sm:$0xf]
    %v1400 = vld [vmem:[%s3 + $0xc] sm:$0xf]
    %v1401 = vld [vmem:[%s3 + $0x10] sm:$0xf]
    %v1402 = vld [vmem:[%s3 + $0x14] sm:$0xf]
    %v1403 = vld [vmem:[%s3 + $0x18] sm:$0xf]
    %v1404 = vld [vmem:[%s3 + $0x1c] sm:$0xf]
    %v1405 = vld [vmem:[%s261] ss:$2 sm:$0xff]
    %v1406 = vld [vmem:[%s263] ss:$2 sm:$0xff]
    %v1407 = vld [vmem:[%s277] ss:$2 sm:$0xff]
    %v1408 = vld [vmem:[%s279] ss:$2 sm:$0xff]
    %v1409 = vld [vmem:[%s293] ss:$2 sm:$0xff]
    %v1410 = vld [vmem:[%s295] ss:$2 sm:$0xff]
    %v1411 = vld [vmem:[%s309] ss:$2 sm:$0xff]
    %v1412 = vld [vmem:[%s311] ss:$2 sm:$0xff]
    %v1413 = vld [vmem:[%s325] ss:$2 sm:$0xff]
    %v1414 = vld [vmem:[%s327] ss:$2 sm:$0xff]
    %v1415 = vld [vmem:[%s341] ss:$2 sm:$0xff]
    %v1416 = vld [vmem:[%s343] ss:$2 sm:$0xff]
    %v1417 = vld [vmem:[%s357] ss:$2 sm:$0xff]
    %v1418 = vld [vmem:[%s359] ss:$2 sm:$0xff]
    %v1419 = vld [vmem:[%s373] ss:$2 sm:$0xff]
    %v1420 = vld [vmem:[%s375] ss:$2 sm:$0xff]
    %v1421 = vpack.c.bf16 %v1406, %v1405
    %v1422 = vpack.c.bf16 %v1408, %v1407
    %v1423 = vpack.c.bf16 %v1410, %v1409
    %v1424 = vpack.c.bf16 %v1412, %v1411
    %v1427 = vunpack.c.l.b16 %v1399
    %v1428 = vunpack.c.l.b16 %v1400
    %v1429 = vpack.c.b16 %v1428, %v1427
    %v1432 = vsel %vm1277, %v1423, 0
    %v1435 = vsel %vm1277, %v1424, 0
    %1437 = vmatprep.subr.bf16.mxu0 0
    %1438 = vmatpush1.bf16.msra.mxu0 %v1429
    %1439 = vmatprep.subr.bf16.mxu0 0
    %1440 = vmatpush1.bf16.msra.mxu0 0
    %1441 = vmatprep.subr.bf16.mxu0 0
    %1442 = vmatpush1.bf16.msra.mxu0 0
    %1443 = vmatprep.subr.bf16.mxu0 0
    %1444 = vmatpush1.bf16.msra.mxu0 0
    %1445 = vmatprep.subr.bf16.mxu0 0
    %1446 = vmatpush1.bf16.msra.mxu0 0
    %1447 = vmatprep.subr.bf16.mxu0 0
    %1448 = vmatpush1.bf16.msra.mxu0 0
    %1449 = vmatprep.subr.bf16.mxu0 0
    %1450 = vmatpush1.bf16.msra.mxu0 0
    %1451 = vmatprep.subr.bf16.mxu0 0
    %1452 = vmatpush1.bf16.msra.mxu0 0
    %1453 = vmatprep.subr.bf16.mxu0 0
    %1454 = vmatpush1.bf16.msra.mxu0 0
    %1455 = vmatprep.subr.bf16.mxu0 0
    %1456 = vmatpush1.bf16.msra.mxu0 0
    %1457 = vmatprep.subr.bf16.mxu0 0
    %1458 = vmatpush1.bf16.msra.mxu0 0
    %1459 = vmatprep.subr.bf16.mxu0 0
    %1460 = vmatpush1.bf16.msra.mxu0 0
    %1461 = vmatprep.subr.bf16.mxu0 0
    %1462 = vmatpush1.bf16.msra.mxu0 0
    %1463 = vmatprep.subr.bf16.mxu0 0
    %1464 = vmatpush1.bf16.msra.mxu0 0
    %1465 = vmatprep.subr.bf16.mxu0 0
    %1466 = vmatpush1.bf16.msra.mxu0 0
    %1467 = vmatprep.subr.bf16.mxu0 0
    %1468 = vmatpush1.bf16.msra.mxu0 0
    %1469 = vmatprep.mubr.bf16.mxu0 0
    %1470 = vmatmul.mubr.bf16.gmra.mrb[0].mxu0 %v1432
    %v1471 = vpop.f32.mrb[0].mxu0
    %v1472 = vadd.f32 0.0, %v1471
    %v1473 = vpop.f32.mrb[0].mxu0
    %v1474 = vpop.f32.mrb[0].mxu0
    %v1475 = vadd.f32 0.0, %v1474
    %v1476 = vpop.f32.mrb[0].mxu0
    %1477 = vmatprep.mubr.bf16.mxu0 0
    %1478 = vmatmul.mubr.bf16.gmra.mrb[0].mxu0 %v1435
    %v1479 = vpop.f32.mrb[0].mxu0
    %v1480 = vadd.f32 0.0, %v1479
    %v1481 = vpop.f32.mrb[0].mxu0
    %v1482 = vpop.f32.mrb[0].mxu0
    %v1483 = vadd.f32 0.0, %v1482
    %v1484 = vpop.f32.mrb[0].mxu0
    %1485 = vdwg.mxu0
    %v1488 = vunpack.c.l.b16 %v1397
    %v1489 = vunpack.c.l.b16 %v1398
    %v1490 = vpack.c.b16 %v1489, %v1488
    %v1493 = vsel %vm1277, %v1421, 0
    %v1496 = vsel %vm1277, %v1422, 0
    %1498 = vmatprep.subr.bf16.mxu0 0
    %1499 = vmatpush1.bf16.msra.mxu0 %v1490
    %1500 = vmatprep.subr.bf16.mxu0 0
    %1501 = vmatpush1.bf16.msra.mxu0 0
    %1502 = vmatprep.subr.bf16.mxu0 0
    %1503 = vmatpush1.bf16.msra.mxu0 0
    %1504 = vmatprep.subr.bf16.mxu0 0
    %1505 = vmatpush1.bf16.msra.mxu0 0
    %1506 = vmatprep.subr.bf16.mxu0 0
    %1507 = vmatpush1.bf16.msra.mxu0 0
    %1508 = vmatprep.subr.bf16.mxu0 0
    %1509 = vmatpush1.bf16.msra.mxu0 0
    %1510 = vmatprep.subr.bf16.mxu0 0
    %1511 = vmatpush1.bf16.msra.mxu0 0
    %1512 = vmatprep.subr.bf16.mxu0 0
    %1513 = vmatpush1.bf16.msra.mxu0 0
    %1514 = vmatprep.subr.bf16.mxu0 0
    %1515 = vmatpush1.bf16.msra.mxu0 0
    %1516 = vmatprep.subr.bf16.mxu0 0
    %1517 = vmatpush1.bf16.msra.mxu0 0
    %1518 = vmatprep.subr.bf16.mxu0 0
    %1519 = vmatpush1.bf16.msra.mxu0 0
    %1520 = vmatprep.subr.bf16.mxu0 0
    %1521 = vmatpush1.bf16.msra.mxu0 0
    %1522 = vmatprep.subr.bf16.mxu0 0
    %1523 = vmatpush1.bf16.msra.mxu0 0
    %1524 = vmatprep.subr.bf16.mxu0 0
    %1525 = vmatpush1.bf16.msra.mxu0 0
    %1526 = vmatprep.subr.bf16.mxu0 0
    %1527 = vmatpush1.bf16.msra.mxu0 0
    %1528 = vmatprep.subr.bf16.mxu0 0
    %1529 = vmatpush1.bf16.msra.mxu0 0
    %1530 = vmatprep.mubr.bf16.mxu0 0
    %1531 = vmatmul.mubr.bf16.gmra.mrb[0].mxu0 %v1493
    %v1532 = vpop.f32.mrb[0].mxu0
    %v1533 = vadd.f32 %v1472, %v1532
    %v1534 = vpop.f32.mrb[0].mxu0
    %v1535 = vpop.f32.mrb[0].mxu0
    %v1536 = vadd.f32 %v1475, %v1535
    %v1537 = vpop.f32.mrb[0].mxu0
    %1538 = vmatprep.mubr.bf16.mxu0 0
    %1539 = vmatmul.mubr.bf16.gmra.mrb[0].mxu0 %v1496
    %v1540 = vpop.f32.mrb[0].mxu0
    %v1541 = vadd.f32 %v1480, %v1540
    %v1542 = vpop.f32.mrb[0].mxu0
    %v1543 = vpop.f32.mrb[0].mxu0
    %v1544 = vadd.f32 %v1483, %v1543
    %v1545 = vpop.f32.mrb[0].mxu0
    %1546 = vdwg.mxu0
    %v1547 = vpack.c.bf16 %v1414, %v1413
    %v1548 = vpack.c.bf16 %v1416, %v1415
    %v1551 = vunpack.c.l.b16 %v1401
    %v1552 = vunpack.c.l.b16 %v1402
    %v1553 = vpack.c.b16 %v1552, %v1551
    %v1556 = vsel %vm1277, %v1547, 0
    %v1559 = vsel %vm1277, %v1548, 0
    %1561 = vmatprep.subr.bf16.mxu0 0
    %1562 = vmatpush1.bf16.msra.mxu0 %v1553
    %1563 = vmatprep.subr.bf16.mxu0 0
    %1564 = vmatpush1.bf16.msra.mxu0 0
    %1565 = vmatprep.subr.bf16.mxu0 0
    %1566 = vmatpush1.bf16.msra.mxu0 0
    %1567 = vmatprep.subr.bf16.mxu0 0
    %1568 = vmatpush1.bf16.msra.mxu0 0
    %1569 = vmatprep.subr.bf16.mxu0 0
    %1570 = vmatpush1.bf16.msra.mxu0 0
    %1571 = vmatprep.subr.bf16.mxu0 0
    %1572 = vmatpush1.bf16.msra.mxu0 0
    %1573 = vmatprep.subr.bf16.mxu0 0
    %1574 = vmatpush1.bf16.msra.mxu0 0
    %1575 = vmatprep.subr.bf16.mxu0 0
    %1576 = vmatpush1.bf16.msra.mxu0 0
    %1577 = vmatprep.subr.bf16.mxu0 0
    %1578 = vmatpush1.bf16.msra.mxu0 0
    %1579 = vmatprep.subr.bf16.mxu0 0
    %1580 = vmatpush1.bf16.msra.mxu0 0
    %1581 = vmatprep.subr.bf16.mxu0 0
    %1582 = vmatpush1.bf16.msra.mxu0 0
    %1583 = vmatprep.subr.bf16.mxu0 0
    %1584 = vmatpush1.bf16.msra.mxu0 0
    %1585 = vmatprep.subr.bf16.mxu0 0
    %1586 = vmatpush1.bf16.msra.mxu0 0
    %1587 = vmatprep.subr.bf16.mxu0 0
    %1588 = vmatpush1.bf16.msra.mxu0 0
    %1589 = vmatprep.subr.bf16.mxu0 0
    %1590 = vmatpush1.bf16.msra.mxu0 0
    %1591 = vmatprep.subr.bf16.mxu0 0
    %1592 = vmatpush1.bf16.msra.mxu0 0
    %1593 = vmatprep.mubr.bf16.mxu0 0
    %1594 = vmatmul.mubr.bf16.gmra.mrb[0].mxu0 %v1556
    %v1595 = vpop.f32.mrb[0].mxu0
    %v1596 = vadd.f32 0.0, %v1595
    %v1597 = vpop.f32.mrb[0].mxu0
    %v1598 = vpop.f32.mrb[0].mxu0
    %v1599 = vadd.f32 0.0, %v1598
    %v1600 = vpop.f32.mrb[0].mxu0
    %1601 = vmatprep.mubr.bf16.mxu0 0
    %1602 = vmatmul.mubr.bf16.gmra.mrb[0].mxu0 %v1559
    %v1603 = vpop.f32.mrb[0].mxu0
    %v1604 = vadd.f32 0.0, %v1603
    %v1605 = vpop.f32.mrb[0].mxu0
    %v1606 = vpop.f32.mrb[0].mxu0
    %v1607 = vadd.f32 0.0, %v1606
    %v1608 = vpop.f32.mrb[0].mxu0
    %1609 = vdwg.mxu0
    %v1610 = vadd.f32 %v1533, %v1596
    %v1611 = vadd.f32 %v1536, %v1599
    %v1612 = vadd.f32 %v1541, %v1604
    %v1613 = vadd.f32 %v1544, %v1607
    %v1614 = vpack.c.bf16 %v1418, %v1417
    %v1615 = vpack.c.bf16 %v1420, %v1419
    %v1618 = vunpack.c.l.b16 %v1403
    %v1619 = vunpack.c.l.b16 %v1404
    %v1620 = vpack.c.b16 %v1619, %v1618
    %v1623 = vsel %vm1277, %v1614, 0
    %v1626 = vsel %vm1277, %v1615, 0
    %1628 = vmatprep.subr.bf16.mxu0 0
    %1629 = vmatpush1.bf16.msra.mxu0 %v1620
    %1630 = vmatprep.subr.bf16.mxu0 0
    %1631 = vmatpush1.bf16.msra.mxu0 0
    %1632 = vmatprep.subr.bf16.mxu0 0
    %1633 = vmatpush1.bf16.msra.mxu0 0
    %1634 = vmatprep.subr.bf16.mxu0 0
    %1635 = vmatpush1.bf16.msra.mxu0 0
    %1636 = vmatprep.subr.bf16.mxu0 0
    %1637 = vmatpush1.bf16.msra.mxu0 0
    %1638 = vmatprep.subr.bf16.mxu0 0
    %1639 = vmatpush1.bf16.msra.mxu0 0
    %1640 = vmatprep.subr.bf16.mxu0 0
    %1641 = vmatpush1.bf16.msra.mxu0 0
    %1642 = vmatprep.subr.bf16.mxu0 0
    %1643 = vmatpush1.bf16.msra.mxu0 0
    %1644 = vmatprep.subr.bf16.mxu0 0
    %1645 = vmatpush1.bf16.msra.mxu0 0
    %1646 = vmatprep.subr.bf16.mxu0 0
    %1647 = vmatpush1.bf16.msra.mxu0 0
    %1648 = vmatprep.subr.bf16.mxu0 0
    %1649 = vmatpush1.bf16.msra.mxu0 0
    %1650 = vmatprep.subr.bf16.mxu0 0
    %1651 = vmatpush1.bf16.msra.mxu0 0
    %1652 = vmatprep.subr.bf16.mxu0 0
    %1653 = vmatpush1.bf16.msra.mxu0 0
    %1654 = vmatprep.subr.bf16.mxu0 0
    %1655 = vmatpush1.bf16.msra.mxu0 0
    %1656 = vmatprep.subr.bf16.mxu0 0
    %1657 = vmatpush1.bf16.msra.mxu0 0
    %1658 = vmatprep.subr.bf16.mxu0 0
    %1659 = vmatpush1.bf16.msra.mxu0 0
    %1660 = vmatprep.mubr.bf16.mxu0 0
    %1661 = vmatmul.mubr.bf16.gmra.mrb[0].mxu0 %v1623
    %v1662 = vpop.f32.mrb[0].mxu0
    %v1663 = vadd.f32 0.0, %v1662
    %v1664 = vpop.f32.mrb[0].mxu0
    %v1665 = vpop.f32.mrb[0].mxu0
    %v1666 = vadd.f32 0.0, %v1665
    %v1667 = vpop.f32.mrb[0].mxu0
    %1668 = vmatprep.mubr.bf16.mxu0 0
    %1669 = vmatmul.mubr.bf16.gmra.mrb[0].mxu0 %v1626
    %v1670 = vpop.f32.mrb[0].mxu0
    %v1671 = vadd.f32 0.0, %v1670
    %v1672 = vpop.f32.mrb[0].mxu0
    %v1673 = vpop.f32.mrb[0].mxu0
    %v1674 = vadd.f32 0.0, %v1673
    %v1675 = vpop.f32.mrb[0].mxu0
    %1676 = vdwg.mxu0
    %v1677 = vadd.f32 %v1610, %v1663
    %v1678 = vadd.f32 %v1611, %v1666
    %v1679 = vadd.f32 %v1612, %v1671
    %v1680 = vadd.f32 %v1613, %v1674
    %vm1681 = vcmask 261120
    %v1682 = vsel %vm1681, %v1677, 0.0
    %v1683 = vsel %vm1681, %v1678, 0.0
    %v1684 = vadd.f32 %v1682, %v1683
    %v1685 = vsel %vm1681, %v1679, 0.0
    %v1686 = vadd.f32 %v1684, %v1685
    %v1687 = vsel %vm1681, %v1680, 0.0
    %v1688 = vadd.f32 %v1686, %v1687
    %v1689 = vrot.slane %v1688, 4
    %v1690 = vadd.f32 %v1688, %v1689
    %v1691 = vrot.slane %v1690, 2
    %v1692 = vadd.f32 %v1690, %v1691
    %v1693 = vrot.slane %v1692, 1
    %v1694 = vadd.f32 %v1692, %v1693
    %v1695 = vmul.f32 %v1694, 0.03125
    %v1696 = vsub.f32 %v1677, %v1695
    %v1697 = vsub.f32 %v1678, %v1695
    %v1698 = vsub.f32 %v1679, %v1695
    %v1699 = vsub.f32 %v1680, %v1695
    %v1700 = vmul.f32 %v1696, %v1696
    %v1701 = vmul.f32 %v1697, %v1697
    %v1702 = vmul.f32 %v1698, %v1698
    %v1703 = vmul.f32 %v1699, %v1699
    %v1704 = vsel %vm1681, %v1700, 0.0
    %v1705 = vsel %vm1681, %v1701, 0.0
    %v1706 = vadd.f32 %v1704, %v1705
    %v1707 = vsel %vm1681, %v1702, 0.0
    %v1708 = vadd.f32 %v1706, %v1707
    %v1709 = vsel %vm1681, %v1703, 0.0
    %v1710 = vadd.f32 %v1708, %v1709
    %v1711 = vrot.slane %v1710, 4
    %v1712 = vadd.f32 %v1710, %v1711
    %v1713 = vrot.slane %v1712, 2
    %v1714 = vadd.f32 %v1712, %v1713
    %v1715 = vrot.slane %v1714, 1
    %v1716 = vadd.f32 %v1714, %v1715
    %v1717 = vmul.f32 %v1716, 0.03125
    %v1718 = vadd.f32 %v1717, 1e-05
    %v1719 = vrsqrt.pop %v1718
    %v1720 = vld [vmem:[#allocation9] sm:$0x1]
    %v1721 = vmul.f32 %v1719, %v1720
    %v1722 = vld [vmem:[#allocation11] sm:$0x1]
    %v1723 = vmul.f32 %v1695, %v1721
    %v1724 = vsub.f32 %v1722, %v1723
    %v1725 = vlaneseq
    %v1726 = vshrl.u32 %v1725, 7
    %v1727 = vsub.s32 0, %v1726
    %v1728 = vrot.slane %v1721, %v1727
    %v1729 = vmul.f32 %v1677, %v1728
    %v1730 = vmul.f32 %v1678, %v1728
    %v1731 = vmul.f32 %v1679, %v1728
    %v1732 = vmul.f32 %v1680, %v1728
    %v1734 = vlaneseq
    %v1735 = vshrl.u32 %v1734, 7
    %v1736 = vsub.s32 0, %v1735
    %v1737 = vrot.slane %v1724, %v1736
    %v1739 = vadd.f32 %v1729, %v1737
    %v1740 = vadd.f32 %v1730, %v1737
    %v1741 = vadd.f32 %v1731, %v1737
    %v1742 = vadd.f32 %v1732, %v1737
    %v1743 = vmul.f32 %v1739, 0.2
    %v1744 = vmul.f32 %v1740, 0.2
    %v1745 = vmul.f32 %v1741, 0.2
    %v1746 = vmul.f32 %v1742, 0.2
    %v1747 = vmax.f32 %v1739, %v1743
    %v1748 = vmax.f32 %v1740, %v1744
    %v1749 = vmax.f32 %v1741, %v1745
    %v1750 = vmax.f32 %v1742, %v1746
    %1751 = vst.msk [vmem:[#allocation2 + $0x8] sm:$0xff] %vm1681, %v1747
    %1752 = vst.msk [vmem:[#allocation2 + $0x10] sm:$0xff] %vm1681, %v1748
    %1753 = vst [vmem:[#allocation2 + $0x18] sm:$0xff] 0.0
    %1754 = vst.msk [vmem:[#allocation2 + $0x98] sm:$0xff] %vm1681, %v1749
    %1755 = vst.msk [vmem:[#allocation2 + $0xa0] sm:$0xff] %vm1681, %v1750
    %1756 = vst [vmem:[#allocation2 + $0xa8] sm:$0xff] 0.0
    %v1757 = vld [vmem:[%s4] sm:$0xf]
    %v1758 = vld [vmem:[%s4 + $0x4] sm:$0xf]
    %v1759 = vld [vmem:[%s4 + $0x8] sm:$0xf]
    %v1760 = vld [vmem:[%s4 + $0xc] sm:$0xf]
    %v1761 = vld [vmem:[%s4 + $0x10] sm:$0xf]
    %v1762 = vld [vmem:[%s4 + $0x14] sm:$0xf]
    %v1763 = vld [vmem:[%s4 + $0x18] sm:$0xf]
    %v1764 = vld [vmem:[%s4 + $0x1c] sm:$0xf]
    %v1765 = vld [vmem:[%s4 + $0x20] sm:$0xf]
    %v1766 = vld [vmem:[%s4 + $0x24] sm:$0xf]
    %v1767 = vld [vmem:[%s4 + $0x28] sm:$0xf]
    %v1768 = vld [vmem:[%s4 + $0x2c] sm:$0xf]
    %v1769 = vld [vmem:[%s4 + $0x30] sm:$0xf]
    %v1770 = vld [vmem:[%s4 + $0x34] sm:$0xf]
    %v1771 = vld [vmem:[%s4 + $0x38] sm:$0xf]
    %v1772 = vld [vmem:[%s4 + $0x3c] sm:$0xf]
    %v1773 = vld [vmem:[%s261] ss:$2 sm:$0xff]
    %v1774 = vld [vmem:[%s277] ss:$2 sm:$0xff]
    %v1775 = vld [vmem:[%s293] ss:$2 sm:$0xff]
    %v1776 = vld [vmem:[%s309] ss:$2 sm:$0xff]
    %v1777 = vld [vmem:[%s325] ss:$2 sm:$0xff]
    %v1778 = vld [vmem:[%s341] ss:$2 sm:$0xff]
    %v1779 = vld [vmem:[%s357] ss:$2 sm:$0xff]
    %v1780 = vld [vmem:[%s373] ss:$2 sm:$0xff]
    %v1781 = vpack.c.bf16 %v1774, %v1773
    %v1782 = vpack.c.bf16 %v1776, %v1775
    %v1787 = vunpack.c.l.b16 %v1761
    %v1788 = vunpack.c.l.b16 %v1762
    %v1789 = vunpack.c.l.b16 %v1763
    %v1790 = vunpack.c.l.b16 %v1764
    %v1791 = vpack.c.b16 %v1788, %v1787
    %v1792 = vpack.c.b16 %v1790, %v1789
    %v1796 = vsel %vm1681, %v1782, 0
    %1798 = vmatprep.subr.bf16.mxu0 0
    %1799 = vmatpush1.bf16.msra.mxu0 %v1791
    %1800 = vmatprep.subr.bf16.mxu0 0
    %1801 = vmatpush1.bf16.msra.mxu0 %v1792
    %1802 = vmatprep.subr.bf16.mxu0 0
    %1803 = vmatpush1.bf16.msra.mxu0 0
    %1804 = vmatprep.subr.bf16.mxu0 0
    %1805 = vmatpush1.bf16.msra.mxu0 0
    %1806 = vmatprep.subr.bf16.mxu0 0
    %1807 = vmatpush1.bf16.msra.mxu0 0
    %1808 = vmatprep.subr.bf16.mxu0 0
    %1809 = vmatpush1.bf16.msra.mxu0 0
    %1810 = vmatprep.subr.bf16.mxu0 0
    %1811 = vmatpush1.bf16.msra.mxu0 0
    %1812 = vmatprep.subr.bf16.mxu0 0
    %1813 = vmatpush1.bf16.msra.mxu0 0
    %1814 = vmatprep.subr.bf16.mxu0 0
    %1815 = vmatpush1.bf16.msra.mxu0 0
    %1816 = vmatprep.subr.bf16.mxu0 0
    %1817 = vmatpush1.bf16.msra.mxu0 0
    %1818 = vmatprep.subr.bf16.mxu0 0
    %1819 = vmatpush1.bf16.msra.mxu0 0
    %1820 = vmatprep.subr.bf16.mxu0 0
    %1821 = vmatpush1.bf16.msra.mxu0 0
    %1822 = vmatprep.subr.bf16.mxu0 0
    %1823 = vmatpush1.bf16.msra.mxu0 0
    %1824 = vmatprep.subr.bf16.mxu0 0
    %1825 = vmatpush1.bf16.msra.mxu0 0
    %1826 = vmatprep.subr.bf16.mxu0 0
    %1827 = vmatpush1.bf16.msra.mxu0 0
    %1828 = vmatprep.subr.bf16.mxu0 0
    %1829 = vmatpush1.bf16.msra.mxu0 0
    %1830 = vmatprep.mubr.bf16.mxu0 0
    %1831 = vmatmul.mubr.bf16.gmra.mrb[0].mxu0 %v1796
    %v1832 = vpop.f32.mrb[0].mxu0
    %v1833 = vadd.f32 0.0, %v1832
    %v1834 = vpop.f32.mrb[0].mxu0
    %v1835 = vpop.f32.mrb[0].mxu0
    %v1836 = vadd.f32 0.0, %v1835
    %v1837 = vpop.f32.mrb[0].mxu0
    %1838 = vdwg.mxu0
    %v1843 = vunpack.c.l.b16 %v1757
    %v1844 = vunpack.c.l.b16 %v1758
    %v1845 = vunpack.c.l.b16 %v1759
    %v1846 = vunpack.c.l.b16 %v1760
    %v1847 = vpack.c.b16 %v1844, %v1843
    %v1848 = vpack.c.b16 %v1846, %v1845
    %v1852 = vsel %vm1681, %v1781, 0
    %1854 = vmatprep.subr.bf16.mxu0 0
    %1855 = vmatpush1.bf16.msra.mxu0 %v1847
    %1856 = vmatprep.subr.bf16.mxu0 0
    %1857 = vmatpush1.bf16.msra.mxu0 %v1848
    %1858 = vmatprep.subr.bf16.mxu0 0
    %1859 = vmatpush1.bf16.msra.mxu0 0
    %1860 = vmatprep.subr.bf16.mxu0 0
    %1861 = vmatpush1.bf16.msra.mxu0 0
    %1862 = vmatprep.subr.bf16.mxu0 0
    %1863 = vmatpush1.bf16.msra.mxu0 0
    %1864 = vmatprep.subr.bf16.mxu0 0
    %1865 = vmatpush1.bf16.msra.mxu0 0
    %1866 = vmatprep.subr.bf16.mxu0 0
    %1867 = vmatpush1.bf16.msra.mxu0 0
    %1868 = vmatprep.subr.bf16.mxu0 0
    %1869 = vmatpush1.bf16.msra.mxu0 0
    %1870 = vmatprep.subr.bf16.mxu0 0
    %1871 = vmatpush1.bf16.msra.mxu0 0
    %1872 = vmatprep.subr.bf16.mxu0 0
    %1873 = vmatpush1.bf16.msra.mxu0 0
    %1874 = vmatprep.subr.bf16.mxu0 0
    %1875 = vmatpush1.bf16.msra.mxu0 0
    %1876 = vmatprep.subr.bf16.mxu0 0
    %1877 = vmatpush1.bf16.msra.mxu0 0
    %1878 = vmatprep.subr.bf16.mxu0 0
    %1879 = vmatpush1.bf16.msra.mxu0 0
    %1880 = vmatprep.subr.bf16.mxu0 0
    %1881 = vmatpush1.bf16.msra.mxu0 0
    %1882 = vmatprep.subr.bf16.mxu0 0
    %1883 = vmatpush1.bf16.msra.mxu0 0
    %1884 = vmatprep.subr.bf16.mxu0 0
    %1885 = vmatpush1.bf16.msra.mxu0 0
    %1886 = vmatprep.mubr.bf16.mxu0 0
    %1887 = vmatmul.mubr.bf16.gmra.mrb[0].mxu0 %v1852
    %v1888 = vpop.f32.mrb[0].mxu0
    %v1889 = vadd.f32 %v1833, %v1888
    %v1890 = vpop.f32.mrb[0].mxu0
    %v1891 = vpop.f32.mrb[0].mxu0
    %v1892 = vadd.f32 %v1836, %v1891
    %v1893 = vpop.f32.mrb[0].mxu0
    %1894 = vdwg.mxu0
    %v1895 = vpack.c.bf16 %v1778, %v1777
    %v1900 = vunpack.c.l.b16 %v1765
    %v1901 = vunpack.c.l.b16 %v1766
    %v1902 = vunpack.c.l.b16 %v1767
    %v1903 = vunpack.c.l.b16 %v1768
    %v1904 = vpack.c.b16 %v1901, %v1900
    %v1905 = vpack.c.b16 %v1903, %v1902
    %v1909 = vsel %vm1681, %v1895, 0
    %1911 = vmatprep.subr.bf16.mxu0 0
    %1912 = vmatpush1.bf16.msra.mxu0 %v1904
    %1913 = vmatprep.subr.bf16.mxu0 0
    %1914 = vmatpush1.bf16.msra.mxu0 %v1905
    %1915 = vmatprep.subr.bf16.mxu0 0
    %1916 = vmatpush1.bf16.msra.mxu0 0
    %1917 = vmatprep.subr.bf16.mxu0 0
    %1918 = vmatpush1.bf16.msra.mxu0 0
    %1919 = vmatprep.subr.bf16.mxu0 0
    %1920 = vmatpush1.bf16.msra.mxu0 0
    %1921 = vmatprep.subr.bf16.mxu0 0
    %1922 = vmatpush1.bf16.msra.mxu0 0
    %1923 = vmatprep.subr.bf16.mxu0 0
    %1924 = vmatpush1.bf16.msra.mxu0 0
    %1925 = vmatprep.subr.bf16.mxu0 0
    %1926 = vmatpush1.bf16.msra.mxu0 0
    %1927 = vmatprep.subr.bf16.mxu0 0
    %1928 = vmatpush1.bf16.msra.mxu0 0
    %1929 = vmatprep.subr.bf16.mxu0 0
    %1930 = vmatpush1.bf16.msra.mxu0 0
    %1931 = vmatprep.subr.bf16.mxu0 0
    %1932 = vmatpush1.bf16.msra.mxu0 0
    %1933 = vmatprep.subr.bf16.mxu0 0
    %1934 = vmatpush1.bf16.msra.mxu0 0
    %1935 = vmatprep.subr.bf16.mxu0 0
    %1936 = vmatpush1.bf16.msra.mxu0 0
    %1937 = vmatprep.subr.bf16.mxu0 0
    %1938 = vmatpush1.bf16.msra.mxu0 0
    %1939 = vmatprep.subr.bf16.mxu0 0
    %1940 = vmatpush1.bf16.msra.mxu0 0
    %1941 = vmatprep.subr.bf16.mxu0 0
    %1942 = vmatpush1.bf16.msra.mxu0 0
    %1943 = vmatprep.mubr.bf16.mxu0 0
    %1944 = vmatmul.mubr.bf16.gmra.mrb[0].mxu0 %v1909
    %v1945 = vpop.f32.mrb[0].mxu0
    %v1946 = vadd.f32 0.0, %v1945
    %v1947 = vpop.f32.mrb[0].mxu0
    %v1948 = vpop.f32.mrb[0].mxu0
    %v1949 = vadd.f32 0.0, %v1948
    %v1950 = vpop.f32.mrb[0].mxu0
    %1951 = vdwg.mxu0
    %v1952 = vadd.f32 %v1889, %v1946
    %v1953 = vadd.f32 %v1892, %v1949
    %v1954 = vpack.c.bf16 %v1780, %v1779
    %v1959 = vunpack.c.l.b16 %v1769
    %v1960 = vunpack.c.l.b16 %v1770
    %v1961 = vunpack.c.l.b16 %v1771
    %v1962 = vunpack.c.l.b16 %v1772
    %v1963 = vpack.c.b16 %v1960, %v1959
    %v1964 = vpack.c.b16 %v1962, %v1961
    %v1968 = vsel %vm1681, %v1954, 0
    %1970 = vmatprep.subr.bf16.mxu0 0
    %1971 = vmatpush1.bf16.msra.mxu0 %v1963
    %1972 = vmatprep.subr.bf16.mxu0 0
    %1973 = vmatpush1.bf16.msra.mxu0 %v1964
    %1974 = vmatprep.subr.bf16.mxu0 0
    %1975 = vmatpush1.bf16.msra.mxu0 0
    %1976 = vmatprep.subr.bf16.mxu0 0
    %1977 = vmatpush1.bf16.msra.mxu0 0
    %1978 = vmatprep.subr.bf16.mxu0 0
    %1979 = vmatpush1.bf16.msra.mxu0 0
    %1980 = vmatprep.subr.bf16.mxu0 0
    %1981 = vmatpush1.bf16.msra.mxu0 0
    %1982 = vmatprep.subr.bf16.mxu0 0
    %1983 = vmatpush1.bf16.msra.mxu0 0
    %1984 = vmatprep.subr.bf16.mxu0 0
    %1985 = vmatpush1.bf16.msra.mxu0 0
    %1986 = vmatprep.subr.bf16.mxu0 0
    %1987 = vmatpush1.bf16.msra.mxu0 0
    %1988 = vmatprep.subr.bf16.mxu0 0
    %1989 = vmatpush1.bf16.msra.mxu0 0
    %1990 = vmatprep.subr.bf16.mxu0 0
    %1991 = vmatpush1.bf16.msra.mxu0 0
    %1992 = vmatprep.subr.bf16.mxu0 0
    %1993 = vmatpush1.bf16.msra.mxu0 0
    %1994 = vmatprep.subr.bf16.mxu0 0
    %1995 = vmatpush1.bf16.msra.mxu0 0
    %1996 = vmatprep.subr.bf16.mxu0 0
    %1997 = vmatpush1.bf16.msra.mxu0 0
    %1998 = vmatprep.subr.bf16.mxu0 0
    %1999 = vmatpush1.bf16.msra.mxu0 0
    %2000 = vmatprep.subr.bf16.mxu0 0
    %2001 = vmatpush1.bf16.msra.mxu0 0
    %2002 = vmatprep.mubr.bf16.mxu0 0
    %2003 = vmatmul.mubr.bf16.gmra.mrb[0].mxu0 %v1968
    %v2004 = vpop.f32.mrb[0].mxu0
    %v2005 = vadd.f32 0.0, %v2004
    %v2006 = vpop.f32.mrb[0].mxu0
    %v2007 = vpop.f32.mrb[0].mxu0
    %v2008 = vadd.f32 0.0, %v2007
    %v2009 = vpop.f32.mrb[0].mxu0
    %2010 = vdwg.mxu0
    %v2011 = vadd.f32 %v1952, %v2005
    %v2012 = vadd.f32 %v1953, %v2008
    %vm2013 = vcmask 523264
    %v2014 = vsel %vm2013, %v2011, 0.0
    %v2015 = vsel %vm2013, %v2012, 0.0
    %v2016 = vadd.f32 %v2014, %v2015
    %v2017 = vrot.slane %v2016, 4
    %v2018 = vadd.f32 %v2016, %v2017
    %v2019 = vrot.slane %v2018, 2
    %v2020 = vadd.f32 %v2018, %v2019
    %v2021 = vrot.slane %v2020, 1
    %v2022 = vadd.f32 %v2020, %v2021
    %v2023 = vmul.f32 %v2022, 0.0625
    %v2024 = vsub.f32 %v2011, %v2023
    %v2025 = vsub.f32 %v2012, %v2023
    %v2026 = vmul.f32 %v2024, %v2024
    %v2027 = vmul.f32 %v2025, %v2025
    %v2028 = vsel %vm2013, %v2026, 0.0
    %v2029 = vsel %vm2013, %v2027, 0.0
    %v2030 = vadd.f32 %v2028, %v2029
    %v2031 = vrot.slane %v2030, 4
    %v2032 = vadd.f32 %v2030, %v2031
    %v2033 = vrot.slane %v2032, 2
    %v2034 = vadd.f32 %v2032, %v2033
    %v2035 = vrot.slane %v2034, 1
    %v2036 = vadd.f32 %v2034, %v2035
    %v2037 = vmul.f32 %v2036, 0.0625
    %v2038 = vadd.f32 %v2037, 1e-05
    %v2039 = vrsqrt.pop %v2038
    %v2040 = vld [vmem:[#allocation12] sm:$0x1]
    %v2041 = vmul.f32 %v2039, %v2040
    %v2042 = vld [vmem:[#allocation14] sm:$0x1]
    %v2043 = vmul.f32 %v2023, %v2041
    %v2044 = vsub.f32 %v2042, %v2043
    %v2045 = vlaneseq
    %v2046 = vshrl.u32 %v2045, 7
    %v2047 = vsub.s32 0, %v2046
    %v2048 = vrot.slane %v2041, %v2047
    %v2049 = vmul.f32 %v2011, %v2048
    %v2050 = vmul.f32 %v2012, %v2048
    %v2052 = vlaneseq
    %v2053 = vshrl.u32 %v2052, 7
    %v2054 = vsub.s32 0, %v2053
    %v2055 = vrot.slane %v2044, %v2054
    %v2057 = vadd.f32 %v2049, %v2055
    %v2058 = vadd.f32 %v2050, %v2055
    %v2059 = vmul.f32 %v2057, 0.2
    %v2060 = vmul.f32 %v2058, 0.2
    %v2061 = vmax.f32 %v2057, %v2059
    %v2062 = vmax.f32 %v2058, %v2060
    %2063 = vst.msk [vmem:[#allocation2 + $0x8] sm:$0xff] %vm2013, %v2061
    %2064 = vst [vmem:[#allocation2 + $0x10] sm:$0xff] 0.0
    %2065 = vst.msk [vmem:[#allocation2 + $0x98] sm:$0xff] %vm2013, %v2062
    %2066 = vst [vmem:[#allocation2 + $0xa0] sm:$0xff] 0.0
    %v2067 = vld [vmem:[%s5] sm:$0xf]
    %v2068 = vld [vmem:[%s5 + $0x4] sm:$0xf]
    %v2069 = vld [vmem:[%s5 + $0x8] sm:$0xf]
    %v2070 = vld [vmem:[%s5 + $0xc] sm:$0xf]
    %v2071 = vld [vmem:[%s5 + $0x10] sm:$0xf]
    %v2072 = vld [vmem:[%s5 + $0x14] sm:$0xf]
    %v2073 = vld [vmem:[%s5 + $0x18] sm:$0xf]
    %v2074 = vld [vmem:[%s5 + $0x1c] sm:$0xf]
    %v2075 = vld [vmem:[%s5 + $0x20] sm:$0xf]
    %v2076 = vld [vmem:[%s5 + $0x24] sm:$0xf]
    %v2077 = vld [vmem:[%s5 + $0x28] sm:$0xf]
    %v2078 = vld [vmem:[%s5 + $0x2c] sm:$0xf]
    %v2079 = vld [vmem:[%s5 + $0x30] sm:$0xf]
    %v2080 = vld [vmem:[%s5 + $0x34] sm:$0xf]
    %v2081 = vld [vmem:[%s5 + $0x38] sm:$0xf]
    %v2082 = vld [vmem:[%s5 + $0x3c] sm:$0xf]
    %v2083 = vld [vmem:[%s5 + $0x40] sm:$0xf]
    %v2084 = vld [vmem:[%s5 + $0x44] sm:$0xf]
    %v2085 = vld [vmem:[%s5 + $0x48] sm:$0xf]
    %v2086 = vld [vmem:[%s5 + $0x4c] sm:$0xf]
    %v2087 = vld [vmem:[%s5 + $0x50] sm:$0xf]
    %v2088 = vld [vmem:[%s5 + $0x54] sm:$0xf]
    %v2089 = vld [vmem:[%s5 + $0x58] sm:$0xf]
    %v2090 = vld [vmem:[%s5 + $0x5c] sm:$0xf]
    %v2091 = vld [vmem:[%s5 + $0x60] sm:$0xf]
    %v2092 = vld [vmem:[%s5 + $0x64] sm:$0xf]
    %v2093 = vld [vmem:[%s5 + $0x68] sm:$0xf]
    %v2094 = vld [vmem:[%s5 + $0x6c] sm:$0xf]
    %v2095 = vld [vmem:[%s5 + $0x70] sm:$0xf]
    %v2096 = vld [vmem:[%s5 + $0x74] sm:$0xf]
    %v2097 = vld [vmem:[%s5 + $0x78] sm:$0xf]
    %v2098 = vld [vmem:[%s5 + $0x7c] sm:$0xf]
    %v2099 = vld [vmem:[%s261] ss:$2 sm:$0xf]
    %v2100 = vld [vmem:[%s277] ss:$2 sm:$0xf]
    %v2102 = vrot.slane %v2100, 4
    %v2104 = vsel %vm944, %v2099, %v2102
    %v2105 = vld [vmem:[%s293] ss:$2 sm:$0xf]
    %v2106 = vld [vmem:[%s309] ss:$2 sm:$0xf]
    %v2108 = vrot.slane %v2106, 4
    %v2110 = vsel %vm944, %v2105, %v2108
    %v2111 = vld [vmem:[%s325] ss:$2 sm:$0xf]
    %v2112 = vld [vmem:[%s341] ss:$2 sm:$0xf]
    %v2114 = vrot.slane %v2112, 4
    %v2116 = vsel %vm944, %v2111, %v2114
    %v2117 = vld [vmem:[%s357] ss:$2 sm:$0xf]
    %v2118 = vld [vmem:[%s373] ss:$2 sm:$0xf]
    %v2120 = vrot.slane %v2118, 4
    %v2122 = vsel %vm944, %v2117, %v2120
    %v2123 = vpack.c.bf16 %v2104, %v2104
    %v2124 = vpack.c.bf16 %v2110, %v2110
    %v2133 = vunpack.c.l.b16 %v2075
    %v2134 = vunpack.c.l.b16 %v2076
    %v2135 = vunpack.c.l.b16 %v2077
    %v2136 = vunpack.c.l.b16 %v2078
    %v2137 = vunpack.c.l.b16 %v2079
    %v2138 = vunpack.c.l.b16 %v2080
    %v2139 = vunpack.c.l.b16 %v2081
    %v2140 = vunpack.c.l.b16 %v2082
    %v2141 = vpack.c.b16 %v2134, %v2133
    %v2142 = vpack.c.b16 %v2136, %v2135
    %v2143 = vpack.c.b16 %v2138, %v2137
    %v2144 = vpack.c.b16 %v2140, %v2139
    %v2150 = vsel %vm2013, %v2124, 0
    %2152 = vmatprep.subr.bf16.mxu0 0
    %2153 = vmatpush1.bf16.msra.mxu0 %v2141
    %2154 = vmatprep.subr.bf16.mxu0 0
    %2155 = vmatpush1.bf16.msra.mxu0 %v2142
    %2156 = vmatprep.subr.bf16.mxu0 0
    %2157 = vmatpush1.bf16.msra.mxu0 %v2143
    %2158 = vmatprep.subr.bf16.mxu0 0
    %2159 = vmatpush1.bf16.msra.mxu0 %v2144
    %2160 = vmatprep.subr.bf16.mxu0 0
    %2161 = vmatpush1.bf16.msra.mxu0 0
    %2162 = vmatprep.subr.bf16.mxu0 0
    %2163 = vmatpush1.bf16.msra.mxu0 0
    %2164 = vmatprep.subr.bf16.mxu0 0
    %2165 = vmatpush1.bf16.msra.mxu0 0
    %2166 = vmatprep.subr.bf16.mxu0 0
    %2167 = vmatpush1.bf16.msra.mxu0 0
    %2168 = vmatprep.subr.bf16.mxu0 0
    %2169 = vmatpush1.bf16.msra.mxu0 0
    %2170 = vmatprep.subr.bf16.mxu0 0
    %2171 = vmatpush1.bf16.msra.mxu0 0
    %2172 = vmatprep.subr.bf16.mxu0 0
    %2173 = vmatpush1.bf16.msra.mxu0 0
    %2174 = vmatprep.subr.bf16.mxu0 0
    %2175 = vmatpush1.bf16.msra.mxu0 0
    %2176 = vmatprep.subr.bf16.mxu0 0
    %2177 = vmatpush1.bf16.msra.mxu0 0
    %2178 = vmatprep.subr.bf16.mxu0 0
    %2179 = vmatpush1.bf16.msra.mxu0 0
    %2180 = vmatprep.subr.bf16.mxu0 0
    %2181 = vmatpush1.bf16.msra.mxu0 0
    %2182 = vmatprep.subr.bf16.mxu0 0
    %2183 = vmatpush1.bf16.msra.mxu0 0
    %2184 = vmatprep.mubr.bf16.mxu0 0
    %2185 = vmatmul.mubr.bf16.gmra.mrb[0].mxu0 %v2150
    %v2186 = vpop.f32.mrb[0].mxu0
    %v2187 = vadd.f32 0.0, %v2186
    %v2188 = vpop.f32.mrb[0].mxu0
    %v2189 = vpop.f32.mrb[0].mxu0
    %v2190 = vpop.f32.mrb[0].mxu0
    %2191 = vdwg.mxu0
    %v2200 = vunpack.c.l.b16 %v2067
    %v2201 = vunpack.c.l.b16 %v2068
    %v2202 = vunpack.c.l.b16 %v2069
    %v2203 = vunpack.c.l.b16 %v2070
    %v2204 = vunpack.c.l.b16 %v2071
    %v2205 = vunpack.c.l.b16 %v2072
    %v2206 = vunpack.c.l.b16 %v2073
    %v2207 = vunpack.c.l.b16 %v2074
    %v2208 = vpack.c.b16 %v2201, %v2200
    %v2209 = vpack.c.b16 %v2203, %v2202
    %v2210 = vpack.c.b16 %v2205, %v2204
    %v2211 = vpack.c.b16 %v2207, %v2206
    %v2217 = vsel %vm2013, %v2123, 0
    %2219 = vmatprep.subr.bf16.mxu0 0
    %2220 = vmatpush1.bf16.msra.mxu0 %v2208
    %2221 = vmatprep.subr.bf16.mxu0 0
    %2222 = vmatpush1.bf16.msra.mxu0 %v2209
    %2223 = vmatprep.subr.bf16.mxu0 0
    %2224 = vmatpush1.bf16.msra.mxu0 %v2210
    %2225 = vmatprep.subr.bf16.mxu0 0
    %2226 = vmatpush1.bf16.msra.mxu0 %v2211
    %2227 = vmatprep.subr.bf16.mxu0 0
    %2228 = vmatpush1.bf16.msra.mxu0 0
    %2229 = vmatprep.subr.bf16.mxu0 0
    %2230 = vmatpush1.bf16.msra.mxu0 0
    %2231 = vmatprep.subr.bf16.mxu0 0
    %2232 = vmatpush1.bf16.msra.mxu0 0
    %2233 = vmatprep.subr.bf16.mxu0 0
    %2234 = vmatpush1.bf16.msra.mxu0 0
    %2235 = vmatprep.subr.bf16.mxu0 0
    %2236 = vmatpush1.bf16.msra.mxu0 0
    %2237 = vmatprep.subr.bf16.mxu0 0
    %2238 = vmatpush1.bf16.msra.mxu0 0
    %2239 = vmatprep.subr.bf16.mxu0 0
    %2240 = vmatpush1.bf16.msra.mxu0 0
    %2241 = vmatprep.subr.bf16.mxu0 0
    %2242 = vmatpush1.bf16.msra.mxu0 0
    %2243 = vmatprep.subr.bf16.mxu0 0
    %2244 = vmatpush1.bf16.msra.mxu0 0
    %2245 = vmatprep.subr.bf16.mxu0 0
    %2246 = vmatpush1.bf16.msra.mxu0 0
    %2247 = vmatprep.subr.bf16.mxu0 0
    %2248 = vmatpush1.bf16.msra.mxu0 0
    %2249 = vmatprep.subr.bf16.mxu0 0
    %2250 = vmatpush1.bf16.msra.mxu0 0
    %2251 = vmatprep.mubr.bf16.mxu0 0
    %2252 = vmatmul.mubr.bf16.gmra.mrb[0].mxu0 %v2217
    %v2253 = vpop.f32.mrb[0].mxu0
    %v2254 = vadd.f32 %v2187, %v2253
    %v2255 = vpop.f32.mrb[0].mxu0
    %v2256 = vpop.f32.mrb[0].mxu0
    %v2257 = vpop.f32.mrb[0].mxu0
    %2258 = vdwg.mxu0
    %v2259 = vpack.c.bf16 %v2116, %v2116
    %v2268 = vunpack.c.l.b16 %v2083
    %v2269 = vunpack.c.l.b16 %v2084
    %v2270 = vunpack.c.l.b16 %v2085
    %v2271 = vunpack.c.l.b16 %v2086
    %v2272 = vunpack.c.l.b16 %v2087
    %v2273 = vunpack.c.l.b16 %v2088
    %v2274 = vunpack.c.l.b16 %v2089
    %v2275 = vunpack.c.l.b16 %v2090
    %v2276 = vpack.c.b16 %v2269, %v2268
    %v2277 = vpack.c.b16 %v2271, %v2270
    %v2278 = vpack.c.b16 %v2273, %v2272
    %v2279 = vpack.c.b16 %v2275, %v2274
    %v2285 = vsel %vm2013, %v2259, 0
    %2287 = vmatprep.subr.bf16.mxu0 0
    %2288 = vmatpush1.bf16.msra.mxu0 %v2276
    %2289 = vmatprep.subr.bf16.mxu0 0
    %2290 = vmatpush1.bf16.msra.mxu0 %v2277
    %2291 = vmatprep.subr.bf16.mxu0 0
    %2292 = vmatpush1.bf16.msra.mxu0 %v2278
    %2293 = vmatprep.subr.bf16.mxu0 0
    %2294 = vmatpush1.bf16.msra.mxu0 %v2279
    %2295 = vmatprep.subr.bf16.mxu0 0
    %2296 = vmatpush1.bf16.msra.mxu0 0
    %2297 = vmatprep.subr.bf16.mxu0 0
    %2298 = vmatpush1.bf16.msra.mxu0 0
    %2299 = vmatprep.subr.bf16.mxu0 0
    %2300 = vmatpush1.bf16.msra.mxu0 0
    %2301 = vmatprep.subr.bf16.mxu0 0
    %2302 = vmatpush1.bf16.msra.mxu0 0
    %2303 = vmatprep.subr.bf16.mxu0 0
    %2304 = vmatpush1.bf16.msra.mxu0 0
    %2305 = vmatprep.subr.bf16.mxu0 0
    %2306 = vmatpush1.bf16.msra.mxu0 0
    %2307 = vmatprep.subr.bf16.mxu0 0
    %2308 = vmatpush1.bf16.msra.mxu0 0
    %2309 = vmatprep.subr.bf16.mxu0 0
    %2310 = vmatpush1.bf16.msra.mxu0 0
    %2311 = vmatprep.subr.bf16.mxu0 0
    %2312 = vmatpush1.bf16.msra.mxu0 0
    %2313 = vmatprep.subr.bf16.mxu0 0
    %2314 = vmatpush1.bf16.msra.mxu0 0
    %2315 = vmatprep.subr.bf16.mxu0 0
    %2316 = vmatpush1.bf16.msra.mxu0 0
    %2317 = vmatprep.subr.bf16.mxu0 0
    %2318 = vmatpush1.bf16.msra.mxu0 0
    %2319 = vmatprep.mubr.bf16.mxu0 0
    %2320 = vmatmul.mubr.bf16.gmra.mrb[0].mxu0 %v2285
    %v2321 = vpop.f32.mrb[0].mxu0
    %v2322 = vadd.f32 0.0, %v2321
    %v2323 = vpop.f32.mrb[0].mxu0
    %v2324 = vpop.f32.mrb[0].mxu0
    %v2325 = vpop.f32.mrb[0].mxu0
    %2326 = vdwg.mxu0
    %v2327 = vadd.f32 %v2254, %v2322
    %v2328 = vpack.c.bf16 %v2122, %v2122
    %v2337 = vunpack.c.l.b16 %v2091
    %v2338 = vunpack.c.l.b16 %v2092
    %v2339 = vunpack.c.l.b16 %v2093
    %v2340 = vunpack.c.l.b16 %v2094
    %v2341 = vunpack.c.l.b16 %v2095
    %v2342 = vunpack.c.l.b16 %v2096
    %v2343 = vunpack.c.l.b16 %v2097
    %v2344 = vunpack.c.l.b16 %v2098
    %v2345 = vpack.c.b16 %v2338, %v2337
    %v2346 = vpack.c.b16 %v2340, %v2339
    %v2347 = vpack.c.b16 %v2342, %v2341
    %v2348 = vpack.c.b16 %v2344, %v2343
    %v2354 = vsel %vm2013, %v2328, 0
    %2356 = vmatprep.subr.bf16.mxu0 0
    %2357 = vmatpush1.bf16.msra.mxu0 %v2345
    %2358 = vmatprep.subr.bf16.mxu0 0
    %2359 = vmatpush1.bf16.msra.mxu0 %v2346
    %2360 = vmatprep.subr.bf16.mxu0 0
    %2361 = vmatpush1.bf16.msra.mxu0 %v2347
    %2362 = vmatprep.subr.bf16.mxu0 0
    %2363 = vmatpush1.bf16.msra.mxu0 %v2348
    %2364 = vmatprep.subr.bf16.mxu0 0
    %2365 = vmatpush1.bf16.msra.mxu0 0
    %2366 = vmatprep.subr.bf16.mxu0 0
    %2367 = vmatpush1.bf16.msra.mxu0 0
    %2368 = vmatprep.subr.bf16.mxu0 0
    %2369 = vmatpush1.bf16.msra.mxu0 0
    %2370 = vmatprep.subr.bf16.mxu0 0
    %2371 = vmatpush1.bf16.msra.mxu0 0
    %2372 = vmatprep.subr.bf16.mxu0 0
    %2373 = vmatpush1.bf16.msra.mxu0 0
    %2374 = vmatprep.subr.bf16.mxu0 0
    %2375 = vmatpush1.bf16.msra.mxu0 0
    %2376 = vmatprep.subr.bf16.mxu0 0
    %2377 = vmatpush1.bf16.msra.mxu0 0
    %2378 = vmatprep.subr.bf16.mxu0 0
    %2379 = vmatpush1.bf16.msra.mxu0 0
    %2380 = vmatprep.subr.bf16.mxu0 0
    %2381 = vmatpush1.bf16.msra.mxu0 0
    %2382 = vmatprep.subr.bf16.mxu0 0
    %2383 = vmatpush1.bf16.msra.mxu0 0
    %2384 = vmatprep.subr.bf16.mxu0 0
    %2385 = vmatpush1.bf16.msra.mxu0 0
    %2386 = vmatprep.subr.bf16.mxu0 0
    %2387 = vmatpush1.bf16.msra.mxu0 0
    %2388 = vmatprep.mubr.bf16.mxu0 0
    %2389 = vmatmul.mubr.bf16.gmra.mrb[0].mxu0 %v2354
    %v2390 = vpop.f32.mrb[0].mxu0
    %v2391 = vadd.f32 0.0, %v2390
    %v2392 = vpop.f32.mrb[0].mxu0
    %v2393 = vpop.f32.mrb[0].mxu0
    %v2394 = vpop.f32.mrb[0].mxu0
    %2395 = vdwg.mxu0
    %v2396 = vadd.f32 %v2327, %v2391
    %v2397 = vrot.slane %v2396, 4
    %v2398 = vadd.f32 %v2396, %v2397
    %v2399 = vrot.slane %v2398, 2
    %v2400 = vadd.f32 %v2398, %v2399
    %v2401 = vrot.slane %v2400, 1
    %v2402 = vadd.f32 %v2400, %v2401
    %v2403 = vmul.f32 %v2402, 0.125
    %v2404 = vsub.f32 %v2396, %v2403
    %v2405 = vmul.f32 %v2404, %v2404
    %v2406 = vrot.slane %v2405, 4
    %v2407 = vadd.f32 %v2405, %v2406
    %v2408 = vrot.slane %v2407, 2
    %v2409 = vadd.f32 %v2407, %v2408
    %v2410 = vrot.slane %v2409, 1
    %v2411 = vadd.f32 %v2409, %v2410
    %v2412 = vmul.f32 %v2411, 0.125
    %v2413 = vadd.f32 %v2412, 1e-05
    %v2414 = vrsqrt.pop %v2413
    %v2415 = vld [vmem:[#allocation15] sm:$0x1]
    %v2416 = vmul.f32 %v2414, %v2415
    %v2417 = vld [vmem:[#allocation17] sm:$0x1]
    %v2418 = vmul.f32 %v2403, %v2416
    %v2419 = vsub.f32 %v2417, %v2418
    %v2420 = vlaneseq
    %v2421 = vshrl.u32 %v2420, 7
    %v2422 = vsub.s32 0, %v2421
    %v2423 = vrot.slane %v2416, %v2422
    %v2424 = vmul.f32 %v2396, %v2423
    %v2426 = vlaneseq
    %v2427 = vshrl.u32 %v2426, 7
    %v2428 = vsub.s32 0, %v2427
    %v2429 = vrot.slane %v2419, %v2428
    %v2431 = vadd.f32 %v2424, %v2429
    %v2432 = vmul.f32 %v2431, 0.2
    %v2433 = vmax.f32 %v2431, %v2432
    %v2434 = vsel %vm944, %v2433, 0.0
    %v2435 = vrot.slane %v2434, 4
    %v2436 = vadd.f32 %v2434, %v2435
    %v2437 = vrot.slane %v2436, 2
    %v2438 = vadd.f32 %v2436, %v2437
    %v2439 = vrot.slane %v2438, 1
    %v2440 = vadd.f32 %v2438, %v2439
    %v2441 = vrcp.pop 4.0
    %v2442 = vmul.f32 %v2440, %v2441
    %v2444 = vrot.slane %v2433, 4
    %v2446 = vsel %vm944, %v2444, 0.0
    %v2447 = vrot.slane %v2446, 4
    %v2448 = vadd.f32 %v2446, %v2447
    %v2449 = vrot.slane %v2448, 2
    %v2450 = vadd.f32 %v2448, %v2449
    %v2451 = vrot.slane %v2450, 1
    %v2452 = vadd.f32 %v2450, %v2451
    %v2453 = vmul.f32 %v2452, %v2441
    %vm2454 = vcmask 1040384
    %v2455 = vsel %vm2454, %v2442, %v2453
    %v2456 = vpack.c.bf16 %v2455, %v2455
    %v2457 = vld [vmem:[%s14] sm:$0xf]
    %v2458 = vld [vmem:[%s14 + $0x4] sm:$0xf]
    %v2459 = vld [vmem:[%s14 + $0x8] sm:$0xf]
    %v2460 = vld [vmem:[%s14 + $0xc] sm:$0xf]
    %v2461 = vld [vmem:[%s14 + $0x10] sm:$0xf]
    %v2462 = vld [vmem:[%s14 + $0x14] sm:$0xf]
    %v2463 = vld [vmem:[%s14 + $0x18] sm:$0xf]
    %v2464 = vld [vmem:[%s14 + $0x1c] sm:$0xf]
    %v2465 = vld [vmem:[%s14 + $0x20] sm:$0xf]
    %v2466 = vld [vmem:[%s14 + $0x24] sm:$0xf]
    %v2467 = vld [vmem:[%s14 + $0x28] sm:$0xf]
    %v2468 = vld [vmem:[%s14 + $0x2c] sm:$0xf]
    %v2469 = vld [vmem:[%s14 + $0x30] sm:$0xf]
    %v2470 = vld [vmem:[%s14 + $0x34] sm:$0xf]
    %v2471 = vld [vmem:[%s14 + $0x38] sm:$0xf]
    %v2472 = vld [vmem:[%s14 + $0x3c] sm:$0xf]
    %v2489 = vunpack.c.l.b16 %v2457
    %v2490 = vunpack.c.l.b16 %v2458
    %v2491 = vunpack.c.l.b16 %v2459
    %v2492 = vunpack.c.l.b16 %v2460
    %v2493 = vunpack.c.l.b16 %v2461
    %v2494 = vunpack.c.l.b16 %v2462
    %v2495 = vunpack.c.l.b16 %v2463
    %v2496 = vunpack.c.l.b16 %v2464
    %v2497 = vunpack.c.l.b16 %v2465
    %v2498 = vunpack.c.l.b16 %v2466
    %v2499 = vunpack.c.l.b16 %v2467
    %v2500 = vunpack.c.l.b16 %v2468
    %v2501 = vunpack.c.l.b16 %v2469
    %v2502 = vunpack.c.l.b16 %v2470
    %v2503 = vunpack.c.l.b16 %v2471
    %v2504 = vunpack.c.l.b16 %v2472
    %v2505 = vpack.c.b16 %v2490, %v2489
    %v2506 = vpack.c.b16 %v2492, %v2491
    %v2507 = vpack.c.b16 %v2494, %v2493
    %v2508 = vpack.c.b16 %v2496, %v2495
    %v2509 = vpack.c.b16 %v2498, %v2497
    %v2510 = vpack.c.b16 %v2500, %v2499
    %v2511 = vpack.c.b16 %v2502, %v2501
    %v2512 = vpack.c.b16 %v2504, %v2503
    %2521 = vmatprep.subr.bf16.mxu0 0
    %2522 = vmatpush1.bf16.msra.mxu0 %v2505
    %2523 = vmatprep.subr.bf16.mxu0 0
    %2524 = vmatpush1.bf16.msra.mxu0 %v2506
    %2525 = vmatprep.subr.bf16.mxu0 0
    %2526 = vmatpush1.bf16.msra.mxu0 %v2507
    %2527 = vmatprep.subr.bf16.mxu0 0
    %2528 = vmatpush1.bf16.msra.mxu0 %v2508
    %2529 = vmatprep.subr.bf16.mxu0 0
    %2530 = vmatpush1.bf16.msra.mxu0 %v2509
    %2531 = vmatprep.subr.bf16.mxu0 0
    %2532 = vmatpush1.bf16.msra.mxu0 %v2510
    %2533 = vmatprep.subr.bf16.mxu0 0
    %2534 = vmatpush1.bf16.msra.mxu0 %v2511
    %2535 = vmatprep.subr.bf16.mxu0 0
    %2536 = vmatpush1.bf16.msra.mxu0 %v2512
    %2537 = vmatprep.subr.bf16.mxu0 0
    %2538 = vmatpush1.bf16.msra.mxu0 0
    %2539 = vmatprep.subr.bf16.mxu0 0
    %2540 = vmatpush1.bf16.msra.mxu0 0
    %2541 = vmatprep.subr.bf16.mxu0 0
    %2542 = vmatpush1.bf16.msra.mxu0 0
    %2543 = vmatprep.subr.bf16.mxu0 0
    %2544 = vmatpush1.bf16.msra.mxu0 0
    %2545 = vmatprep.subr.bf16.mxu0 0
    %2546 = vmatpush1.bf16.msra.mxu0 0
    %2547 = vmatprep.subr.bf16.mxu0 0
    %2548 = vmatpush1.bf16.msra.mxu0 0
    %2549 = vmatprep.subr.bf16.mxu0 0
    %2550 = vmatpush1.bf16.msra.mxu0 0
    %2551 = vmatprep.subr.bf16.mxu0 0
    %2552 = vmatpush1.bf16.msra.mxu0 0
    %2553 = vmatprep.mubr.bf16.mxu0 0
    %2554 = vmatmul.mubr.bf16.gmra.mrb[0].mxu0 %v2456
    %v2555 = vpop.f32.mrb[0].mxu0
    %v2556 = vadd.f32 0.0, %v2555
    %v2557 = vpop.f32.mrb[0].mxu0
    %v2558 = vpop.f32.mrb[0].mxu0
    %v2559 = vpop.f32.mrb[0].mxu0
    %2560 = vdwg.mxu0
    %2561 = vst [vmem:[#allocation18] sm:$0x3] %v2556
    // Predicated region
    $region98: #{_lambda_.1} parent=1 // pred_check
      _
    $region99: #{_lambda_.1} parent=1 // pred_check_branch
      %2563 = sbr.rel (0) target = $region101
    $region100: #{_lambda_.1} parent=1 // pred_region
      %s2565 = ssub.s32 32, 32
      %2566 = vsyncadd [#allocation5], %s2565
      %s2568 = sshll.u32 [#allocation18], 4
      %s2569 = int_to_ptr.vmem [resolvable:$true] %s2568
      %2571 = dma.vmem_to_hbm [thread:$0]  %s2569, 32, %s15, [#allocation5]
    $region101: #{_lambda_.1} parent=1 // pred_fallthru
      _
    // Predicated region
    $region102: #{_lambda_.1} parent=1 // pred_check
      _
    $region103: #{_lambda_.1} parent=1 // pred_check_branch
      %2573 = sbr.rel (0) target = $region105
    $region104: #{_lambda_.1} parent=1 // pred_region
      %2574 = dma.done [#allocation5], 32
    $region105: #{_lambda_.1} parent=1 // pred_fallthru
      _
    %2575 = vsyncpa [#allocation4], 1
    %2576 = vsyncpa [#allocation7], 1
    %2577 = vsyncpa [#allocation10], 1
    %2578 = vsyncpa [#allocation13], 1
    %2579 = vsyncpa [#allocation16], 1
    %2580 = vsyncpa [#allocation5], 1

</llo_original>
